<compile_context>
chip_gen: v6e
topology: v6e:2x2x1
jax: 0.10.0
libtpu: 0.0.40
codegen_flags: <defaults>
</compile_context>

<pallas_src>
import functools

import jax
import jax.numpy as jnp
from jax import lax
from jax.experimental import pallas as pl
from jax.experimental.pallas import tpu as pltpu


def _round_up(x, m):
    return (x + m - 1) // m * m


# ----------------------------------------------------------------------------
# Fused kernel.
#
# Packed layouts (built once on the host in pack_params / the wrapper):
#   * gate axis (width 8H) is GATE-MAJOR: [i_f i_b | f_f f_b | g_f g_b | o_f o_b]
#     (gate = block//2, direction = block%2); gate slices are 2H lanes wide and
#     lane-aligned with the packed h/c state [h_fwd | h_bwd].
#   * whh is (2H, 8H) block-diagonal so ONE matmul per step drives both
#     directions.
#   * xcat rows are time-major (s, b) with lanes [x(b,s) | x(b,T-1-s)] and the
#     stacked wih is direction-masked, so the fwd/bwd time select is pre-baked.
# ----------------------------------------------------------------------------
def _bilstm_kernel(
    xcat_ref,            # (T*Bt, Kp)  bf16  time-major [x(s) | x(T-1-s)], zero-padded K
    wih_ref,             # (Kp, 8H)    bf16  stacked, direction-masked input->gate weights
    whh_ref,             # (2H, 8H)    bf16  block-diagonal recurrent weights
    b_ref,               # (1, 8H)     f32   packed biases (b_ih + b_hh), gate-major
    w1f_ref,             # (H, 2Hm)    bf16  layer-1 weights for fwd hidden: [left | right]
    w1b_ref,             # (H, 2Hm)    bf16  layer-1 weights for bwd hidden: [left | right]
    b1_ref,              # (1, Hm)     f32
    w2_ref, b2_ref,      # (Hm, Hm) bf16, (1, Hm) f32
    w3_ref, b3_ref,      # (Hm, Hm) bf16, (1, Hm) f32
    w4_ref, b4_ref,      # (Hm, Lp) bf16, (1, Lp) f32  lane-dense (padded) output head
    out_ref,             # (P*Bt, Lp)  f32   log-probs, row = (i*T + j)*Bt + b
    xg_scr,              # (T*Bt, 8H)  f32   input->gate projections
    hidf_scr,            # (T*Bt, H)   f32   forward hidden states, time-major
    hidb_scr,            # (T*Bt, H)   f32   backward hidden states, time-major
    *, T, H, Hm, Bt,
):
    f32 = jnp.float32
    bf16 = jnp.bfloat16

    # ---- 1) Input projections: every timestep, both directions, all gates,
    #         for the whole batch tile, in ONE MXU matmul (off critical path).
    xg_scr[...] = (
        jnp.dot(xcat_ref[...], wih_ref[...], preferred_element_type=f32)
        + b_ref[...]
    )

    whh = whh_ref[...]          # (2H, 8H) bf16, loaded once, reused every step

    # ---- 2) Interleaved fwd/bwd recurrence.  h/c live in vregs (loop carry);
    #         one (Bt,2H)@(2H,8H) bf16 MXU op per step drives BOTH directions.
    def step(s, carry):
        h, c = carry                                    # (Bt, 2H) f32
        r_f = pl.multiple_of(s * Bt, Bt)                # fwd timestep row block
        r_b = pl.multiple_of((T - 1 - s) * Bt, Bt)      # bwd timestep row block
        gx = xg_scr[pl.ds(r_f, Bt), :]                  # direction select pre-baked host-side
        gates = gx + jnp.dot(h.astype(bf16), whh, preferred_element_type=f32)
        i_a = jax.nn.sigmoid(gates[:, 0 * 2 * H:1 * 2 * H])
        f_a = jax.nn.sigmoid(gates[:, 1 * 2 * H:2 * 2 * H])
        g_a = jnp.tanh(gates[:, 2 * 2 * H:3 * 2 * H])
        o_a = jax.nn.sigmoid(gates[:, 3 * 2 * H:4 * 2 * H])
        c_new = f_a * c + i_a * g_a
        h_new = o_a * jnp.tanh(c_new)
        # hidden-state stores are off the serial h/c dependence chain
        hidf_scr[pl.ds(r_f, Bt), :] = h_new[:, :H]
        hidb_scr[pl.ds(r_b, Bt), :] = h_new[:, H:]
        return h_new, c_new

    zeros = jnp.zeros((Bt, 2 * H), f32)                 # init_hidden(): zero state
    lax.fori_loop(0, T, step, (zeros, zeros), unroll=True)

    # ---- 3) Pair features + MLP + log_softmax.  The (T*T, 4H) pairs array is
    #         never materialized; left|right projections come from one fused
    #         layer-1 weight per direction, then pair rows are formed by cheap
    #         row-block tiling + adds (no one-hot selection matmuls).
    lr = (
        jnp.dot(hidf_scr[...].astype(bf16), w1f_ref[...], preferred_element_type=f32)
        + jnp.dot(hidb_scr[...].astype(bf16), w1b_ref[...], preferred_element_type=f32)
    )                                                   # (T*Bt, 2Hm)
    left = lr[:, :Hm]                                   # == out[i] contribution
    right = lr[:, Hm:]                                  # == out[j] contribution

    chunks = []
    for i in range(T):                                  # static, fully vectorized per i
        li = left[i * Bt:(i + 1) * Bt, :]               # (Bt, Hm)
        li_rep = jnp.concatenate([li] * T, axis=0)      # tiled over all j: (T*Bt, Hm)
        chunks.append(li_rep + right)
    h1 = jnp.maximum(jnp.concatenate(chunks, axis=0) + b1_ref[...], 0.0)   # (P*Bt, Hm)

    h2 = jnp.maximum(
        jnp.dot(h1.astype(bf16), w2_ref[...], preferred_element_type=f32) + b2_ref[...],
        0.0)
    h3 = jnp.maximum(
        jnp.dot(h2.astype(bf16), w3_ref[...], preferred_element_type=f32) + b3_ref[...],
        0.0)
    logits = (jnp.dot(h3.astype(bf16), w4_ref[...], preferred_element_type=f32)
              + b4_ref[...])                            # (P*Bt, Lp) lane-dense

    # stable log_softmax; padded lanes carry bias -1e30 so they never win the
    # max and contribute exactly 0 to the sum.  One unmasked lane-dense store.
    m = jnp.max(logits, axis=-1, keepdims=True)
    z = logits - m
    lse = jnp.log(jnp.sum(jnp.exp(z), axis=-1, keepdims=True))
    out_ref[...] = z - lse


# ----------------------------------------------------------------------------
# Wrapper: one pallas_call over batch tiles (megacore-parallel on v7x).
# ----------------------------------------------------------------------------
def bilstm_pairs_mlp(x, lstm_packed, mlp_packed, *, hidden_dim, labelset_size,
                     batch_tile):
    B, T, D = x.shape
    H = hidden_dim
    Hm = hidden_dim
    L = labelset_size
    P = T * T

    wih_s, whh_p, b_p = lstm_packed
    w1f, w1b, b1, w2, b2, w3, b3, w4p, b4p = mlp_packed
    Kp = wih_s.shape[0]
    Lp = w4p.shape[1]

    Bt = _round_up(min(batch_tile, _round_up(B, 8)), 8)
    G = pl.cdiv(B, Bt)
    Bp = G * Bt

    # Host-side prep: pad batch, go time-major, bake the fwd/bwd direction
    # select into the lane axis ([x(s) | x(T-1-s)]), pad K, cast to bf16.
    xp = jnp.pad(x, ((0, Bp - B), (0, 0), (0, 0)))
    x_tm = jnp.transpose(xp, (1, 0, 2))                        # (T, Bp, D)
    xcat = jnp.concatenate([x_tm, x_tm[::-1]], axis=-1)        # (T, Bp, 2D)
    xcat = jnp.pad(xcat, ((0, 0), (0, 0), (0, Kp - 2 * D)))
    xcat = (xcat.reshape(T, G, Bt, Kp)
                .transpose(1, 0, 2, 3)
                .reshape(G * T * Bt, Kp)
                .astype(jnp.bfloat16))

    kernel = functools.partial(_bilstm_kernel, T=T, H=H, Hm=Hm, Bt=Bt)
    const = lambda g: (0, 0)

    out_flat = pl.pallas_call(
        kernel,
        out_shape=jax.ShapeDtypeStruct((G * P * Bt, Lp), jnp.float32),
        grid=(G,),
        in_specs=[
            pl.BlockSpec((T * Bt, Kp), lambda g: (g, 0)),      # xcat (per batch tile)
            pl.BlockSpec((Kp, 8 * H), const),                  # wih (resident)
            pl.BlockSpec((2 * H, 8 * H), const),               # whh
            pl.BlockSpec((1, 8 * H), const),                   # b
            pl.BlockSpec((H, 2 * Hm), const),                  # w1 (fwd half)
            pl.BlockSpec((H, 2 * Hm), const),                  # w1 (bwd half)
            pl.BlockSpec((1, Hm), const),                      # b1
            pl.BlockSpec((Hm, Hm), const),                     # w2
            pl.BlockSpec((1, Hm), const),                      # b2
            pl.BlockSpec((Hm, Hm), const),                     # w3
            pl.BlockSpec((1, Hm), const),                      # b3
            pl.BlockSpec((Hm, Lp), const),                     # w4 (lane-padded)
            pl.BlockSpec((1, Lp), const),                      # b4 (lane-padded)
        ],
        out_specs=pl.BlockSpec((P * Bt, Lp), lambda g: (g, 0)),
        scratch_shapes=[
            pltpu.VMEM((T * Bt, 8 * H), jnp.float32),          # input-gate projections
            pltpu.VMEM((T * Bt, H), jnp.float32),              # forward hidden states
            pltpu.VMEM((T * Bt, H), jnp.float32),              # backward hidden states
        ],
        compiler_params=pltpu.CompilerParams(
            dimension_semantics=("parallel",)),
    )(xcat, wih_s, whh_p, b_p, w1f, w1b, b1, w2, b2, w3, b3, w4p, b4p)

    # kernel row order within a tile is (pair, sentence); reorder + strip pads
    out = (out_flat.reshape(G, P, Bt, Lp)
                   .transpose(0, 2, 1, 3)
                   .reshape(Bp, P, Lp))
    return out[:B, :, :L]


@functools.partial(jax.jit,
                   static_argnames=("hidden_dim", "labelset_size", "batch_tile"))
def bilstm_forward(x, lstm_packed, mlp_packed, *, hidden_dim, labelset_size,
                   batch_tile=64):
    return bilstm_pairs_mlp(x, lstm_packed, mlp_packed, hidden_dim=hidden_dim,
                            labelset_size=labelset_size, batch_tile=batch_tile)


# ----------------------------------------------------------------------------
# Deterministic parameter construction + one-time host-side packing.
# ----------------------------------------------------------------------------
def _uniform(key, shape, fan):
    bound = 1.0 / jnp.sqrt(jnp.float32(fan))
    return jax.random.uniform(key, shape, jnp.float32, -bound, bound)


def init_raw_params(key, input_dim, hidden_dim, labelset_size):
    """PyTorch-equivalent parameters (weights pre-transposed to (in, out))."""
    H, D, L = hidden_dim, input_dim, labelset_size
    ks = jax.random.split(key, 16)
    wih_f = _uniform(ks[0], (D, 4 * H), H)
    whh_f = _uniform(ks[1], (H, 4 * H), H)
    b_f = _uniform(ks[2], (1, 4 * H), H) + _uniform(ks[3], (1, 4 * H), H)
    wih_b = _uniform(ks[4], (D, 4 * H), H)
    whh_b = _uniform(ks[5], (H, 4 * H), H)
    b_b = _uniform(ks[6], (1, 4 * H), H) + _uniform(ks[7], (1, 4 * H), H)
    lstm = (wih_f, whh_f, b_f, wih_b, whh_b, b_b)
    # MLP: 4H -> H -> H -> H -> L
    w1 = _uniform(ks[8], (4 * H, H), 4 * H); b1 = _uniform(ks[9], (1, H), 4 * H)
    w2 = _uniform(ks[10], (H, H), H);        b2 = _uniform(ks[11], (1, H), H)
    w3 = _uniform(ks[12], (H, H), H);        b3 = _uniform(ks[13], (1, H), H)
    w4 = _uniform(ks[14], (H, L), H);        b4 = _uniform(ks[15], (1, L), H)
    mlp = (w1, b1, w2, b2, w3, b3, w4, b4)
    return lstm, mlp


def pack_params(lstm_raw, mlp_raw, hidden_dim):
    """One-time repacking into the fused kernel's layouts (MXU operands bf16)."""
    H = hidden_dim
    bf16 = jnp.bfloat16
    wih_f, whh_f, b_f, wih_b, whh_b, b_b = lstm_raw
    D = wih_f.shape[0]

    def gate_major(m_f, m_b):
        # columns: [i_f i_b | f_f f_b | g_f g_b | o_f o_b], each block H wide
        blocks = []
        for k in range(4):
            blocks.append(m_f[:, k * H:(k + 1) * H])
            blocks.append(m_b[:, k * H:(k + 1) * H])
        return jnp.concatenate(blocks, axis=-1)

    wih_gm = gate_major(wih_f, wih_b)                          # (D, 8H)
    b_packed = gate_major(b_f, b_b)                            # (1, 8H) f32

    # Direction-masked, row-stacked input weights: rows 0:D multiply x(s) and
    # only feed fwd-direction columns, rows D:2D multiply x(T-1-s) and only
    # feed bwd-direction columns -> the per-step time select is pre-baked.
    lane = jnp.arange(8 * H)
    is_bwd = (lane // H) % 2 == 1
    wih_top = jnp.where(is_bwd[None, :], 0.0, wih_gm)
    wih_bot = jnp.where(is_bwd[None, :], wih_gm, 0.0)
    Kp = _round_up(2 * D, 128)
    wih_stacked = jnp.concatenate([wih_top, wih_bot], axis=0)
    wih_stacked = jnp.pad(wih_stacked, ((0, Kp - 2 * D), (0, 0))).astype(bf16)

    # Block-diagonal recurrent weights: rows 0:H act on h_fwd, rows H:2H on h_bwd.
    z = jnp.zeros((H, H), jnp.float32)
    top, bot = [], []
    for k in range(4):
        top += [whh_f[:, k * H:(k + 1) * H], z]
        bot += [z, whh_b[:, k * H:(k + 1) * H]]
    whh_packed = jnp.concatenate(
        [jnp.concatenate(top, axis=-1), jnp.concatenate(bot, axis=-1)],
        axis=0).astype(bf16)                                   # (2H, 8H)

    lstm_packed = (wih_stacked, whh_packed, b_packed)

    w1, b1, w2, b2, w3, b3, w4, b4 = mlp_raw
    L = w4.shape[1]
    Lp = _round_up(max(L, 128), 128)
    # pairs@w1 = out_f[i]@w1[:H] + out_b[i]@w1[H:2H] + out_f[j]@w1[2H:3H] + out_b[j]@w1[3H:4H]
    # -> one (H, 2Hm) weight per direction producing [left | right] lanes.
    w1f_cat = jnp.concatenate([w1[0 * H:1 * H], w1[2 * H:3 * H]], axis=-1).astype(bf16)
    w1b_cat = jnp.concatenate([w1[1 * H:2 * H], w1[3 * H:4 * H]], axis=-1).astype(bf16)
    # lane-dense classifier head: zero-pad weights, pad biases with -1e30 so
    # padded logits vanish from the softmax.
    w4p = jnp.pad(w4, ((0, 0), (0, Lp - L))).astype(bf16)
    b4p = jnp.pad(b4, ((0, 0), (0, Lp - L)), constant_values=-1e30)
    mlp_packed = (w1f_cat, w1b_cat, b1, w2.astype(bf16), b2,
                  w3.astype(bf16), b3, w4p, b4p)
    return lstm_packed, mlp_packed


# ----------------------------------------------------------------------------
# Pure-JAX reference (mirrors the PyTorch module's intended forward).
# matmul_dtype=f32 gives the true-f32 reference; bf16 mimics the kernel's
# mixed-precision MXU operands for a tight numerical check.
# ----------------------------------------------------------------------------
def reference_forward(x, lstm_raw, mlp_raw, hidden_dim, matmul_dtype=jnp.float32):
    wih_f, whh_f, b_f, wih_b, whh_b, b_b = lstm_raw
    w1, b1, w2, b2, w3, b3, w4, b4 = mlp_raw
    H = hidden_dim
    T = x.shape[1]

    def mm(a, b):
        return jnp.dot(a.astype(matmul_dtype), b.astype(matmul_dtype),
                       preferred_element_type=jnp.float32)

    def one_sentence(xs):                                  # (T, D)
        def run(wih, whh, b, reverse):
            def cell(carry, xt):
                h, c = carry
                g = mm(xt[None, :], wih)[0] + mm(h[None, :], whh)[0] + b[0]
                i = jax.nn.sigmoid(g[0:H]); f = jax.nn.sigmoid(g[H:2 * H])
                gg = jnp.tanh(g[2 * H:3 * H]); o = jax.nn.sigmoid(g[3 * H:4 * H])
                c = f * c + i * gg
                h = o * jnp.tanh(c)
                return (h, c), h
            seq = xs[::-1] if reverse else xs
            _, hs = lax.scan(cell, (jnp.zeros(H), jnp.zeros(H)), seq)
            return hs[::-1] if reverse else hs

        out = jnp.concatenate([run(wih_f, whh_f, b_f, False),
                               run(wih_b, whh_b, b_b, True)], axis=-1)   # (T, 2H)
        left = jnp.repeat(out, T, axis=0)
        right = jnp.tile(out, (T, 1))
        pairs = jnp.concatenate([left, right], axis=-1)                  # (T*T, 4H)
        h = jax.nn.relu(mm(pairs, w1) + b1)
        h = jax.nn.relu(mm(h, w2) + b2)
        h = jax.nn.relu(mm(h, w3) + b3)
        logits = mm(h, w4) + b4
        return jax.nn.log_softmax(logits, axis=-1)

    return jax.vmap(one_sentence)(x)


if __name__ == "__main__":
    SEQ_LEN = 8          # sentence length
    INPUT_DIM = 300      # embedding size implied by get_embedding (300-dim)
    HIDDEN_DIM = 32
    LABELSET_SIZE = 5
    BATCH = 12           # number of sentences batched through one launch
    BATCH_TILE = 8       # per-grid-step batch tile -> grid=(2,), parallel on v7x

    key = jax.random.PRNGKey(0)
    k_x, k_p = jax.random.split(key)
    # sentences as pre-looked-up embeddings, (B, T, D) float32
    x = jax.random.normal(k_x, (BATCH, SEQ_LEN, INPUT_DIM), jnp.float32)

    lstm_raw, mlp_raw = init_raw_params(k_p, INPUT_DIM, HIDDEN_DIM, LABELSET_SIZE)
    lstm_packed, mlp_packed = pack_params(lstm_raw, mlp_raw, HIDDEN_DIM)

    scores = bilstm_forward(x, lstm_packed, mlp_packed,
                            hidden_dim=HIDDEN_DIM, labelset_size=LABELSET_SIZE,
                            batch_tile=BATCH_TILE)
    scores = jax.block_until_ready(scores)

    assert scores.shape == (BATCH, SEQ_LEN * SEQ_LEN, LABELSET_SIZE)
    assert bool(jnp.all(jnp.isfinite(scores)))
    # rows of log_softmax must sum to ~1 in prob space
    assert bool(jnp.allclose(jnp.exp(scores).sum(-1), 1.0, atol=1e-3))

    # tight check vs a reference that mimics the kernel's bf16 MXU operands
    ref_bf16 = reference_forward(x, lstm_raw, mlp_raw, HIDDEN_DIM,
                                 matmul_dtype=jnp.bfloat16)
    err_bf16 = float(jnp.max(jnp.abs(scores - ref_bf16)))
    assert err_bf16 < 2e-2, f"kernel vs bf16-operand reference max abs err = {err_bf16}"

    # loose check vs the true-f32 reference (bf16 MXU operands round-trip)
    ref_f32 = reference_forward(x, lstm_raw, mlp_raw, HIDDEN_DIM,
                                matmul_dtype=jnp.float32)
    err_f32 = float(jnp.max(jnp.abs(scores - ref_f32)))
    assert err_f32 < 0.25, f"kernel vs f32 reference max abs err = {err_f32}"

    print("KERNEL_OK")
</pallas_src>

<mosaic_0001>
module attributes {stable_mosaic.version = 11 : i64} {
  func.func @_bilstm_kernel(%arg0: i32, %arg1: memref<64x640xbf16, #tpu.memory_space<vmem>>, %arg2: memref<640x256xbf16, #tpu.memory_space<vmem>>, %arg3: memref<64x256xbf16, #tpu.memory_space<vmem>>, %arg4: memref<1x256xf32, #tpu.memory_space<vmem>>, %arg5: memref<32x64xbf16, #tpu.memory_space<vmem>>, %arg6: memref<32x64xbf16, #tpu.memory_space<vmem>>, %arg7: memref<1x32xf32, #tpu.memory_space<vmem>>, %arg8: memref<32x32xbf16, #tpu.memory_space<vmem>>, %arg9: memref<1x32xf32, #tpu.memory_space<vmem>>, %arg10: memref<32x32xbf16, #tpu.memory_space<vmem>>, %arg11: memref<1x32xf32, #tpu.memory_space<vmem>>, %arg12: memref<32x128xbf16, #tpu.memory_space<vmem>>, %arg13: memref<1x128xf32, #tpu.memory_space<vmem>>, %arg14: memref<512x128xf32, #tpu.memory_space<vmem>>, %arg15: memref<64x256xf32, #tpu.memory_space<vmem>>, %arg16: memref<64x32xf32, #tpu.memory_space<vmem>>, %arg17: memref<64x32xf32, #tpu.memory_space<vmem>>) attributes {dimension_semantics = [#tpu.dimension_semantics<parallel>], iteration_bounds = array<i64: 2>, scalar_prefetch = 0 : i64, scratch_operands = 3 : i64, tpu.core_type = #tpu.core_type<tc>, window_params = [{transform_indices = @transform_0, window_bounds = array<i64: 64, 640>}, {pipeline_mode = #tpu.pipeline_mode<synchronous>, transform_indices = @transform_1, window_bounds = array<i64: 640, 256>}, {pipeline_mode = #tpu.pipeline_mode<synchronous>, transform_indices = @transform_2, window_bounds = array<i64: 64, 256>}, {pipeline_mode = #tpu.pipeline_mode<synchronous>, transform_indices = @transform_3, window_bounds = array<i64: 1, 256>}, {pipeline_mode = #tpu.pipeline_mode<synchronous>, transform_indices = @transform_4, window_bounds = array<i64: 32, 64>}, {pipeline_mode = #tpu.pipeline_mode<synchronous>, transform_indices = @transform_5, window_bounds = array<i64: 32, 64>}, {pipeline_mode = #tpu.pipeline_mode<synchronous>, transform_indices = @transform_6, window_bounds = array<i64: 1, 32>}, {pipeline_mode = #tpu.pipeline_mode<synchronous>, transform_indices = @transform_7, window_bounds = array<i64: 32, 32>}, {pipeline_mode = #tpu.pipeline_mode<synchronous>, transform_indices = @transform_8, window_bounds = array<i64: 1, 32>}, {pipeline_mode = #tpu.pipeline_mode<synchronous>, transform_indices = @transform_9, window_bounds = array<i64: 32, 32>}, {pipeline_mode = #tpu.pipeline_mode<synchronous>, transform_indices = @transform_10, window_bounds = array<i64: 1, 32>}, {pipeline_mode = #tpu.pipeline_mode<synchronous>, transform_indices = @transform_11, window_bounds = array<i64: 32, 128>}, {pipeline_mode = #tpu.pipeline_mode<synchronous>, transform_indices = @transform_12, window_bounds = array<i64: 1, 128>}, {transform_indices = @transform_13, window_bounds = array<i64: 512, 128>}]} {
    %c0 = arith.constant 0 : index
    %c0_0 = arith.constant 0 : index
    %0 = vector.load %arg1[%c0, %c0_0] : memref<64x640xbf16, #tpu.memory_space<vmem>>, vector<64x640xbf16>
    %c0_1 = arith.constant 0 : index
    %c0_2 = arith.constant 0 : index
    %1 = vector.load %arg2[%c0_1, %c0_2] : memref<640x256xbf16, #tpu.memory_space<vmem>>, vector<640x256xbf16>
    %cst = arith.constant dense<0.000000e+00> : vector<64x256xf32>
    %2 = tpu.matmul %0, %1, %cst {dimension_numbers = #tpu.dot_dimension_numbers<[1], [0], [0], [1], [0, 0, 1, 1], [], []>} : vector<64x640xbf16>, vector<640x256xbf16>, vector<64x256xf32> -> vector<64x256xf32>
    %c0_3 = arith.constant 0 : index
    %c0_4 = arith.constant 0 : index
    %3 = vector.load %arg4[%c0_3, %c0_4] : memref<1x256xf32, #tpu.memory_space<vmem>>, vector<1x256xf32>
    %4 = vector.broadcast %3 : vector<1x256xf32> to vector<64x256xf32>
    %5 = arith.addf %2, %4 : vector<64x256xf32>
    %c0_5 = arith.constant 0 : index
    %c0_6 = arith.constant 0 : index
    %6 = vector.load %arg15[%c0_5, %c0_6] : memref<64x256xf32, #tpu.memory_space<vmem>>, vector<64x256xf32>
    tpu.vector_store %arg15[%c0_5, %c0_6], %5 {strides = array<i32>} : memref<64x256xf32, #tpu.memory_space<vmem>>, vector<64x256xf32>,
    %c0_7 = arith.constant 0 : index
    %c0_8 = arith.constant 0 : index
    %7 = vector.load %arg3[%c0_7, %c0_8] : memref<64x256xbf16, #tpu.memory_space<vmem>>, vector<64x256xbf16>
    %cst_9 = arith.constant 0.000000e+00 : f32
    %8 = vector.broadcast %cst_9 : f32 to vector<8x64xf32>
    %c0_i32 = arith.constant 0 : i32
    %c8_i32 = arith.constant 8 : i32
    %9 = arith.muli %c0_i32, %c8_i32 : i32
    %10 = tpu.assume_multiple %9, 8 : i32
    %c7_i32 = arith.constant 7 : i32
    %11 = arith.subi %c7_i32, %c0_i32 : i32
    %c8_i32_10 = arith.constant 8 : i32
    %12 = arith.muli %11, %c8_i32_10 : i32
    %13 = tpu.assume_multiple %12, 8 : i32
    %14 = arith.index_cast %10 : i32 to index
    %c0_11 = arith.constant 0 : index
    %15 = vector.load %arg15[%14, %c0_11] : memref<64x256xf32, #tpu.memory_space<vmem>>, vector<8x256xf32>
    %16 = arith.truncf %8 : vector<8x64xf32> to vector<8x64xbf16>
    %cst_12 = arith.constant dense<0.000000e+00> : vector<8x256xf32>
    %17 = tpu.matmul %16, %7, %cst_12 {dimension_numbers = #tpu.dot_dimension_numbers<[1], [0], [0], [1], [0, 0, 1, 1], [], []>} : vector<8x64xbf16>, vector<64x256xbf16>, vector<8x256xf32> -> vector<8x256xf32>
    %18 = arith.addf %15, %17 : vector<8x256xf32>
    %19 = vector.extract_strided_slice %18 {offsets = [0, 0], sizes = [8, 64], strides = [1, 1]} : vector<8x256xf32> to vector<8x64xf32>
    %20 = arith.negf %19 : vector<8x64xf32>
    %21 = math.exp %20 : vector<8x64xf32>
    %cst_13 = arith.constant 1.000000e+00 : f32
    %22 = vector.broadcast %cst_13 : f32 to vector<8x64xf32>
    %23 = arith.addf %22, %21 : vector<8x64xf32>
    %24 = arith.divf %22, %23 : vector<8x64xf32>
    %25 = vector.extract_strided_slice %18 {offsets = [0, 64], sizes = [8, 64], strides = [1, 1]} : vector<8x256xf32> to vector<8x64xf32>
    %26 = arith.negf %25 : vector<8x64xf32>
    %27 = math.exp %26 : vector<8x64xf32>
    %cst_14 = arith.constant 1.000000e+00 : f32
    %28 = vector.broadcast %cst_14 : f32 to vector<8x64xf32>
    %29 = arith.addf %28, %27 : vector<8x64xf32>
    %30 = arith.divf %28, %29 : vector<8x64xf32>
    %31 = vector.extract_strided_slice %18 {offsets = [0, 128], sizes = [8, 64], strides = [1, 1]} : vector<8x256xf32> to vector<8x64xf32>
    %32 = math.tanh %31 : vector<8x64xf32>
    %33 = vector.extract_strided_slice %18 {offsets = [0, 192], sizes = [8, 64], strides = [1, 1]} : vector<8x256xf32> to vector<8x64xf32>
    %34 = arith.negf %33 : vector<8x64xf32>
    %35 = math.exp %34 : vector<8x64xf32>
    %cst_15 = arith.constant 1.000000e+00 : f32
    %36 = vector.broadcast %cst_15 : f32 to vector<8x64xf32>
    %37 = arith.addf %36, %35 : vector<8x64xf32>
    %38 = arith.divf %36, %37 : vector<8x64xf32>
    %39 = arith.mulf %30, %8 : vector<8x64xf32>
    %40 = arith.mulf %24, %32 : vector<8x64xf32>
    %41 = arith.addf %39, %40 : vector<8x64xf32>
    %42 = math.tanh %41 : vector<8x64xf32>
    %43 = arith.mulf %38, %42 : vector<8x64xf32>
    %44 = vector.extract_strided_slice %43 {offsets = [0, 0], sizes = [8, 32], strides = [1, 1]} : vector<8x64xf32> to vector<8x32xf32>
    %45 = arith.index_cast %10 : i32 to index
    %c0_16 = arith.constant 0 : index
    %46 = vector.load %arg16[%45, %c0_16] : memref<64x32xf32, #tpu.memory_space<vmem>>, vector<8x32xf32>
    tpu.vector_store %arg16[%45, %c0_16], %44 {strides = array<i32>} : memref<64x32xf32, #tpu.memory_space<vmem>>, vector<8x32xf32>,
    %47 = vector.extract_strided_slice %43 {offsets = [0, 32], sizes = [8, 32], strides = [1, 1]} : vector<8x64xf32> to vector<8x32xf32>
    %48 = arith.index_cast %13 : i32 to index
    %c0_17 = arith.constant 0 : index
    %49 = vector.load %arg17[%48, %c0_17] : memref<64x32xf32, #tpu.memory_space<vmem>>, vector<8x32xf32>
    tpu.vector_store %arg17[%48, %c0_17], %47 {strides = array<i32>} : memref<64x32xf32, #tpu.memory_space<vmem>>, vector<8x32xf32>,
    %c1_i32 = arith.constant 1 : i32
    %c8_i32_18 = arith.constant 8 : i32
    %50 = arith.muli %c1_i32, %c8_i32_18 : i32
    %51 = tpu.assume_multiple %50, 8 : i32
    %c7_i32_19 = arith.constant 7 : i32
    %52 = arith.subi %c7_i32_19, %c1_i32 : i32
    %c8_i32_20 = arith.constant 8 : i32
    %53 = arith.muli %52, %c8_i32_20 : i32
    %54 = tpu.assume_multiple %53, 8 : i32
    %55 = arith.index_cast %51 : i32 to index
    %c0_21 = arith.constant 0 : index
    %56 = vector.load %arg15[%55, %c0_21] : memref<64x256xf32, #tpu.memory_space<vmem>>, vector<8x256xf32>
    %57 = arith.truncf %43 : vector<8x64xf32> to vector<8x64xbf16>
    %cst_22 = arith.constant dense<0.000000e+00> : vector<8x256xf32>
    %58 = tpu.matmul %57, %7, %cst_22 {dimension_numbers = #tpu.dot_dimension_numbers<[1], [0], [0], [1], [0, 0, 1, 1], [], []>} : vector<8x64xbf16>, vector<64x256xbf16>, vector<8x256xf32> -> vector<8x256xf32>
    %59 = arith.addf %56, %58 : vector<8x256xf32>
    %60 = vector.extract_strided_slice %59 {offsets = [0, 0], sizes = [8, 64], strides = [1, 1]} : vector<8x256xf32> to vector<8x64xf32>
    %61 = arith.negf %60 : vector<8x64xf32>
    %62 = math.exp %61 : vector<8x64xf32>
    %cst_23 = arith.constant 1.000000e+00 : f32
    %63 = vector.broadcast %cst_23 : f32 to vector<8x64xf32>
    %64 = arith.addf %63, %62 : vector<8x64xf32>
    %65 = arith.divf %63, %64 : vector<8x64xf32>
    %66 = vector.extract_strided_slice %59 {offsets = [0, 64], sizes = [8, 64], strides = [1, 1]} : vector<8x256xf32> to vector<8x64xf32>
    %67 = arith.negf %66 : vector<8x64xf32>
    %68 = math.exp %67 : vector<8x64xf32>
    %cst_24 = arith.constant 1.000000e+00 : f32
    %69 = vector.broadcast %cst_24 : f32 to vector<8x64xf32>
    %70 = arith.addf %69, %68 : vector<8x64xf32>
    %71 = arith.divf %69, %70 : vector<8x64xf32>
    %72 = vector.extract_strided_slice %59 {offsets = [0, 128], sizes = [8, 64], strides = [1, 1]} : vector<8x256xf32> to vector<8x64xf32>
    %73 = math.tanh %72 : vector<8x64xf32>
    %74 = vector.extract_strided_slice %59 {offsets = [0, 192], sizes = [8, 64], strides = [1, 1]} : vector<8x256xf32> to vector<8x64xf32>
    %75 = arith.negf %74 : vector<8x64xf32>
    %76 = math.exp %75 : vector<8x64xf32>
    %cst_25 = arith.constant 1.000000e+00 : f32
    %77 = vector.broadcast %cst_25 : f32 to vector<8x64xf32>
    %78 = arith.addf %77, %76 : vector<8x64xf32>
    %79 = arith.divf %77, %78 : vector<8x64xf32>
    %80 = arith.mulf %71, %41 : vector<8x64xf32>
    %81 = arith.mulf %65, %73 : vector<8x64xf32>
    %82 = arith.addf %80, %81 : vector<8x64xf32>
    %83 = math.tanh %82 : vector<8x64xf32>
    %84 = arith.mulf %79, %83 : vector<8x64xf32>
    %85 = vector.extract_strided_slice %84 {offsets = [0, 0], sizes = [8, 32], strides = [1, 1]} : vector<8x64xf32> to vector<8x32xf32>
    %86 = arith.index_cast %51 : i32 to index
    %c0_26 = arith.constant 0 : index
    %87 = vector.load %arg16[%86, %c0_26] : memref<64x32xf32, #tpu.memory_space<vmem>>, vector<8x32xf32>
    tpu.vector_store %arg16[%86, %c0_26], %85 {strides = array<i32>} : memref<64x32xf32, #tpu.memory_space<vmem>>, vector<8x32xf32>,
    %88 = vector.extract_strided_slice %84 {offsets = [0, 32], sizes = [8, 32], strides = [1, 1]} : vector<8x64xf32> to vector<8x32xf32>
    %89 = arith.index_cast %54 : i32 to index
    %c0_27 = arith.constant 0 : index
    %90 = vector.load %arg17[%89, %c0_27] : memref<64x32xf32, #tpu.memory_space<vmem>>, vector<8x32xf32>
    tpu.vector_store %arg17[%89, %c0_27], %88 {strides = array<i32>} : memref<64x32xf32, #tpu.memory_space<vmem>>, vector<8x32xf32>,
    %c2_i32 = arith.constant 2 : i32
    %c8_i32_28 = arith.constant 8 : i32
    %91 = arith.muli %c2_i32, %c8_i32_28 : i32
    %92 = tpu.assume_multiple %91, 8 : i32
    %c7_i32_29 = arith.constant 7 : i32
    %93 = arith.subi %c7_i32_29, %c2_i32 : i32
    %c8_i32_30 = arith.constant 8 : i32
    %94 = arith.muli %93, %c8_i32_30 : i32
    %95 = tpu.assume_multiple %94, 8 : i32
    %96 = arith.index_cast %92 : i32 to index
    %c0_31 = arith.constant 0 : index
    %97 = vector.load %arg15[%96, %c0_31] : memref<64x256xf32, #tpu.memory_space<vmem>>, vector<8x256xf32>
    %98 = arith.truncf %84 : vector<8x64xf32> to vector<8x64xbf16>
    %cst_32 = arith.constant dense<0.000000e+00> : vector<8x256xf32>
    %99 = tpu.matmul %98, %7, %cst_32 {dimension_numbers = #tpu.dot_dimension_numbers<[1], [0], [0], [1], [0, 0, 1, 1], [], []>} : vector<8x64xbf16>, vector<64x256xbf16>, vector<8x256xf32> -> vector<8x256xf32>
    %100 = arith.addf %97, %99 : vector<8x256xf32>
    %101 = vector.extract_strided_slice %100 {offsets = [0, 0], sizes = [8, 64], strides = [1, 1]} : vector<8x256xf32> to vector<8x64xf32>
    %102 = arith.negf %101 : vector<8x64xf32>
    %103 = math.exp %102 : vector<8x64xf32>
    %cst_33 = arith.constant 1.000000e+00 : f32
    %104 = vector.broadcast %cst_33 : f32 to vector<8x64xf32>
    %105 = arith.addf %104, %103 : vector<8x64xf32>
    %106 = arith.divf %104, %105 : vector<8x64xf32>
    %107 = vector.extract_strided_slice %100 {offsets = [0, 64], sizes = [8, 64], strides = [1, 1]} : vector<8x256xf32> to vector<8x64xf32>
    %108 = arith.negf %107 : vector<8x64xf32>
    %109 = math.exp %108 : vector<8x64xf32>
    %cst_34 = arith.constant 1.000000e+00 : f32
    %110 = vector.broadcast %cst_34 : f32 to vector<8x64xf32>
    %111 = arith.addf %110, %109 : vector<8x64xf32>
    %112 = arith.divf %110, %111 : vector<8x64xf32>
    %113 = vector.extract_strided_slice %100 {offsets = [0, 128], sizes = [8, 64], strides = [1, 1]} : vector<8x256xf32> to vector<8x64xf32>
    %114 = math.tanh %113 : vector<8x64xf32>
    %115 = vector.extract_strided_slice %100 {offsets = [0, 192], sizes = [8, 64], strides = [1, 1]} : vector<8x256xf32> to vector<8x64xf32>
    %116 = arith.negf %115 : vector<8x64xf32>
    %117 = math.exp %116 : vector<8x64xf32>
    %cst_35 = arith.constant 1.000000e+00 : f32
    %118 = vector.broadcast %cst_35 : f32 to vector<8x64xf32>
    %119 = arith.addf %118, %117 : vector<8x64xf32>
    %120 = arith.divf %118, %119 : vector<8x64xf32>
    %121 = arith.mulf %112, %82 : vector<8x64xf32>
    %122 = arith.mulf %106, %114 : vector<8x64xf32>
    %123 = arith.addf %121, %122 : vector<8x64xf32>
    %124 = math.tanh %123 : vector<8x64xf32>
    %125 = arith.mulf %120, %124 : vector<8x64xf32>
    %126 = vector.extract_strided_slice %125 {offsets = [0, 0], sizes = [8, 32], strides = [1, 1]} : vector<8x64xf32> to vector<8x32xf32>
    %127 = arith.index_cast %92 : i32 to index
    %c0_36 = arith.constant 0 : index
    %128 = vector.load %arg16[%127, %c0_36] : memref<64x32xf32, #tpu.memory_space<vmem>>, vector<8x32xf32>
    tpu.vector_store %arg16[%127, %c0_36], %126 {strides = array<i32>} : memref<64x32xf32, #tpu.memory_space<vmem>>, vector<8x32xf32>,
    %129 = vector.extract_strided_slice %125 {offsets = [0, 32], sizes = [8, 32], strides = [1, 1]} : vector<8x64xf32> to vector<8x32xf32>
    %130 = arith.index_cast %95 : i32 to index
    %c0_37 = arith.constant 0 : index
    %131 = vector.load %arg17[%130, %c0_37] : memref<64x32xf32, #tpu.memory_space<vmem>>, vector<8x32xf32>
    tpu.vector_store %arg17[%130, %c0_37], %129 {strides = array<i32>} : memref<64x32xf32, #tpu.memory_space<vmem>>, vector<8x32xf32>,
    %c3_i32 = arith.constant 3 : i32
    %c8_i32_38 = arith.constant 8 : i32
    %132 = arith.muli %c3_i32, %c8_i32_38 : i32
    %133 = tpu.assume_multiple %132, 8 : i32
    %c7_i32_39 = arith.constant 7 : i32
    %134 = arith.subi %c7_i32_39, %c3_i32 : i32
    %c8_i32_40 = arith.constant 8 : i32
    %135 = arith.muli %134, %c8_i32_40 : i32
    %136 = tpu.assume_multiple %135, 8 : i32
    %137 = arith.index_cast %133 : i32 to index
    %c0_41 = arith.constant 0 : index
    %138 = vector.load %arg15[%137, %c0_41] : memref<64x256xf32, #tpu.memory_space<vmem>>, vector<8x256xf32>
    %139 = arith.truncf %125 : vector<8x64xf32> to vector<8x64xbf16>
    %cst_42 = arith.constant dense<0.000000e+00> : vector<8x256xf32>
    %140 = tpu.matmul %139, %7, %cst_42 {dimension_numbers = #tpu.dot_dimension_numbers<[1], [0], [0], [1], [0, 0, 1, 1], [], []>} : vector<8x64xbf16>, vector<64x256xbf16>, vector<8x256xf32> -> vector<8x256xf32>
    %141 = arith.addf %138, %140 : vector<8x256xf32>
    %142 = vector.extract_strided_slice %141 {offsets = [0, 0], sizes = [8, 64], strides = [1, 1]} : vector<8x256xf32> to vector<8x64xf32>
    %143 = arith.negf %142 : vector<8x64xf32>
    %144 = math.exp %143 : vector<8x64xf32>
    %cst_43 = arith.constant 1.000000e+00 : f32
    %145 = vector.broadcast %cst_43 : f32 to vector<8x64xf32>
    %146 = arith.addf %145, %144 : vector<8x64xf32>
    %147 = arith.divf %145, %146 : vector<8x64xf32>
    %148 = vector.extract_strided_slice %141 {offsets = [0, 64], sizes = [8, 64], strides = [1, 1]} : vector<8x256xf32> to vector<8x64xf32>
    %149 = arith.negf %148 : vector<8x64xf32>
    %150 = math.exp %149 : vector<8x64xf32>
    %cst_44 = arith.constant 1.000000e+00 : f32
    %151 = vector.broadcast %cst_44 : f32 to vector<8x64xf32>
    %152 = arith.addf %151, %150 : vector<8x64xf32>
    %153 = arith.divf %151, %152 : vector<8x64xf32>
    %154 = vector.extract_strided_slice %141 {offsets = [0, 128], sizes = [8, 64], strides = [1, 1]} : vector<8x256xf32> to vector<8x64xf32>
    %155 = math.tanh %154 : vector<8x64xf32>
    %156 = vector.extract_strided_slice %141 {offsets = [0, 192], sizes = [8, 64], strides = [1, 1]} : vector<8x256xf32> to vector<8x64xf32>
    %157 = arith.negf %156 : vector<8x64xf32>
    %158 = math.exp %157 : vector<8x64xf32>
    %cst_45 = arith.constant 1.000000e+00 : f32
    %159 = vector.broadcast %cst_45 : f32 to vector<8x64xf32>
    %160 = arith.addf %159, %158 : vector<8x64xf32>
    %161 = arith.divf %159, %160 : vector<8x64xf32>
    %162 = arith.mulf %153, %123 : vector<8x64xf32>
    %163 = arith.mulf %147, %155 : vector<8x64xf32>
    %164 = arith.addf %162, %163 : vector<8x64xf32>
    %165 = math.tanh %164 : vector<8x64xf32>
    %166 = arith.mulf %161, %165 : vector<8x64xf32>
    %167 = vector.extract_strided_slice %166 {offsets = [0, 0], sizes = [8, 32], strides = [1, 1]} : vector<8x64xf32> to vector<8x32xf32>
    %168 = arith.index_cast %133 : i32 to index
    %c0_46 = arith.constant 0 : index
    %169 = vector.load %arg16[%168, %c0_46] : memref<64x32xf32, #tpu.memory_space<vmem>>, vector<8x32xf32>
    tpu.vector_store %arg16[%168, %c0_46], %167 {strides = array<i32>} : memref<64x32xf32, #tpu.memory_space<vmem>>, vector<8x32xf32>,
    %170 = vector.extract_strided_slice %166 {offsets = [0, 32], sizes = [8, 32], strides = [1, 1]} : vector<8x64xf32> to vector<8x32xf32>
    %171 = arith.index_cast %136 : i32 to index
    %c0_47 = arith.constant 0 : index
    %172 = vector.load %arg17[%171, %c0_47] : memref<64x32xf32, #tpu.memory_space<vmem>>, vector<8x32xf32>
    tpu.vector_store %arg17[%171, %c0_47], %170 {strides = array<i32>} : memref<64x32xf32, #tpu.memory_space<vmem>>, vector<8x32xf32>,
    %c4_i32 = arith.constant 4 : i32
    %c8_i32_48 = arith.constant 8 : i32
    %173 = arith.muli %c4_i32, %c8_i32_48 : i32
    %174 = tpu.assume_multiple %173, 8 : i32
    %c7_i32_49 = arith.constant 7 : i32
    %175 = arith.subi %c7_i32_49, %c4_i32 : i32
    %c8_i32_50 = arith.constant 8 : i32
    %176 = arith.muli %175, %c8_i32_50 : i32
    %177 = tpu.assume_multiple %176, 8 : i32
    %178 = arith.index_cast %174 : i32 to index
    %c0_51 = arith.constant 0 : index
    %179 = vector.load %arg15[%178, %c0_51] : memref<64x256xf32, #tpu.memory_space<vmem>>, vector<8x256xf32>
    %180 = arith.truncf %166 : vector<8x64xf32> to vector<8x64xbf16>
    %cst_52 = arith.constant dense<0.000000e+00> : vector<8x256xf32>
    %181 = tpu.matmul %180, %7, %cst_52 {dimension_numbers = #tpu.dot_dimension_numbers<[1], [0], [0], [1], [0, 0, 1, 1], [], []>} : vector<8x64xbf16>, vector<64x256xbf16>, vector<8x256xf32> -> vector<8x256xf32>
    %182 = arith.addf %179, %181 : vector<8x256xf32>
    %183 = vector.extract_strided_slice %182 {offsets = [0, 0], sizes = [8, 64], strides = [1, 1]} : vector<8x256xf32> to vector<8x64xf32>
    %184 = arith.negf %183 : vector<8x64xf32>
    %185 = math.exp %184 : vector<8x64xf32>
    %cst_53 = arith.constant 1.000000e+00 : f32
    %186 = vector.broadcast %cst_53 : f32 to vector<8x64xf32>
    %187 = arith.addf %186, %185 : vector<8x64xf32>
    %188 = arith.divf %186, %187 : vector<8x64xf32>
    %189 = vector.extract_strided_slice %182 {offsets = [0, 64], sizes = [8, 64], strides = [1, 1]} : vector<8x256xf32> to vector<8x64xf32>
    %190 = arith.negf %189 : vector<8x64xf32>
    %191 = math.exp %190 : vector<8x64xf32>
    %cst_54 = arith.constant 1.000000e+00 : f32
    %192 = vector.broadcast %cst_54 : f32 to vector<8x64xf32>
    %193 = arith.addf %192, %191 : vector<8x64xf32>
    %194 = arith.divf %192, %193 : vector<8x64xf32>
    %195 = vector.extract_strided_slice %182 {offsets = [0, 128], sizes = [8, 64], strides = [1, 1]} : vector<8x256xf32> to vector<8x64xf32>
    %196 = math.tanh %195 : vector<8x64xf32>
    %197 = vector.extract_strided_slice %182 {offsets = [0, 192], sizes = [8, 64], strides = [1, 1]} : vector<8x256xf32> to vector<8x64xf32>
    %198 = arith.negf %197 : vector<8x64xf32>
    %199 = math.exp %198 : vector<8x64xf32>
    %cst_55 = arith.constant 1.000000e+00 : f32
    %200 = vector.broadcast %cst_55 : f32 to vector<8x64xf32>
    %201 = arith.addf %200, %199 : vector<8x64xf32>
    %202 = arith.divf %200, %201 : vector<8x64xf32>
    %203 = arith.mulf %194, %164 : vector<8x64xf32>
    %204 = arith.mulf %188, %196 : vector<8x64xf32>
    %205 = arith.addf %203, %204 : vector<8x64xf32>
    %206 = math.tanh %205 : vector<8x64xf32>
    %207 = arith.mulf %202, %206 : vector<8x64xf32>
    %208 = vector.extract_strided_slice %207 {offsets = [0, 0], sizes = [8, 32], strides = [1, 1]} : vector<8x64xf32> to vector<8x32xf32>
    %209 = arith.index_cast %174 : i32 to index
    %c0_56 = arith.constant 0 : index
    %210 = vector.load %arg16[%209, %c0_56] : memref<64x32xf32, #tpu.memory_space<vmem>>, vector<8x32xf32>
    tpu.vector_store %arg16[%209, %c0_56], %208 {strides = array<i32>} : memref<64x32xf32, #tpu.memory_space<vmem>>, vector<8x32xf32>,
    %211 = vector.extract_strided_slice %207 {offsets = [0, 32], sizes = [8, 32], strides = [1, 1]} : vector<8x64xf32> to vector<8x32xf32>
    %212 = arith.index_cast %177 : i32 to index
    %c0_57 = arith.constant 0 : index
    %213 = vector.load %arg17[%212, %c0_57] : memref<64x32xf32, #tpu.memory_space<vmem>>, vector<8x32xf32>
    tpu.vector_store %arg17[%212, %c0_57], %211 {strides = array<i32>} : memref<64x32xf32, #tpu.memory_space<vmem>>, vector<8x32xf32>,
    %c5_i32 = arith.constant 5 : i32
    %c8_i32_58 = arith.constant 8 : i32
    %214 = arith.muli %c5_i32, %c8_i32_58 : i32
    %215 = tpu.assume_multiple %214, 8 : i32
    %c7_i32_59 = arith.constant 7 : i32
    %216 = arith.subi %c7_i32_59, %c5_i32 : i32
    %c8_i32_60 = arith.constant 8 : i32
    %217 = arith.muli %216, %c8_i32_60 : i32
    %218 = tpu.assume_multiple %217, 8 : i32
    %219 = arith.index_cast %215 : i32 to index
    %c0_61 = arith.constant 0 : index
    %220 = vector.load %arg15[%219, %c0_61] : memref<64x256xf32, #tpu.memory_space<vmem>>, vector<8x256xf32>
    %221 = arith.truncf %207 : vector<8x64xf32> to vector<8x64xbf16>
    %cst_62 = arith.constant dense<0.000000e+00> : vector<8x256xf32>
    %222 = tpu.matmul %221, %7, %cst_62 {dimension_numbers = #tpu.dot_dimension_numbers<[1], [0], [0], [1], [0, 0, 1, 1], [], []>} : vector<8x64xbf16>, vector<64x256xbf16>, vector<8x256xf32> -> vector<8x256xf32>
    %223 = arith.addf %220, %222 : vector<8x256xf32>
    %224 = vector.extract_strided_slice %223 {offsets = [0, 0], sizes = [8, 64], strides = [1, 1]} : vector<8x256xf32> to vector<8x64xf32>
    %225 = arith.negf %224 : vector<8x64xf32>
    %226 = math.exp %225 : vector<8x64xf32>
    %cst_63 = arith.constant 1.000000e+00 : f32
    %227 = vector.broadcast %cst_63 : f32 to vector<8x64xf32>
    %228 = arith.addf %227, %226 : vector<8x64xf32>
    %229 = arith.divf %227, %228 : vector<8x64xf32>
    %230 = vector.extract_strided_slice %223 {offsets = [0, 64], sizes = [8, 64], strides = [1, 1]} : vector<8x256xf32> to vector<8x64xf32>
    %231 = arith.negf %230 : vector<8x64xf32>
    %232 = math.exp %231 : vector<8x64xf32>
    %cst_64 = arith.constant 1.000000e+00 : f32
    %233 = vector.broadcast %cst_64 : f32 to vector<8x64xf32>
    %234 = arith.addf %233, %232 : vector<8x64xf32>
    %235 = arith.divf %233, %234 : vector<8x64xf32>
    %236 = vector.extract_strided_slice %223 {offsets = [0, 128], sizes = [8, 64], strides = [1, 1]} : vector<8x256xf32> to vector<8x64xf32>
    %237 = math.tanh %236 : vector<8x64xf32>
    %238 = vector.extract_strided_slice %223 {offsets = [0, 192], sizes = [8, 64], strides = [1, 1]} : vector<8x256xf32> to vector<8x64xf32>
    %239 = arith.negf %238 : vector<8x64xf32>
    %240 = math.exp %239 : vector<8x64xf32>
    %cst_65 = arith.constant 1.000000e+00 : f32
    %241 = vector.broadcast %cst_65 : f32 to vector<8x64xf32>
    %242 = arith.addf %241, %240 : vector<8x64xf32>
    %243 = arith.divf %241, %242 : vector<8x64xf32>
    %244 = arith.mulf %235, %205 : vector<8x64xf32>
    %245 = arith.mulf %229, %237 : vector<8x64xf32>
    %246 = arith.addf %244, %245 : vector<8x64xf32>
    %247 = math.tanh %246 : vector<8x64xf32>
    %248 = arith.mulf %243, %247 : vector<8x64xf32>
    %249 = vector.extract_strided_slice %248 {offsets = [0, 0], sizes = [8, 32], strides = [1, 1]} : vector<8x64xf32> to vector<8x32xf32>
    %250 = arith.index_cast %215 : i32 to index
    %c0_66 = arith.constant 0 : index
    %251 = vector.load %arg16[%250, %c0_66] : memref<64x32xf32, #tpu.memory_space<vmem>>, vector<8x32xf32>
    tpu.vector_store %arg16[%250, %c0_66], %249 {strides = array<i32>} : memref<64x32xf32, #tpu.memory_space<vmem>>, vector<8x32xf32>,
    %252 = vector.extract_strided_slice %248 {offsets = [0, 32], sizes = [8, 32], strides = [1, 1]} : vector<8x64xf32> to vector<8x32xf32>
    %253 = arith.index_cast %218 : i32 to index
    %c0_67 = arith.constant 0 : index
    %254 = vector.load %arg17[%253, %c0_67] : memref<64x32xf32, #tpu.memory_space<vmem>>, vector<8x32xf32>
    tpu.vector_store %arg17[%253, %c0_67], %252 {strides = array<i32>} : memref<64x32xf32, #tpu.memory_space<vmem>>, vector<8x32xf32>,
    %c6_i32 = arith.constant 6 : i32
    %c8_i32_68 = arith.constant 8 : i32
    %255 = arith.muli %c6_i32, %c8_i32_68 : i32
    %256 = tpu.assume_multiple %255, 8 : i32
    %c7_i32_69 = arith.constant 7 : i32
    %257 = arith.subi %c7_i32_69, %c6_i32 : i32
    %c8_i32_70 = arith.constant 8 : i32
    %258 = arith.muli %257, %c8_i32_70 : i32
    %259 = tpu.assume_multiple %258, 8 : i32
    %260 = arith.index_cast %256 : i32 to index
    %c0_71 = arith.constant 0 : index
    %261 = vector.load %arg15[%260, %c0_71] : memref<64x256xf32, #tpu.memory_space<vmem>>, vector<8x256xf32>
    %262 = arith.truncf %248 : vector<8x64xf32> to vector<8x64xbf16>
    %cst_72 = arith.constant dense<0.000000e+00> : vector<8x256xf32>
    %263 = tpu.matmul %262, %7, %cst_72 {dimension_numbers = #tpu.dot_dimension_numbers<[1], [0], [0], [1], [0, 0, 1, 1], [], []>} : vector<8x64xbf16>, vector<64x256xbf16>, vector<8x256xf32> -> vector<8x256xf32>
    %264 = arith.addf %261, %263 : vector<8x256xf32>
    %265 = vector.extract_strided_slice %264 {offsets = [0, 0], sizes = [8, 64], strides = [1, 1]} : vector<8x256xf32> to vector<8x64xf32>
    %266 = arith.negf %265 : vector<8x64xf32>
    %267 = math.exp %266 : vector<8x64xf32>
    %cst_73 = arith.constant 1.000000e+00 : f32
    %268 = vector.broadcast %cst_73 : f32 to vector<8x64xf32>
    %269 = arith.addf %268, %267 : vector<8x64xf32>
    %270 = arith.divf %268, %269 : vector<8x64xf32>
    %271 = vector.extract_strided_slice %264 {offsets = [0, 64], sizes = [8, 64], strides = [1, 1]} : vector<8x256xf32> to vector<8x64xf32>
    %272 = arith.negf %271 : vector<8x64xf32>
    %273 = math.exp %272 : vector<8x64xf32>
    %cst_74 = arith.constant 1.000000e+00 : f32
    %274 = vector.broadcast %cst_74 : f32 to vector<8x64xf32>
    %275 = arith.addf %274, %273 : vector<8x64xf32>
    %276 = arith.divf %274, %275 : vector<8x64xf32>
    %277 = vector.extract_strided_slice %264 {offsets = [0, 128], sizes = [8, 64], strides = [1, 1]} : vector<8x256xf32> to vector<8x64xf32>
    %278 = math.tanh %277 : vector<8x64xf32>
    %279 = vector.extract_strided_slice %264 {offsets = [0, 192], sizes = [8, 64], strides = [1, 1]} : vector<8x256xf32> to vector<8x64xf32>
    %280 = arith.negf %279 : vector<8x64xf32>
    %281 = math.exp %280 : vector<8x64xf32>
    %cst_75 = arith.constant 1.000000e+00 : f32
    %282 = vector.broadcast %cst_75 : f32 to vector<8x64xf32>
    %283 = arith.addf %282, %281 : vector<8x64xf32>
    %284 = arith.divf %282, %283 : vector<8x64xf32>
    %285 = arith.mulf %276, %246 : vector<8x64xf32>
    %286 = arith.mulf %270, %278 : vector<8x64xf32>
    %287 = arith.addf %285, %286 : vector<8x64xf32>
    %288 = math.tanh %287 : vector<8x64xf32>
    %289 = arith.mulf %284, %288 : vector<8x64xf32>
    %290 = vector.extract_strided_slice %289 {offsets = [0, 0], sizes = [8, 32], strides = [1, 1]} : vector<8x64xf32> to vector<8x32xf32>
    %291 = arith.index_cast %256 : i32 to index
    %c0_76 = arith.constant 0 : index
    %292 = vector.load %arg16[%291, %c0_76] : memref<64x32xf32, #tpu.memory_space<vmem>>, vector<8x32xf32>
    tpu.vector_store %arg16[%291, %c0_76], %290 {strides = array<i32>} : memref<64x32xf32, #tpu.memory_space<vmem>>, vector<8x32xf32>,
    %293 = vector.extract_strided_slice %289 {offsets = [0, 32], sizes = [8, 32], strides = [1, 1]} : vector<8x64xf32> to vector<8x32xf32>
    %294 = arith.index_cast %259 : i32 to index
    %c0_77 = arith.constant 0 : index
    %295 = vector.load %arg17[%294, %c0_77] : memref<64x32xf32, #tpu.memory_space<vmem>>, vector<8x32xf32>
    tpu.vector_store %arg17[%294, %c0_77], %293 {strides = array<i32>} : memref<64x32xf32, #tpu.memory_space<vmem>>, vector<8x32xf32>,
    %c7_i32_78 = arith.constant 7 : i32
    %c8_i32_79 = arith.constant 8 : i32
    %296 = arith.muli %c7_i32_78, %c8_i32_79 : i32
    %297 = tpu.assume_multiple %296, 8 : i32
    %c7_i32_80 = arith.constant 7 : i32
    %298 = arith.subi %c7_i32_80, %c7_i32_78 : i32
    %c8_i32_81 = arith.constant 8 : i32
    %299 = arith.muli %298, %c8_i32_81 : i32
    %300 = tpu.assume_multiple %299, 8 : i32
    %301 = arith.index_cast %297 : i32 to index
    %c0_82 = arith.constant 0 : index
    %302 = vector.load %arg15[%301, %c0_82] : memref<64x256xf32, #tpu.memory_space<vmem>>, vector<8x256xf32>
    %303 = arith.truncf %289 : vector<8x64xf32> to vector<8x64xbf16>
    %cst_83 = arith.constant dense<0.000000e+00> : vector<8x256xf32>
    %304 = tpu.matmul %303, %7, %cst_83 {dimension_numbers = #tpu.dot_dimension_numbers<[1], [0], [0], [1], [0, 0, 1, 1], [], []>} : vector<8x64xbf16>, vector<64x256xbf16>, vector<8x256xf32> -> vector<8x256xf32>
    %305 = arith.addf %302, %304 : vector<8x256xf32>
    %306 = vector.extract_strided_slice %305 {offsets = [0, 0], sizes = [8, 64], strides = [1, 1]} : vector<8x256xf32> to vector<8x64xf32>
    %307 = arith.negf %306 : vector<8x64xf32>
    %308 = math.exp %307 : vector<8x64xf32>
    %cst_84 = arith.constant 1.000000e+00 : f32
    %309 = vector.broadcast %cst_84 : f32 to vector<8x64xf32>
    %310 = arith.addf %309, %308 : vector<8x64xf32>
    %311 = arith.divf %309, %310 : vector<8x64xf32>
    %312 = vector.extract_strided_slice %305 {offsets = [0, 64], sizes = [8, 64], strides = [1, 1]} : vector<8x256xf32> to vector<8x64xf32>
    %313 = arith.negf %312 : vector<8x64xf32>
    %314 = math.exp %313 : vector<8x64xf32>
    %cst_85 = arith.constant 1.000000e+00 : f32
    %315 = vector.broadcast %cst_85 : f32 to vector<8x64xf32>
    %316 = arith.addf %315, %314 : vector<8x64xf32>
    %317 = arith.divf %315, %316 : vector<8x64xf32>
    %318 = vector.extract_strided_slice %305 {offsets = [0, 128], sizes = [8, 64], strides = [1, 1]} : vector<8x256xf32> to vector<8x64xf32>
    %319 = math.tanh %318 : vector<8x64xf32>
    %320 = vector.extract_strided_slice %305 {offsets = [0, 192], sizes = [8, 64], strides = [1, 1]} : vector<8x256xf32> to vector<8x64xf32>
    %321 = arith.negf %320 : vector<8x64xf32>
    %322 = math.exp %321 : vector<8x64xf32>
    %cst_86 = arith.constant 1.000000e+00 : f32
    %323 = vector.broadcast %cst_86 : f32 to vector<8x64xf32>
    %324 = arith.addf %323, %322 : vector<8x64xf32>
    %325 = arith.divf %323, %324 : vector<8x64xf32>
    %326 = arith.mulf %317, %287 : vector<8x64xf32>
    %327 = arith.mulf %311, %319 : vector<8x64xf32>
    %328 = arith.addf %326, %327 : vector<8x64xf32>
    %329 = math.tanh %328 : vector<8x64xf32>
    %330 = arith.mulf %325, %329 : vector<8x64xf32>
    %331 = vector.extract_strided_slice %330 {offsets = [0, 0], sizes = [8, 32], strides = [1, 1]} : vector<8x64xf32> to vector<8x32xf32>
    %332 = arith.index_cast %297 : i32 to index
    %c0_87 = arith.constant 0 : index
    %333 = vector.load %arg16[%332, %c0_87] : memref<64x32xf32, #tpu.memory_space<vmem>>, vector<8x32xf32>
    tpu.vector_store %arg16[%332, %c0_87], %331 {strides = array<i32>} : memref<64x32xf32, #tpu.memory_space<vmem>>, vector<8x32xf32>,
    %334 = vector.extract_strided_slice %330 {offsets = [0, 32], sizes = [8, 32], strides = [1, 1]} : vector<8x64xf32> to vector<8x32xf32>
    %335 = arith.index_cast %300 : i32 to index
    %c0_88 = arith.constant 0 : index
    %336 = vector.load %arg17[%335, %c0_88] : memref<64x32xf32, #tpu.memory_space<vmem>>, vector<8x32xf32>
    tpu.vector_store %arg17[%335, %c0_88], %334 {strides = array<i32>} : memref<64x32xf32, #tpu.memory_space<vmem>>, vector<8x32xf32>,
    %c8_i32_89 = arith.constant 8 : i32
    %c0_90 = arith.constant 0 : index
    %c0_91 = arith.constant 0 : index
    %337 = vector.load %arg16[%c0_90, %c0_91] : memref<64x32xf32, #tpu.memory_space<vmem>>, vector<64x32xf32>
    %338 = arith.truncf %337 : vector<64x32xf32> to vector<64x32xbf16>
    %c0_92 = arith.constant 0 : index
    %c0_93 = arith.constant 0 : index
    %339 = vector.load %arg5[%c0_92, %c0_93] : memref<32x64xbf16, #tpu.memory_space<vmem>>, vector<32x64xbf16>
    %cst_94 = arith.constant dense<0.000000e+00> : vector<64x64xf32>
    %340 = tpu.matmul %338, %339, %cst_94 {dimension_numbers = #tpu.dot_dimension_numbers<[1], [0], [0], [1], [0, 0, 1, 1], [], []>} : vector<64x32xbf16>, vector<32x64xbf16>, vector<64x64xf32> -> vector<64x64xf32>
    %c0_95 = arith.constant 0 : index
    %c0_96 = arith.constant 0 : index
    %341 = vector.load %arg17[%c0_95, %c0_96] : memref<64x32xf32, #tpu.memory_space<vmem>>, vector<64x32xf32>
    %342 = arith.truncf %341 : vector<64x32xf32> to vector<64x32xbf16>
    %c0_97 = arith.constant 0 : index
    %c0_98 = arith.constant 0 : index
    %343 = vector.load %arg6[%c0_97, %c0_98] : memref<32x64xbf16, #tpu.memory_space<vmem>>, vector<32x64xbf16>
    %cst_99 = arith.constant dense<0.000000e+00> : vector<64x64xf32>
    %344 = tpu.matmul %342, %343, %cst_99 {dimension_numbers = #tpu.dot_dimension_numbers<[1], [0], [0], [1], [0, 0, 1, 1], [], []>} : vector<64x32xbf16>, vector<32x64xbf16>, vector<64x64xf32> -> vector<64x64xf32>
    %345 = arith.addf %340, %344 : vector<64x64xf32>
    %346 = vector.extract_strided_slice %345 {offsets = [0, 0], sizes = [64, 32], strides = [1, 1]} : vector<64x64xf32> to vector<64x32xf32>
    %347 = vector.extract_strided_slice %345 {offsets = [0, 32], sizes = [64, 32], strides = [1, 1]} : vector<64x64xf32> to vector<64x32xf32>
    %348 = vector.extract_strided_slice %346 {offsets = [0, 0], sizes = [8, 32], strides = [1, 1]} : vector<64x32xf32> to vector<8x32xf32>
    %349 = tpu.concatenate %348, %348, %348, %348, %348, %348, %348, %348 in 0 : vector<8x32xf32>, vector<8x32xf32>, vector<8x32xf32>, vector<8x32xf32>, vector<8x32xf32>, vector<8x32xf32>, vector<8x32xf32>, vector<8x32xf32> -> vector<64x32xf32>
    %350 = arith.addf %349, %347 : vector<64x32xf32>
    %351 = vector.extract_strided_slice %346 {offsets = [8, 0], sizes = [8, 32], strides = [1, 1]} : vector<64x32xf32> to vector<8x32xf32>
    %352 = tpu.concatenate %351, %351, %351, %351, %351, %351, %351, %351 in 0 : vector<8x32xf32>, vector<8x32xf32>, vector<8x32xf32>, vector<8x32xf32>, vector<8x32xf32>, vector<8x32xf32>, vector<8x32xf32>, vector<8x32xf32> -> vector<64x32xf32>
    %353 = arith.addf %352, %347 : vector<64x32xf32>
    %354 = vector.extract_strided_slice %346 {offsets = [16, 0], sizes = [8, 32], strides = [1, 1]} : vector<64x32xf32> to vector<8x32xf32>
    %355 = tpu.concatenate %354, %354, %354, %354, %354, %354, %354, %354 in 0 : vector<8x32xf32>, vector<8x32xf32>, vector<8x32xf32>, vector<8x32xf32>, vector<8x32xf32>, vector<8x32xf32>, vector<8x32xf32>, vector<8x32xf32> -> vector<64x32xf32>
    %356 = arith.addf %355, %347 : vector<64x32xf32>
    %357 = vector.extract_strided_slice %346 {offsets = [24, 0], sizes = [8, 32], strides = [1, 1]} : vector<64x32xf32> to vector<8x32xf32>
    %358 = tpu.concatenate %357, %357, %357, %357, %357, %357, %357, %357 in 0 : vector<8x32xf32>, vector<8x32xf32>, vector<8x32xf32>, vector<8x32xf32>, vector<8x32xf32>, vector<8x32xf32>, vector<8x32xf32>, vector<8x32xf32> -> vector<64x32xf32>
    %359 = arith.addf %358, %347 : vector<64x32xf32>
    %360 = vector.extract_strided_slice %346 {offsets = [32, 0], sizes = [8, 32], strides = [1, 1]} : vector<64x32xf32> to vector<8x32xf32>
    %361 = tpu.concatenate %360, %360, %360, %360, %360, %360, %360, %360 in 0 : vector<8x32xf32>, vector<8x32xf32>, vector<8x32xf32>, vector<8x32xf32>, vector<8x32xf32>, vector<8x32xf32>, vector<8x32xf32>, vector<8x32xf32> -> vector<64x32xf32>
    %362 = arith.addf %361, %347 : vector<64x32xf32>
    %363 = vector.extract_strided_slice %346 {offsets = [40, 0], sizes = [8, 32], strides = [1, 1]} : vector<64x32xf32> to vector<8x32xf32>
    %364 = tpu.concatenate %363, %363, %363, %363, %363, %363, %363, %363 in 0 : vector<8x32xf32>, vector<8x32xf32>, vector<8x32xf32>, vector<8x32xf32>, vector<8x32xf32>, vector<8x32xf32>, vector<8x32xf32>, vector<8x32xf32> -> vector<64x32xf32>
    %365 = arith.addf %364, %347 : vector<64x32xf32>
    %366 = vector.extract_strided_slice %346 {offsets = [48, 0], sizes = [8, 32], strides = [1, 1]} : vector<64x32xf32> to vector<8x32xf32>
    %367 = tpu.concatenate %366, %366, %366, %366, %366, %366, %366, %366 in 0 : vector<8x32xf32>, vector<8x32xf32>, vector<8x32xf32>, vector<8x32xf32>, vector<8x32xf32>, vector<8x32xf32>, vector<8x32xf32>, vector<8x32xf32> -> vector<64x32xf32>
    %368 = arith.addf %367, %347 : vector<64x32xf32>
    %369 = vector.extract_strided_slice %346 {offsets = [56, 0], sizes = [8, 32], strides = [1, 1]} : vector<64x32xf32> to vector<8x32xf32>
    %370 = tpu.concatenate %369, %369, %369, %369, %369, %369, %369, %369 in 0 : vector<8x32xf32>, vector<8x32xf32>, vector<8x32xf32>, vector<8x32xf32>, vector<8x32xf32>, vector<8x32xf32>, vector<8x32xf32>, vector<8x32xf32> -> vector<64x32xf32>
    %371 = arith.addf %370, %347 : vector<64x32xf32>
    %372 = tpu.concatenate %350, %353, %356, %359, %362, %365, %368, %371 in 0 : vector<64x32xf32>, vector<64x32xf32>, vector<64x32xf32>, vector<64x32xf32>, vector<64x32xf32>, vector<64x32xf32>, vector<64x32xf32>, vector<64x32xf32> -> vector<512x32xf32>
    %c0_100 = arith.constant 0 : index
    %c0_101 = arith.constant 0 : index
    %373 = vector.load %arg7[%c0_100, %c0_101] : memref<1x32xf32, #tpu.memory_space<vmem>>, vector<1x32xf32>
    %374 = vector.broadcast %373 : vector<1x32xf32> to vector<512x32xf32>
    %375 = arith.addf %372, %374 : vector<512x32xf32>
    %cst_102 = arith.constant 0.000000e+00 : f32
    %376 = vector.broadcast %cst_102 : f32 to vector<512x32xf32>
    %377 = arith.maximumf %375, %376 : vector<512x32xf32>
    %378 = arith.truncf %377 : vector<512x32xf32> to vector<512x32xbf16>
    %c0_103 = arith.constant 0 : index
    %c0_104 = arith.constant 0 : index
    %379 = vector.load %arg8[%c0_103, %c0_104] : memref<32x32xbf16, #tpu.memory_space<vmem>>, vector<32x32xbf16>
    %cst_105 = arith.constant dense<0.000000e+00> : vector<512x32xf32>
    %380 = tpu.matmul %378, %379, %cst_105 {dimension_numbers = #tpu.dot_dimension_numbers<[1], [0], [0], [1], [0, 0, 1, 1], [], []>} : vector<512x32xbf16>, vector<32x32xbf16>, vector<512x32xf32> -> vector<512x32xf32>
    %c0_106 = arith.constant 0 : index
    %c0_107 = arith.constant 0 : index
    %381 = vector.load %arg9[%c0_106, %c0_107] : memref<1x32xf32, #tpu.memory_space<vmem>>, vector<1x32xf32>
    %382 = vector.broadcast %381 : vector<1x32xf32> to vector<512x32xf32>
    %383 = arith.addf %380, %382 : vector<512x32xf32>
    %cst_108 = arith.constant 0.000000e+00 : f32
    %384 = vector.broadcast %cst_108 : f32 to vector<512x32xf32>
    %385 = arith.maximumf %383, %384 : vector<512x32xf32>
    %386 = arith.truncf %385 : vector<512x32xf32> to vector<512x32xbf16>
    %c0_109 = arith.constant 0 : index
    %c0_110 = arith.constant 0 : index
    %387 = vector.load %arg10[%c0_109, %c0_110] : memref<32x32xbf16, #tpu.memory_space<vmem>>, vector<32x32xbf16>
    %cst_111 = arith.constant dense<0.000000e+00> : vector<512x32xf32>
    %388 = tpu.matmul %386, %387, %cst_111 {dimension_numbers = #tpu.dot_dimension_numbers<[1], [0], [0], [1], [0, 0, 1, 1], [], []>} : vector<512x32xbf16>, vector<32x32xbf16>, vector<512x32xf32> -> vector<512x32xf32>
    %c0_112 = arith.constant 0 : index
    %c0_113 = arith.constant 0 : index
    %389 = vector.load %arg11[%c0_112, %c0_113] : memref<1x32xf32, #tpu.memory_space<vmem>>, vector<1x32xf32>
    %390 = vector.broadcast %389 : vector<1x32xf32> to vector<512x32xf32>
    %391 = arith.addf %388, %390 : vector<512x32xf32>
    %cst_114 = arith.constant 0.000000e+00 : f32
    %392 = vector.broadcast %cst_114 : f32 to vector<512x32xf32>
    %393 = arith.maximumf %391, %392 : vector<512x32xf32>
    %394 = arith.truncf %393 : vector<512x32xf32> to vector<512x32xbf16>
    %c0_115 = arith.constant 0 : index
    %c0_116 = arith.constant 0 : index
    %395 = vector.load %arg12[%c0_115, %c0_116] : memref<32x128xbf16, #tpu.memory_space<vmem>>, vector<32x128xbf16>
    %cst_117 = arith.constant dense<0.000000e+00> : vector<512x128xf32>
    %396 = tpu.matmul %394, %395, %cst_117 {dimension_numbers = #tpu.dot_dimension_numbers<[1], [0], [0], [1], [0, 0, 1, 1], [], []>} : vector<512x32xbf16>, vector<32x128xbf16>, vector<512x128xf32> -> vector<512x128xf32>
    %c0_118 = arith.constant 0 : index
    %c0_119 = arith.constant 0 : index
    %397 = vector.load %arg13[%c0_118, %c0_119] : memref<1x128xf32, #tpu.memory_space<vmem>>, vector<1x128xf32>
    %398 = vector.broadcast %397 : vector<1x128xf32> to vector<512x128xf32>
    %399 = arith.addf %396, %398 : vector<512x128xf32>
    %cst_120 = arith.constant dense<0xFF800000> : vector<512xf32>
    %400 = vector.multi_reduction <maximumf>, %399, %cst_120 [1] : vector<512x128xf32> to vector<512xf32>
    %401 = vector.shape_cast %400 : vector<512xf32> to vector<512x1xf32>
    %402 = vector.broadcast %401 : vector<512x1xf32> to vector<512x128xf32>
    %403 = arith.subf %399, %402 : vector<512x128xf32>
    %404 = math.exp %403 : vector<512x128xf32>
    %cst_121 = arith.constant dense<0.000000e+00> : vector<512xf32>
    %405 = vector.multi_reduction <add>, %404, %cst_121 [1] : vector<512x128xf32> to vector<512xf32>
    %406 = vector.shape_cast %405 : vector<512xf32> to vector<512x1xf32>
    %407 = math.log %406 : vector<512x1xf32>
    %408 = vector.broadcast %407 : vector<512x1xf32> to vector<512x128xf32>
    %409 = arith.subf %403, %408 : vector<512x128xf32>
    %c0_122 = arith.constant 0 : index
    %c0_123 = arith.constant 0 : index
    %410 = vector.load %arg14[%c0_122, %c0_123] : memref<512x128xf32, #tpu.memory_space<vmem>>, vector<512x128xf32>
    tpu.vector_store %arg14[%c0_122, %c0_123], %409 {strides = array<i32>} : memref<512x128xf32, #tpu.memory_space<vmem>>, vector<512x128xf32>,
    return
  }
  func.func @transform_0(%arg0: i32) -> (i32, i32) {
    %c0_i32 = arith.constant 0 : i32
    %c0_i32_0 = arith.constant 0 : i32
    return %arg0, %c0_i32 : i32, i32
  }
  func.func @transform_1(%arg0: i32) -> (i32, i32) {
    %c0_i32 = arith.constant 0 : i32
    %c0_i32_0 = arith.constant 0 : i32
    %c0_i32_1 = arith.constant 0 : i32
    return %c0_i32, %c0_i32_0 : i32, i32
  }
  func.func @transform_2(%arg0: i32) -> (i32, i32) {
    %c0_i32 = arith.constant 0 : i32
    %c0_i32_0 = arith.constant 0 : i32
    %c0_i32_1 = arith.constant 0 : i32
    return %c0_i32, %c0_i32_0 : i32, i32
  }
  func.func @transform_3(%arg0: i32) -> (i32, i32) {
    %c0_i32 = arith.constant 0 : i32
    %c0_i32_0 = arith.constant 0 : i32
    %c0_i32_1 = arith.constant 0 : i32
    return %c0_i32, %c0_i32_0 : i32, i32
  }
  func.func @transform_4(%arg0: i32) -> (i32, i32) {
    %c0_i32 = arith.constant 0 : i32
    %c0_i32_0 = arith.constant 0 : i32
    %c0_i32_1 = arith.constant 0 : i32
    return %c0_i32, %c0_i32_0 : i32, i32
  }
  func.func @transform_5(%arg0: i32) -> (i32, i32) {
    %c0_i32 = arith.constant 0 : i32
    %c0_i32_0 = arith.constant 0 : i32
    %c0_i32_1 = arith.constant 0 : i32
    return %c0_i32, %c0_i32_0 : i32, i32
  }
  func.func @transform_6(%arg0: i32) -> (i32, i32) {
    %c0_i32 = arith.constant 0 : i32
    %c0_i32_0 = arith.constant 0 : i32
    %c0_i32_1 = arith.constant 0 : i32
    return %c0_i32, %c0_i32_0 : i32, i32
  }
  func.func @transform_7(%arg0: i32) -> (i32, i32) {
    %c0_i32 = arith.constant 0 : i32
    %c0_i32_0 = arith.constant 0 : i32
    %c0_i32_1 = arith.constant 0 : i32
    return %c0_i32, %c0_i32_0 : i32, i32
  }
  func.func @transform_8(%arg0: i32) -> (i32, i32) {
    %c0_i32 = arith.constant 0 : i32
    %c0_i32_0 = arith.constant 0 : i32
    %c0_i32_1 = arith.constant 0 : i32
    return %c0_i32, %c0_i32_0 : i32, i32
  }
  func.func @transform_9(%arg0: i32) -> (i32, i32) {
    %c0_i32 = arith.constant 0 : i32
    %c0_i32_0 = arith.constant 0 : i32
    %c0_i32_1 = arith.constant 0 : i32
    return %c0_i32, %c0_i32_0 : i32, i32
  }
  func.func @transform_10(%arg0: i32) -> (i32, i32) {
    %c0_i32 = arith.constant 0 : i32
    %c0_i32_0 = arith.constant 0 : i32
    %c0_i32_1 = arith.constant 0 : i32
    return %c0_i32, %c0_i32_0 : i32, i32
  }
  func.func @transform_11(%arg0: i32) -> (i32, i32) {
    %c0_i32 = arith.constant 0 : i32
    %c0_i32_0 = arith.constant 0 : i32
    %c0_i32_1 = arith.constant 0 : i32
    return %c0_i32, %c0_i32_0 : i32, i32
  }
  func.func @transform_12(%arg0: i32) -> (i32, i32) {
    %c0_i32 = arith.constant 0 : i32
    %c0_i32_0 = arith.constant 0 : i32
    %c0_i32_1 = arith.constant 0 : i32
    return %c0_i32, %c0_i32_0 : i32, i32
  }
  func.func @transform_13(%arg0: i32) -> (i32, i32) {
    %c0_i32 = arith.constant 0 : i32
    %c0_i32_0 = arith.constant 0 : i32
    return %arg0, %c0_i32 : i32, i32
  }
}

</mosaic_0001>

<llo_original>
// kernel: bilstm_forward.1
$region0: #{bilstm_forward.1}
  #allocation0 [shape = 'u32[]', space=smem, size = 0x4, offset = 0x4, fixed_abs, tag = 'smem constant byte address 0x4 - core index']
  #allocation1 [shape = 'u32[144,128]{1,0:T(1,128)}', space=vmem, size = 0x12000, scoped, tag = 'internal scratch']
  #allocation2 [shape = 'f32[64,256]{1,0:T(8,128)}', space=vmem, size = 0x10000, scoped, tag = 'scratch operand']
  #allocation3 [shape = 'f32[64,32]{1,0:T(8,128)}', space=vmem, size = 0x8000, scoped, tag = 'scratch operand']
  #allocation4 [shape = 'f32[64,32]{1,0:T(8,128)}', space=vmem, size = 0x8000, scoped, tag = 'scratch operand']
  %s0 = inlined_call_operand.vmem [shape: bf16[128,640], index: 0, kind: input, shape index: {}]
  %s1 = inlined_call_operand.vmem [shape: bf16[640,256], index: 1, kind: input, shape index: {}]
  %s2 = inlined_call_operand.vmem [shape: bf16[64,256], index: 2, kind: input, shape index: {}]
  %s3 = inlined_call_operand.vmem [shape: f32[1,256], index: 3, kind: input, shape index: {}]
  %s4 = inlined_call_operand.vmem [shape: bf16[32,64], index: 4, kind: input, shape index: {}]
  %s5 = inlined_call_operand.vmem [shape: bf16[32,64], index: 5, kind: input, shape index: {}]
  %s6 = inlined_call_operand.vmem [shape: f32[1,32], index: 6, kind: input, shape index: {}]
  %s7 = inlined_call_operand.vmem [shape: bf16[32,32], index: 7, kind: input, shape index: {}]
  %s8 = inlined_call_operand.vmem [shape: f32[1,32], index: 8, kind: input, shape index: {}]
  %s9 = inlined_call_operand.vmem [shape: bf16[32,32], index: 9, kind: input, shape index: {}]
  %s10 = inlined_call_operand.vmem [shape: f32[1,32], index: 10, kind: input, shape index: {}]
  %s11 = inlined_call_operand.vmem [shape: bf16[32,128], index: 11, kind: input, shape index: {}]
  %s12 = inlined_call_operand.vmem [shape: f32[1,128], index: 12, kind: input, shape index: {}]
  %s13 = inlined_call_operand.vmem [shape: f32[1024,128], index: 13, kind: output, shape index: {}]
  %s14 = sld [smem:[#allocation0]]
  $region85: #{bilstm_forward.1} parent=0
    _
  %s16 = ssub.s32 1, %s14
  %s17 = scalar_select 0, %s16, %s14
  loop: start=0, step=1, limit=4
  $region2: #{bilstm_forward.1} parent=0 // loop_pre_header
    _
  $region3: #{bilstm_forward.1} parent=0 // loop_header
    %s19 = sphi 0, %s23
    %p20 = scmp.ge.s32.totalorder %s19, 4
    %s29 = sphi 0, %s31
    %s32 = sphi 0, %s29
    %s33 = sphi 0, %s32
    %s49 = sphi 0, %s33
    %s53 = sphi 0, %s53
    %s55 = sphi 0, %s53
    %s56 = sphi 0, %s55
    %s70 = sphi 0, %s56
    %s74 = sphi 0, %s74
    %s76 = sphi 0, %s74
    %s77 = sphi 0, %s76
    %s91 = sphi 0, %s77
    %s95 = sphi 0, %s95
    %s97 = sphi 0, %s95
    %s98 = sphi 0, %s97
    %s112 = sphi 0, %s98
    %s116 = sphi 0, %s116
    %s118 = sphi 0, %s116
    %s119 = sphi 0, %s118
    %s133 = sphi 0, %s119
    %s137 = sphi 0, %s137
    %s139 = sphi 0, %s137
    %s140 = sphi 0, %s139
    %s154 = sphi 0, %s140
    %s158 = sphi 0, %s158
    %s160 = sphi 0, %s158
    %s161 = sphi 0, %s160
    %s175 = sphi 0, %s161
    %s179 = sphi 0, %s179
    %s181 = sphi 0, %s179
    %s182 = sphi 0, %s181
    %s196 = sphi 0, %s182
    %s200 = sphi 0, %s200
    %s202 = sphi 0, %s200
    %s203 = sphi 0, %s202
    %s217 = sphi 0, %s203
    %s221 = sphi 0, %s221
    %s223 = sphi 0, %s221
    %s224 = sphi 0, %s223
    %s238 = sphi 0, %s224
    %s242 = sphi 0, %s242
    %s244 = sphi 0, %s242
    %s245 = sphi 0, %s244
    %s259 = sphi 0, %s245
    %s263 = sphi 0, %s263
    %s265 = sphi 0, %s263
    %s266 = sphi 0, %s265
    %s280 = sphi 0, %s266
    %s284 = sphi 0, %s284
    %s286 = sphi 0, %s284
    %s287 = sphi 0, %s286
    %s301 = sphi 0, %s287
    %s307 = sphi 0, %s309
    %s310 = sphi 0, %s307
    %s311 = sphi 0, %s310
    %s327 = sphi 0, %s311
  $region4: #{bilstm_forward.1} parent=0 // loop_header_branch
    %22 = sbr.rel (%p20) target = $region8
  $region5: #{bilstm_forward.1} parent=0 // loop_body
    %s24 = ssub.s32 %s19, 1
    %s25 = ssub.s32 %s19, 2
    %s26 = sadd.s32 %s19, 1
    %s27 = ssub.s32 %s19, %s26
    %p28 = scmp.eq.s32.totalorder %s27, 0
    %s30 = sadd.s32 %s29, 1
    %s31 = scalar_select %p28, %s29, %s30
    %p34 = pneg %p28
    %p35 = scmp.eq.s32.totalorder %s19, 1
    %p36 = por %p34, %p35
    %p37 = scmp.ne.s32.totalorder %s29, %s32
    %p38 = scmp.eq.s32.totalorder %s19, 0
    %p39 = por %p37, %p38
    %p40 = scmp.ne.s32.totalorder %s29, %s32
    %p41 = scmp.eq.s32.totalorder %s24, 1
    %p42 = por %p40, %p41
    %p43 = scmp.ne.s32.totalorder %s32, %s33
    %p44 = scmp.eq.s32.totalorder %s24, 0
    %p45 = por %p43, %p44
    %p46 = scmp.ne.s32.totalorder %s32, %s33
    %p47 = scmp.eq.s32.totalorder %s25, 1
    %p48 = por %p46, %p47
    %p50 = scmp.ne.s32.totalorder %s33, %s49
    %p51 = scmp.eq.s32.totalorder %s25, 0
    %p52 = por %p50, %p51
    %s54 = sadd.s32 %s53, 1
    %p57 = scmp.eq.s32.totalorder %s19, 1
    %p58 = scmp.ne.s32.totalorder %s53, %s55
    %p59 = scmp.eq.s32.totalorder %s19, 0
    %p60 = por %p58, %p59
    %p61 = scmp.ne.s32.totalorder %s53, %s55
    %p62 = scmp.eq.s32.totalorder %s24, 1
    %p63 = por %p61, %p62
    %p64 = scmp.ne.s32.totalorder %s55, %s56
    %p65 = scmp.eq.s32.totalorder %s24, 0
    %p66 = por %p64, %p65
    %p67 = scmp.ne.s32.totalorder %s55, %s56
    %p68 = scmp.eq.s32.totalorder %s25, 1
    %p69 = por %p67, %p68
    %p71 = scmp.ne.s32.totalorder %s56, %s70
    %p72 = scmp.eq.s32.totalorder %s25, 0
    %p73 = por %p71, %p72
    %s75 = sadd.s32 %s74, 1
    %p78 = scmp.eq.s32.totalorder %s19, 1
    %p79 = scmp.ne.s32.totalorder %s74, %s76
    %p80 = scmp.eq.s32.totalorder %s19, 0
    %p81 = por %p79, %p80
    %p82 = scmp.ne.s32.totalorder %s74, %s76
    %p83 = scmp.eq.s32.totalorder %s24, 1
    %p84 = por %p82, %p83
    %p85 = scmp.ne.s32.totalorder %s76, %s77
    %p86 = scmp.eq.s32.totalorder %s24, 0
    %p87 = por %p85, %p86
    %p88 = scmp.ne.s32.totalorder %s76, %s77
    %p89 = scmp.eq.s32.totalorder %s25, 1
    %p90 = por %p88, %p89
    %p92 = scmp.ne.s32.totalorder %s77, %s91
    %p93 = scmp.eq.s32.totalorder %s25, 0
    %p94 = por %p92, %p93
    %s96 = sadd.s32 %s95, 1
    %p99 = scmp.eq.s32.totalorder %s19, 1
    %p100 = scmp.ne.s32.totalorder %s95, %s97
    %p101 = scmp.eq.s32.totalorder %s19, 0
    %p102 = por %p100, %p101
    %p103 = scmp.ne.s32.totalorder %s95, %s97
    %p104 = scmp.eq.s32.totalorder %s24, 1
    %p105 = por %p103, %p104
    %p106 = scmp.ne.s32.totalorder %s97, %s98
    %p107 = scmp.eq.s32.totalorder %s24, 0
    %p108 = por %p106, %p107
    %p109 = scmp.ne.s32.totalorder %s97, %s98
    %p110 = scmp.eq.s32.totalorder %s25, 1
    %p111 = por %p109, %p110
    %p113 = scmp.ne.s32.totalorder %s98, %s112
    %p114 = scmp.eq.s32.totalorder %s25, 0
    %p115 = por %p113, %p114
    %s117 = sadd.s32 %s116, 1
    %p120 = scmp.eq.s32.totalorder %s19, 1
    %p121 = scmp.ne.s32.totalorder %s116, %s118
    %p122 = scmp.eq.s32.totalorder %s19, 0
    %p123 = por %p121, %p122
    %p124 = scmp.ne.s32.totalorder %s116, %s118
    %p125 = scmp.eq.s32.totalorder %s24, 1
    %p126 = por %p124, %p125
    %p127 = scmp.ne.s32.totalorder %s118, %s119
    %p128 = scmp.eq.s32.totalorder %s24, 0
    %p129 = por %p127, %p128
    %p130 = scmp.ne.s32.totalorder %s118, %s119
    %p131 = scmp.eq.s32.totalorder %s25, 1
    %p132 = por %p130, %p131
    %p134 = scmp.ne.s32.totalorder %s119, %s133
    %p135 = scmp.eq.s32.totalorder %s25, 0
    %p136 = por %p134, %p135
    %s138 = sadd.s32 %s137, 1
    %p141 = scmp.eq.s32.totalorder %s19, 1
    %p142 = scmp.ne.s32.totalorder %s137, %s139
    %p143 = scmp.eq.s32.totalorder %s19, 0
    %p144 = por %p142, %p143
    %p145 = scmp.ne.s32.totalorder %s137, %s139
    %p146 = scmp.eq.s32.totalorder %s24, 1
    %p147 = por %p145, %p146
    %p148 = scmp.ne.s32.totalorder %s139, %s140
    %p149 = scmp.eq.s32.totalorder %s24, 0
    %p150 = por %p148, %p149
    %p151 = scmp.ne.s32.totalorder %s139, %s140
    %p152 = scmp.eq.s32.totalorder %s25, 1
    %p153 = por %p151, %p152
    %p155 = scmp.ne.s32.totalorder %s140, %s154
    %p156 = scmp.eq.s32.totalorder %s25, 0
    %p157 = por %p155, %p156
    %s159 = sadd.s32 %s158, 1
    %p162 = scmp.eq.s32.totalorder %s19, 1
    %p163 = scmp.ne.s32.totalorder %s158, %s160
    %p164 = scmp.eq.s32.totalorder %s19, 0
    %p165 = por %p163, %p164
    %p166 = scmp.ne.s32.totalorder %s158, %s160
    %p167 = scmp.eq.s32.totalorder %s24, 1
    %p168 = por %p166, %p167
    %p169 = scmp.ne.s32.totalorder %s160, %s161
    %p170 = scmp.eq.s32.totalorder %s24, 0
    %p171 = por %p169, %p170
    %p172 = scmp.ne.s32.totalorder %s160, %s161
    %p173 = scmp.eq.s32.totalorder %s25, 1
    %p174 = por %p172, %p173
    %p176 = scmp.ne.s32.totalorder %s161, %s175
    %p177 = scmp.eq.s32.totalorder %s25, 0
    %p178 = por %p176, %p177
    %s180 = sadd.s32 %s179, 1
    %p183 = scmp.eq.s32.totalorder %s19, 1
    %p184 = scmp.ne.s32.totalorder %s179, %s181
    %p185 = scmp.eq.s32.totalorder %s19, 0
    %p186 = por %p184, %p185
    %p187 = scmp.ne.s32.totalorder %s179, %s181
    %p188 = scmp.eq.s32.totalorder %s24, 1
    %p189 = por %p187, %p188
    %p190 = scmp.ne.s32.totalorder %s181, %s182
    %p191 = scmp.eq.s32.totalorder %s24, 0
    %p192 = por %p190, %p191
    %p193 = scmp.ne.s32.totalorder %s181, %s182
    %p194 = scmp.eq.s32.totalorder %s25, 1
    %p195 = por %p193, %p194
    %p197 = scmp.ne.s32.totalorder %s182, %s196
    %p198 = scmp.eq.s32.totalorder %s25, 0
    %p199 = por %p197, %p198
    %s201 = sadd.s32 %s200, 1
    %p204 = scmp.eq.s32.totalorder %s19, 1
    %p205 = scmp.ne.s32.totalorder %s200, %s202
    %p206 = scmp.eq.s32.totalorder %s19, 0
    %p207 = por %p205, %p206
    %p208 = scmp.ne.s32.totalorder %s200, %s202
    %p209 = scmp.eq.s32.totalorder %s24, 1
    %p210 = por %p208, %p209
    %p211 = scmp.ne.s32.totalorder %s202, %s203
    %p212 = scmp.eq.s32.totalorder %s24, 0
    %p213 = por %p211, %p212
    %p214 = scmp.ne.s32.totalorder %s202, %s203
    %p215 = scmp.eq.s32.totalorder %s25, 1
    %p216 = por %p214, %p215
    %p218 = scmp.ne.s32.totalorder %s203, %s217
    %p219 = scmp.eq.s32.totalorder %s25, 0
    %p220 = por %p218, %p219
    %s222 = sadd.s32 %s221, 1
    %p225 = scmp.eq.s32.totalorder %s19, 1
    %p226 = scmp.ne.s32.totalorder %s221, %s223
    %p227 = scmp.eq.s32.totalorder %s19, 0
    %p228 = por %p226, %p227
    %p229 = scmp.ne.s32.totalorder %s221, %s223
    %p230 = scmp.eq.s32.totalorder %s24, 1
    %p231 = por %p229, %p230
    %p232 = scmp.ne.s32.totalorder %s223, %s224
    %p233 = scmp.eq.s32.totalorder %s24, 0
    %p234 = por %p232, %p233
    %p235 = scmp.ne.s32.totalorder %s223, %s224
    %p236 = scmp.eq.s32.totalorder %s25, 1
    %p237 = por %p235, %p236
    %p239 = scmp.ne.s32.totalorder %s224, %s238
    %p240 = scmp.eq.s32.totalorder %s25, 0
    %p241 = por %p239, %p240
    %s243 = sadd.s32 %s242, 1
    %p246 = scmp.eq.s32.totalorder %s19, 1
    %p247 = scmp.ne.s32.totalorder %s242, %s244
    %p248 = scmp.eq.s32.totalorder %s19, 0
    %p249 = por %p247, %p248
    %p250 = scmp.ne.s32.totalorder %s242, %s244
    %p251 = scmp.eq.s32.totalorder %s24, 1
    %p252 = por %p250, %p251
    %p253 = scmp.ne.s32.totalorder %s244, %s245
    %p254 = scmp.eq.s32.totalorder %s24, 0
    %p255 = por %p253, %p254
    %p256 = scmp.ne.s32.totalorder %s244, %s245
    %p257 = scmp.eq.s32.totalorder %s25, 1
    %p258 = por %p256, %p257
    %p260 = scmp.ne.s32.totalorder %s245, %s259
    %p261 = scmp.eq.s32.totalorder %s25, 0
    %p262 = por %p260, %p261
    %s264 = sadd.s32 %s263, 1
    %p267 = scmp.eq.s32.totalorder %s19, 1
    %p268 = scmp.ne.s32.totalorder %s263, %s265
    %p269 = scmp.eq.s32.totalorder %s19, 0
    %p270 = por %p268, %p269
    %p271 = scmp.ne.s32.totalorder %s263, %s265
    %p272 = scmp.eq.s32.totalorder %s24, 1
    %p273 = por %p271, %p272
    %p274 = scmp.ne.s32.totalorder %s265, %s266
    %p275 = scmp.eq.s32.totalorder %s24, 0
    %p276 = por %p274, %p275
    %p277 = scmp.ne.s32.totalorder %s265, %s266
    %p278 = scmp.eq.s32.totalorder %s25, 1
    %p279 = por %p277, %p278
    %p281 = scmp.ne.s32.totalorder %s266, %s280
    %p282 = scmp.eq.s32.totalorder %s25, 0
    %p283 = por %p281, %p282
    %s285 = sadd.s32 %s284, 1
    %p288 = scmp.eq.s32.totalorder %s19, 1
    %p289 = scmp.ne.s32.totalorder %s284, %s286
    %p290 = scmp.eq.s32.totalorder %s19, 0
    %p291 = por %p289, %p290
    %p292 = scmp.ne.s32.totalorder %s284, %s286
    %p293 = scmp.eq.s32.totalorder %s24, 1
    %p294 = por %p292, %p293
    %p295 = scmp.ne.s32.totalorder %s286, %s287
    %p296 = scmp.eq.s32.totalorder %s24, 0
    %p297 = por %p295, %p296
    %p298 = scmp.ne.s32.totalorder %s286, %s287
    %p299 = scmp.eq.s32.totalorder %s25, 1
    %p300 = por %p298, %p299
    %p302 = scmp.ne.s32.totalorder %s287, %s301
    %p303 = scmp.eq.s32.totalorder %s25, 0
    %p304 = por %p302, %p303
    %s305 = ssub.s32 %s19, %s26
    %p306 = scmp.eq.s32.totalorder %s305, 0
    %s308 = sadd.s32 %s307, 1
    %s309 = scalar_select %p306, %s307, %s308
    %p312 = pneg %p306
    %p313 = scmp.eq.s32.totalorder %s19, 1
    %p314 = por %p312, %p313
    %p315 = scmp.ne.s32.totalorder %s307, %s310
    %p316 = scmp.eq.s32.totalorder %s19, 0
    %p317 = por %p315, %p316
    %p318 = scmp.ne.s32.totalorder %s307, %s310
    %p319 = scmp.eq.s32.totalorder %s24, 1
    %p320 = por %p318, %p319
    %p321 = scmp.ne.s32.totalorder %s310, %s311
    %p322 = scmp.eq.s32.totalorder %s24, 0
    %p323 = por %p321, %p322
    %p324 = scmp.ne.s32.totalorder %s310, %s311
    %p325 = scmp.eq.s32.totalorder %s25, 1
    %p326 = por %p324, %p325
    %p328 = scmp.ne.s32.totalorder %s311, %s327
    %p329 = scmp.eq.s32.totalorder %s25, 0
    %p330 = por %p328, %p329
    %p331 = scmp.le.s32.totalorder 1, %s19
    %p332 = scmp.lt.s32.totalorder %s19, 3
    %p333 = pnand %p331, %p332
    %p334 = pneg %p333
    // Predicated region
    $region9: #{bilstm_forward.1} parent=5 // pred_check
      _
    $region10: #{bilstm_forward.1} parent=5 // pred_check_branch
      %336 = sbr.rel (%p333) target = $region12
    $region11: #{bilstm_forward.1} parent=5 // pred_region
      %s337 = ssub.s32 %s19, 1
      // Predicated region
      $region13: #{bilstm_forward.1} parent=11 // pred_check
        %p338 = pneg %p66
      $region14: #{bilstm_forward.1} parent=11 // pred_check_branch
        %340 = sbr.rel (%p338) target = $region16
      $region15: #{bilstm_forward.1} parent=11 // pred_region
        _
      $region16: #{bilstm_forward.1} parent=11 // pred_fallthru
        _
      // Predicated region
      $region17: #{bilstm_forward.1} parent=11 // pred_check
        %p341 = pneg %p87
      $region18: #{bilstm_forward.1} parent=11 // pred_check_branch
        %343 = sbr.rel (%p341) target = $region20
      $region19: #{bilstm_forward.1} parent=11 // pred_region
        _
      $region20: #{bilstm_forward.1} parent=11 // pred_fallthru
        _
      // Predicated region
      $region21: #{bilstm_forward.1} parent=11 // pred_check
        %p344 = pneg %p108
      $region22: #{bilstm_forward.1} parent=11 // pred_check_branch
        %346 = sbr.rel (%p344) target = $region24
      $region23: #{bilstm_forward.1} parent=11 // pred_region
        _
      $region24: #{bilstm_forward.1} parent=11 // pred_fallthru
        _
      // Predicated region
      $region25: #{bilstm_forward.1} parent=11 // pred_check
        %p347 = pneg %p129
      $region26: #{bilstm_forward.1} parent=11 // pred_check_branch
        %349 = sbr.rel (%p347) target = $region28
      $region27: #{bilstm_forward.1} parent=11 // pred_region
        _
      $region28: #{bilstm_forward.1} parent=11 // pred_fallthru
        _
      // Predicated region
      $region29: #{bilstm_forward.1} parent=11 // pred_check
        %p350 = pneg %p150
      $region30: #{bilstm_forward.1} parent=11 // pred_check_branch
        %352 = sbr.rel (%p350) target = $region32
      $region31: #{bilstm_forward.1} parent=11 // pred_region
        _
      $region32: #{bilstm_forward.1} parent=11 // pred_fallthru
        _
      // Predicated region
      $region33: #{bilstm_forward.1} parent=11 // pred_check
        %p353 = pneg %p171
      $region34: #{bilstm_forward.1} parent=11 // pred_check_branch
        %355 = sbr.rel (%p353) target = $region36
      $region35: #{bilstm_forward.1} parent=11 // pred_region
        _
      $region36: #{bilstm_forward.1} parent=11 // pred_fallthru
        _
      // Predicated region
      $region37: #{bilstm_forward.1} parent=11 // pred_check
        %p356 = pneg %p192
      $region38: #{bilstm_forward.1} parent=11 // pred_check_branch
        %358 = sbr.rel (%p356) target = $region40
      $region39: #{bilstm_forward.1} parent=11 // pred_region
        _
      $region40: #{bilstm_forward.1} parent=11 // pred_fallthru
        _
      // Predicated region
      $region41: #{bilstm_forward.1} parent=11 // pred_check
        %p359 = pneg %p213
      $region42: #{bilstm_forward.1} parent=11 // pred_check_branch
        %361 = sbr.rel (%p359) target = $region44
      $region43: #{bilstm_forward.1} parent=11 // pred_region
        _
      $region44: #{bilstm_forward.1} parent=11 // pred_fallthru
        _
      // Predicated region
      $region45: #{bilstm_forward.1} parent=11 // pred_check
        %p362 = pneg %p234
      $region46: #{bilstm_forward.1} parent=11 // pred_check_branch
        %364 = sbr.rel (%p362) target = $region48
      $region47: #{bilstm_forward.1} parent=11 // pred_region
        _
      $region48: #{bilstm_forward.1} parent=11 // pred_fallthru
        _
      // Predicated region
      $region49: #{bilstm_forward.1} parent=11 // pred_check
        %p365 = pneg %p255
      $region50: #{bilstm_forward.1} parent=11 // pred_check_branch
        %367 = sbr.rel (%p365) target = $region52
      $region51: #{bilstm_forward.1} parent=11 // pred_region
        _
      $region52: #{bilstm_forward.1} parent=11 // pred_fallthru
        _
      // Predicated region
      $region53: #{bilstm_forward.1} parent=11 // pred_check
        %p368 = pneg %p276
      $region54: #{bilstm_forward.1} parent=11 // pred_check_branch
        %370 = sbr.rel (%p368) target = $region56
      $region55: #{bilstm_forward.1} parent=11 // pred_region
        _
      $region56: #{bilstm_forward.1} parent=11 // pred_fallthru
        _
      // Predicated region
      $region57: #{bilstm_forward.1} parent=11 // pred_check
        %p371 = pneg %p297
      $region58: #{bilstm_forward.1} parent=11 // pred_check_branch
        %373 = sbr.rel (%p371) target = $region60
      $region59: #{bilstm_forward.1} parent=11 // pred_region
        _
      $region60: #{bilstm_forward.1} parent=11 // pred_fallthru
        _
    $region12: #{bilstm_forward.1} parent=5 // pred_fallthru
      _
    %p374 = scmp.lt.s32.totalorder %s19, 2
    // Predicated region
    $region61: #{bilstm_forward.1} parent=5 // pred_check
      %p375 = pneg %p374
    $region62: #{bilstm_forward.1} parent=5 // pred_check_branch
      %377 = sbr.rel (%p375) target = $region64
    $region63: #{bilstm_forward.1} parent=5 // pred_region
      // Predicated region
      $region65: #{bilstm_forward.1} parent=63 // pred_check
        %p378 = pneg %p39
      $region66: #{bilstm_forward.1} parent=63 // pred_check_branch
        %380 = sbr.rel (%p378) target = $region68
      $region67: #{bilstm_forward.1} parent=63 // pred_region
        %s381 = smul.u32 8, %s19
        %p382 = scmp.lt.s32.totalorder %s381, 15
        %s383 = scalar_select %p382, %s381, 15
        %s384 = smul.addr %s383, 5
        %s385 = smul.addr %s384, 4
        %s386 = scalar_lea.vmem %s0, %s385
        %s387 = smul.u32 8, %s19
      $region68: #{bilstm_forward.1} parent=63 // pred_fallthru
        _
    $region64: #{bilstm_forward.1} parent=5 // pred_fallthru
      _
    %p388 = scmp.le.s32.totalorder 1, %s19
    %p389 = scmp.lt.s32.totalorder %s19, 3
    %p390 = pnand %p388, %p389
    %p391 = pneg %p390
    // Predicated region
    $region69: #{bilstm_forward.1} parent=5 // pred_check
      _
    $region70: #{bilstm_forward.1} parent=5 // pred_check_branch
      %393 = sbr.rel (%p390) target = $region72
    $region71: #{bilstm_forward.1} parent=5 // pred_region
      %s394 = ssub.s32 %s19, 1
      %s395 = smul.u32 8, %s24
      %p396 = scmp.lt.s32.totalorder %s395, 15
      %s397 = scalar_select %p396, %s395, 15
      %s398 = smul.addr %s397, 5
      %s399 = smul.addr %s398, 4
      %s400 = scalar_lea.vmem %s0, %s399
      %p401 = pneg %p45
      %p402 = pneg %p42
      %p403 = pneg %p66
      %p404 = pneg %p63
      %p405 = pneg %p87
      %p406 = pneg %p84
      %p407 = pneg %p108
      %p408 = pneg %p105
      %p409 = pneg %p129
      %p410 = pneg %p126
      %p411 = pneg %p150
      %p412 = pneg %p147
      %p413 = pneg %p171
      %p414 = pneg %p168
      %p415 = pneg %p192
      %p416 = pneg %p189
      %p417 = pneg %p213
      %p418 = pneg %p210
      %p419 = pneg %p234
      %p420 = pneg %p231
      %p421 = pneg %p255
      %p422 = pneg %p252
      %p423 = pneg %p276
      %p424 = pneg %p273
      %p425 = pneg %p297
      %p426 = pneg %p294
      %p427 = pneg %p323
      %p428 = pneg %p320
      %s429 = smul.u32 64, %s24
      %p430 = scmp.lt.s32.totalorder %s429, 127
      %s431 = scalar_select %p430, %s429, 127
      %s432 = smul.addr %s431, 8
      %s433 = scalar_lea.vmem %s13, %s432
      %s434 = smul.u32 8, %s24
      %p435 = scmp.lt.s32.totalorder %s434, 15
      %s436 = scalar_select %p435, %s434, 15
      %s437 = smul.addr %s436, 5
      %s438 = smul.addr %s437, 4
      %s439 = scalar_lea.vmem %s0, %s438
      %s440 = smul.u32 8, %s24
      %s441 = smul.u32 64, %s24
      %p442 = scmp.lt.s32.totalorder %s441, 127
      %s443 = scalar_select %p442, %s441, 127
      %s444 = smul.addr %s443, 8
      %s445 = scalar_lea.vmem %s13, %s444
      %s446 = smul.u32 64, %s24
      %v448 = vld [vmem:[%s439] sm:$0xff]
      %v449 = vld [vmem:[%s439 + $0x8] sm:$0xff]
      %v450 = vld [vmem:[%s439 + $0x10] sm:$0xf]
      %v451 = vld [vmem:[%s439 + $0x14] sm:$0xff]
      %v452 = vld [vmem:[%s439 + $0x1c] sm:$0xff]
      %v453 = vld [vmem:[%s439 + $0x24] sm:$0xf]
      %v454 = vld [vmem:[%s439 + $0x28] sm:$0xff]
      %v455 = vld [vmem:[%s439 + $0x30] sm:$0xff]
      %v456 = vld [vmem:[%s439 + $0x38] sm:$0xf]
      %v457 = vld [vmem:[%s439 + $0x3c] sm:$0xff]
      %v458 = vld [vmem:[%s439 + $0x44] sm:$0xff]
      %v459 = vld [vmem:[%s439 + $0x4c] sm:$0xf]
      %v460 = vld [vmem:[%s439 + $0x50] sm:$0xff]
      %v461 = vld [vmem:[%s439 + $0x58] sm:$0xff]
      %v462 = vld [vmem:[%s439 + $0x60] sm:$0xf]
      %v463 = vld [vmem:[%s439 + $0x64] sm:$0xff]
      %v464 = vld [vmem:[%s439 + $0x6c] sm:$0xff]
      %v465 = vld [vmem:[%s439 + $0x74] sm:$0xf]
      %v466 = vld [vmem:[%s439 + $0x78] sm:$0xff]
      %v467 = vld [vmem:[%s439 + $0x80] sm:$0xff]
      %v468 = vld [vmem:[%s439 + $0x88] sm:$0xf]
      %v469 = vld [vmem:[%s439 + $0x8c] sm:$0xff]
      %v470 = vld [vmem:[%s439 + $0x94] sm:$0xff]
      %v471 = vld [vmem:[%s439 + $0x9c] sm:$0xf]
      %v472 = vld [vmem:[%s1] sm:$0xff]
      %v473 = vld [vmem:[%s1 + $0x8] sm:$0xff]
      %v474 = vld [vmem:[%s1 + $0x10] sm:$0xff]
      %v475 = vld [vmem:[%s1 + $0x18] sm:$0xff]
      %v476 = vld [vmem:[%s1 + $0x20] sm:$0xff]
      %v477 = vld [vmem:[%s1 + $0x28] sm:$0xff]
      %v478 = vld [vmem:[%s1 + $0x30] sm:$0xff]
      %v479 = vld [vmem:[%s1 + $0x38] sm:$0xff]
      %v480 = vld [vmem:[%s1 + $0x40] sm:$0xff]
      %v481 = vld [vmem:[%s1 + $0x48] sm:$0xff]
      %v482 = vld [vmem:[%s1 + $0x50] sm:$0xff]
      %v483 = vld [vmem:[%s1 + $0x58] sm:$0xff]
      %v484 = vld [vmem:[%s1 + $0x60] sm:$0xff]
      %v485 = vld [vmem:[%s1 + $0x68] sm:$0xff]
      %v486 = vld [vmem:[%s1 + $0x70] sm:$0xff]
      %v487 = vld [vmem:[%s1 + $0x78] sm:$0xff]
      %v488 = vld [vmem:[%s1 + $0x80] sm:$0xff]
      %v489 = vld [vmem:[%s1 + $0x88] sm:$0xff]
      %v490 = vld [vmem:[%s1 + $0x90] sm:$0xff]
      %v491 = vld [vmem:[%s1 + $0x98] sm:$0xff]
      %v492 = vld [vmem:[%s1 + $0xa0] sm:$0xff]
      %v493 = vld [vmem:[%s1 + $0xa8] sm:$0xff]
      %v494 = vld [vmem:[%s1 + $0xb0] sm:$0xff]
      %v495 = vld [vmem:[%s1 + $0xb8] sm:$0xff]
      %v496 = vld [vmem:[%s1 + $0xc0] sm:$0xff]
      %v497 = vld [vmem:[%s1 + $0xc8] sm:$0xff]
      %v498 = vld [vmem:[%s1 + $0xd0] sm:$0xff]
      %v499 = vld [vmem:[%s1 + $0xd8] sm:$0xff]
      %v500 = vld [vmem:[%s1 + $0xe0] sm:$0xff]
      %v501 = vld [vmem:[%s1 + $0xe8] sm:$0xff]
      %v502 = vld [vmem:[%s1 + $0xf0] sm:$0xff]
      %v503 = vld [vmem:[%s1 + $0xf8] sm:$0xff]
      %v504 = vld [vmem:[%s1 + $0x100] sm:$0xff]
      %v505 = vld [vmem:[%s1 + $0x108] sm:$0xff]
      %v506 = vld [vmem:[%s1 + $0x110] sm:$0xff]
      %v507 = vld [vmem:[%s1 + $0x118] sm:$0xff]
      %v508 = vld [vmem:[%s1 + $0x120] sm:$0xff]
      %v509 = vld [vmem:[%s1 + $0x128] sm:$0xff]
      %v510 = vld [vmem:[%s1 + $0x130] sm:$0xff]
      %v511 = vld [vmem:[%s1 + $0x138] sm:$0xff]
      %v512 = vld [vmem:[%s1 + $0x140] sm:$0xff]
      %v513 = vld [vmem:[%s1 + $0x148] sm:$0xff]
      %v514 = vld [vmem:[%s1 + $0x150] sm:$0xff]
      %v515 = vld [vmem:[%s1 + $0x158] sm:$0xff]
      %v516 = vld [vmem:[%s1 + $0x160] sm:$0xff]
      %v517 = vld [vmem:[%s1 + $0x168] sm:$0xff]
      %v518 = vld [vmem:[%s1 + $0x170] sm:$0xff]
      %v519 = vld [vmem:[%s1 + $0x178] sm:$0xff]
      %v520 = vld [vmem:[%s1 + $0x180] sm:$0xff]
      %v521 = vld [vmem:[%s1 + $0x188] sm:$0xff]
      %v522 = vld [vmem:[%s1 + $0x190] sm:$0xff]
      %v523 = vld [vmem:[%s1 + $0x198] sm:$0xff]
      %v524 = vld [vmem:[%s1 + $0x1a0] sm:$0xff]
      %v525 = vld [vmem:[%s1 + $0x1a8] sm:$0xff]
      %v526 = vld [vmem:[%s1 + $0x1b0] sm:$0xff]
      %v527 = vld [vmem:[%s1 + $0x1b8] sm:$0xff]
      %v528 = vld [vmem:[%s1 + $0x1c0] sm:$0xff]
      %v529 = vld [vmem:[%s1 + $0x1c8] sm:$0xff]
      %v530 = vld [vmem:[%s1 + $0x1d0] sm:$0xff]
      %v531 = vld [vmem:[%s1 + $0x1d8] sm:$0xff]
      %v532 = vld [vmem:[%s1 + $0x1e0] sm:$0xff]
      %v533 = vld [vmem:[%s1 + $0x1e8] sm:$0xff]
      %v534 = vld [vmem:[%s1 + $0x1f0] sm:$0xff]
      %v535 = vld [vmem:[%s1 + $0x1f8] sm:$0xff]
      %v536 = vld [vmem:[%s1 + $0x200] sm:$0xff]
      %v537 = vld [vmem:[%s1 + $0x208] sm:$0xff]
      %v538 = vld [vmem:[%s1 + $0x210] sm:$0xff]
      %v539 = vld [vmem:[%s1 + $0x218] sm:$0xff]
      %v540 = vld [vmem:[%s1 + $0x220] sm:$0xff]
      %v541 = vld [vmem:[%s1 + $0x228] sm:$0xff]
      %v542 = vld [vmem:[%s1 + $0x230] sm:$0xff]
      %v543 = vld [vmem:[%s1 + $0x238] sm:$0xff]
      %v544 = vld [vmem:[%s1 + $0x240] sm:$0xff]
      %v545 = vld [vmem:[%s1 + $0x248] sm:$0xff]
      %v546 = vld [vmem:[%s1 + $0x250] sm:$0xff]
      %v547 = vld [vmem:[%s1 + $0x258] sm:$0xff]
      %v548 = vld [vmem:[%s1 + $0x260] sm:$0xff]
      %v549 = vld [vmem:[%s1 + $0x268] sm:$0xff]
      %v550 = vld [vmem:[%s1 + $0x270] sm:$0xff]
      %v551 = vld [vmem:[%s1 + $0x278] sm:$0xff]
      %v552 = vld [vmem:[%s3] sm:$0x3]
      %v554 = vlaneseq
      %v555 = vshrl.u32 %v554, 7
      %v556 = vsub.s32 0, %v555
      %v557 = vrot.slane %v552, %v556
      %v558 = vlaneseq
      %v559 = vshrl.u32 %v558, 7
      %v560 = vsub.s32 1, %v559
      %v561 = vrot.slane %v552, %v560
      %v588 = vunpack.c.l.b16 %v448
      %v589 = vunpack.c.h.b16 %v448
      %v590 = vunpack.c.l.b16 %v449
      %v591 = vunpack.c.h.b16 %v449
      %v592 = vunpack.c.l.b16 %v450
      %v593 = vunpack.c.l.b16 %v451
      %v594 = vunpack.c.h.b16 %v451
      %v595 = vunpack.c.l.b16 %v452
      %v596 = vunpack.c.h.b16 %v452
      %v597 = vunpack.c.l.b16 %v453
      %v598 = vunpack.c.l.b16 %v454
      %v599 = vunpack.c.h.b16 %v454
      %v600 = vunpack.c.l.b16 %v455
      %v601 = vunpack.c.h.b16 %v455
      %v602 = vunpack.c.l.b16 %v456
      %v603 = vunpack.c.l.b16 %v457
      %v604 = vunpack.c.h.b16 %v457
      %v605 = vunpack.c.l.b16 %v458
      %v606 = vunpack.c.h.b16 %v458
      %v607 = vunpack.c.l.b16 %v459
      %v608 = vunpack.c.l.b16 %v460
      %v609 = vunpack.c.h.b16 %v460
      %v610 = vunpack.c.l.b16 %v461
      %v611 = vunpack.c.h.b16 %v461
      %v612 = vunpack.c.l.b16 %v462
      %v613 = vunpack.c.l.b16 %v463
      %v614 = vunpack.c.h.b16 %v463
      %v615 = vunpack.c.l.b16 %v464
      %v616 = vunpack.c.h.b16 %v464
      %v617 = vunpack.c.l.b16 %v465
      %v618 = vunpack.c.l.b16 %v466
      %v619 = vunpack.c.h.b16 %v466
      %v620 = vunpack.c.l.b16 %v467
      %v621 = vunpack.c.h.b16 %v467
      %v622 = vunpack.c.l.b16 %v468
      %v623 = vunpack.c.l.b16 %v469
      %v624 = vunpack.c.h.b16 %v469
      %v625 = vunpack.c.l.b16 %v470
      %v626 = vunpack.c.h.b16 %v470
      %v627 = vunpack.c.l.b16 %v471
      %v628 = vpack.c.b16 %v593, %v588
      %v629 = vpack.c.b16 %v594, %v589
      %v630 = vpack.c.b16 %v595, %v590
      %v631 = vpack.c.b16 %v596, %v591
      %v632 = vpack.c.b16 %v597, %v592
      %v633 = vpack.c.b16 %v603, %v598
      %v634 = vpack.c.b16 %v604, %v599
      %v635 = vpack.c.b16 %v605, %v600
      %v636 = vpack.c.b16 %v606, %v601
      %v637 = vpack.c.b16 %v607, %v602
      %v638 = vpack.c.b16 %v613, %v608
      %v639 = vpack.c.b16 %v614, %v609
      %v640 = vpack.c.b16 %v615, %v610
      %v641 = vpack.c.b16 %v616, %v611
      %v642 = vpack.c.b16 %v617, %v612
      %v643 = vpack.c.b16 %v623, %v618
      %v644 = vpack.c.b16 %v624, %v619
      %v645 = vpack.c.b16 %v625, %v620
      %v646 = vpack.c.b16 %v626, %v621
      %v647 = vpack.c.b16 %v627, %v622
      %v748 = vunpack.c.l.b16 %v472
      %v749 = vunpack.c.h.b16 %v472
      %v750 = vunpack.c.l.b16 %v473
      %v751 = vunpack.c.h.b16 %v473
      %v752 = vunpack.c.l.b16 %v474
      %v753 = vunpack.c.h.b16 %v474
      %v754 = vunpack.c.l.b16 %v475
      %v755 = vunpack.c.h.b16 %v475
      %v756 = vunpack.c.l.b16 %v476
      %v757 = vunpack.c.h.b16 %v476
      %v758 = vunpack.c.l.b16 %v477
      %v759 = vunpack.c.h.b16 %v477
      %v760 = vunpack.c.l.b16 %v478
      %v761 = vunpack.c.h.b16 %v478
      %v762 = vunpack.c.l.b16 %v479
      %v763 = vunpack.c.h.b16 %v479
      %v764 = vunpack.c.l.b16 %v480
      %v765 = vunpack.c.h.b16 %v480
      %v766 = vunpack.c.l.b16 %v481
      %v767 = vunpack.c.h.b16 %v481
      %v768 = vunpack.c.l.b16 %v482
      %v769 = vunpack.c.h.b16 %v482
      %v770 = vunpack.c.l.b16 %v483
      %v771 = vunpack.c.h.b16 %v483
      %v772 = vunpack.c.l.b16 %v484
      %v773 = vunpack.c.h.b16 %v484
      %v774 = vunpack.c.l.b16 %v485
      %v775 = vunpack.c.h.b16 %v485
      %v776 = vunpack.c.l.b16 %v486
      %v777 = vunpack.c.h.b16 %v486
      %v778 = vunpack.c.l.b16 %v487
      %v779 = vunpack.c.h.b16 %v487
      %v780 = vunpack.c.l.b16 %v488
      %v781 = vunpack.c.h.b16 %v488
      %v782 = vunpack.c.l.b16 %v489
      %v783 = vunpack.c.h.b16 %v489
      %v784 = vunpack.c.l.b16 %v490
      %v785 = vunpack.c.h.b16 %v490
      %v786 = vunpack.c.l.b16 %v491
      %v787 = vunpack.c.h.b16 %v491
      %v788 = vunpack.c.l.b16 %v492
      %v789 = vunpack.c.h.b16 %v492
      %v790 = vunpack.c.l.b16 %v493
      %v791 = vunpack.c.h.b16 %v493
      %v792 = vunpack.c.l.b16 %v494
      %v793 = vunpack.c.h.b16 %v494
      %v794 = vunpack.c.l.b16 %v495
      %v795 = vunpack.c.h.b16 %v495
      %v796 = vunpack.c.l.b16 %v496
      %v797 = vunpack.c.h.b16 %v496
      %v798 = vunpack.c.l.b16 %v497
      %v799 = vunpack.c.h.b16 %v497
      %v800 = vunpack.c.l.b16 %v498
      %v801 = vunpack.c.h.b16 %v498
      %v802 = vunpack.c.l.b16 %v499
      %v803 = vunpack.c.h.b16 %v499
      %v804 = vunpack.c.l.b16 %v500
      %v805 = vunpack.c.h.b16 %v500
      %v806 = vunpack.c.l.b16 %v501
      %v807 = vunpack.c.h.b16 %v501
      %v808 = vunpack.c.l.b16 %v502
      %v809 = vunpack.c.h.b16 %v502
      %v810 = vunpack.c.l.b16 %v503
      %v811 = vunpack.c.h.b16 %v503
      %v812 = vunpack.c.l.b16 %v504
      %v813 = vunpack.c.h.b16 %v504
      %v814 = vunpack.c.l.b16 %v505
      %v815 = vunpack.c.h.b16 %v505
      %v816 = vunpack.c.l.b16 %v506
      %v817 = vunpack.c.h.b16 %v506
      %v818 = vunpack.c.l.b16 %v507
      %v819 = vunpack.c.h.b16 %v507
      %v820 = vunpack.c.l.b16 %v508
      %v821 = vunpack.c.h.b16 %v508
      %v822 = vunpack.c.l.b16 %v509
      %v823 = vunpack.c.h.b16 %v509
      %v824 = vunpack.c.l.b16 %v510
      %v825 = vunpack.c.h.b16 %v510
      %v826 = vunpack.c.l.b16 %v511
      %v827 = vunpack.c.h.b16 %v511
      %v828 = vunpack.c.l.b16 %v512
      %v829 = vunpack.c.h.b16 %v512
      %v830 = vunpack.c.l.b16 %v513
      %v831 = vunpack.c.h.b16 %v513
      %v832 = vunpack.c.l.b16 %v514
      %v833 = vunpack.c.h.b16 %v514
      %v834 = vunpack.c.l.b16 %v515
      %v835 = vunpack.c.h.b16 %v515
      %v836 = vunpack.c.l.b16 %v516
      %v837 = vunpack.c.h.b16 %v516
      %v838 = vunpack.c.l.b16 %v517
      %v839 = vunpack.c.h.b16 %v517
      %v840 = vunpack.c.l.b16 %v518
      %v841 = vunpack.c.h.b16 %v518
      %v842 = vunpack.c.l.b16 %v519
      %v843 = vunpack.c.h.b16 %v519
      %v844 = vunpack.c.l.b16 %v520
      %v845 = vunpack.c.h.b16 %v520
      %v846 = vunpack.c.l.b16 %v521
      %v847 = vunpack.c.h.b16 %v521
      %v848 = vunpack.c.l.b16 %v522
      %v849 = vunpack.c.h.b16 %v522
      %v850 = vunpack.c.l.b16 %v523
      %v851 = vunpack.c.h.b16 %v523
      %v852 = vunpack.c.l.b16 %v524
      %v853 = vunpack.c.h.b16 %v524
      %v854 = vunpack.c.l.b16 %v525
      %v855 = vunpack.c.h.b16 %v525
      %v856 = vunpack.c.l.b16 %v526
      %v857 = vunpack.c.h.b16 %v526
      %v858 = vunpack.c.l.b16 %v527
      %v859 = vunpack.c.h.b16 %v527
      %v860 = vunpack.c.l.b16 %v528
      %v861 = vunpack.c.h.b16 %v528
      %v862 = vunpack.c.l.b16 %v529
      %v863 = vunpack.c.h.b16 %v529
      %v864 = vunpack.c.l.b16 %v530
      %v865 = vunpack.c.h.b16 %v530
      %v866 = vunpack.c.l.b16 %v531
      %v867 = vunpack.c.h.b16 %v531
      %v868 = vunpack.c.l.b16 %v532
      %v869 = vunpack.c.h.b16 %v532
      %v870 = vunpack.c.l.b16 %v533
      %v871 = vunpack.c.h.b16 %v533
      %v872 = vunpack.c.l.b16 %v534
      %v873 = vunpack.c.h.b16 %v534
      %v874 = vunpack.c.l.b16 %v535
      %v875 = vunpack.c.h.b16 %v535
      %v876 = vunpack.c.l.b16 %v536
      %v877 = vunpack.c.h.b16 %v536
      %v878 = vunpack.c.l.b16 %v537
      %v879 = vunpack.c.h.b16 %v537
      %v880 = vunpack.c.l.b16 %v538
      %v881 = vunpack.c.h.b16 %v538
      %v882 = vunpack.c.l.b16 %v539
      %v883 = vunpack.c.h.b16 %v539
      %v884 = vunpack.c.l.b16 %v540
      %v885 = vunpack.c.h.b16 %v540
      %v886 = vunpack.c.l.b16 %v541
      %v887 = vunpack.c.h.b16 %v541
      %v888 = vunpack.c.l.b16 %v542
      %v889 = vunpack.c.h.b16 %v542
      %v890 = vunpack.c.l.b16 %v543
      %v891 = vunpack.c.h.b16 %v543
      %v892 = vunpack.c.l.b16 %v544
      %v893 = vunpack.c.h.b16 %v544
      %v894 = vunpack.c.l.b16 %v545
      %v895 = vunpack.c.h.b16 %v545
      %v896 = vunpack.c.l.b16 %v546
      %v897 = vunpack.c.h.b16 %v546
      %v898 = vunpack.c.l.b16 %v547
      %v899 = vunpack.c.h.b16 %v547
      %v900 = vunpack.c.l.b16 %v548
      %v901 = vunpack.c.h.b16 %v548
      %v902 = vunpack.c.l.b16 %v549
      %v903 = vunpack.c.h.b16 %v549
      %v904 = vunpack.c.l.b16 %v550
      %v905 = vunpack.c.h.b16 %v550
      %v906 = vunpack.c.l.b16 %v551
      %v907 = vunpack.c.h.b16 %v551
      %v908 = vpack.c.b16 %v750, %v748
      %v909 = vpack.c.b16 %v751, %v749
      %v910 = vpack.c.b16 %v754, %v752
      %v911 = vpack.c.b16 %v755, %v753
      %v912 = vpack.c.b16 %v758, %v756
      %v913 = vpack.c.b16 %v759, %v757
      %v914 = vpack.c.b16 %v762, %v760
      %v915 = vpack.c.b16 %v763, %v761
      %v916 = vpack.c.b16 %v766, %v764
      %v917 = vpack.c.b16 %v767, %v765
      %v918 = vpack.c.b16 %v770, %v768
      %v919 = vpack.c.b16 %v771, %v769
      %v920 = vpack.c.b16 %v774, %v772
      %v921 = vpack.c.b16 %v775, %v773
      %v922 = vpack.c.b16 %v778, %v776
      %v923 = vpack.c.b16 %v779, %v777
      %v924 = vpack.c.b16 %v782, %v780
      %v925 = vpack.c.b16 %v783, %v781
      %v926 = vpack.c.b16 %v786, %v784
      %v927 = vpack.c.b16 %v787, %v785
      %v928 = vpack.c.b16 %v790, %v788
      %v929 = vpack.c.b16 %v791, %v789
      %v930 = vpack.c.b16 %v794, %v792
      %v931 = vpack.c.b16 %v795, %v793
      %v932 = vpack.c.b16 %v798, %v796
      %v933 = vpack.c.b16 %v799, %v797
      %v934 = vpack.c.b16 %v802, %v800
      %v935 = vpack.c.b16 %v803, %v801
      %v936 = vpack.c.b16 %v806, %v804
      %v937 = vpack.c.b16 %v807, %v805
      %v938 = vpack.c.b16 %v810, %v808
      %v939 = vpack.c.b16 %v811, %v809
      %v940 = vpack.c.b16 %v814, %v812
      %v941 = vpack.c.b16 %v815, %v813
      %v942 = vpack.c.b16 %v818, %v816
      %v943 = vpack.c.b16 %v819, %v817
      %v944 = vpack.c.b16 %v822, %v820
      %v945 = vpack.c.b16 %v823, %v821
      %v946 = vpack.c.b16 %v826, %v824
      %v947 = vpack.c.b16 %v827, %v825
      %v948 = vpack.c.b16 %v830, %v828
      %v949 = vpack.c.b16 %v831, %v829
      %v950 = vpack.c.b16 %v834, %v832
      %v951 = vpack.c.b16 %v835, %v833
      %v952 = vpack.c.b16 %v838, %v836
      %v953 = vpack.c.b16 %v839, %v837
      %v954 = vpack.c.b16 %v842, %v840
      %v955 = vpack.c.b16 %v843, %v841
      %v956 = vpack.c.b16 %v846, %v844
      %v957 = vpack.c.b16 %v847, %v845
      %v958 = vpack.c.b16 %v850, %v848
      %v959 = vpack.c.b16 %v851, %v849
      %v960 = vpack.c.b16 %v854, %v852
      %v961 = vpack.c.b16 %v855, %v853
      %v962 = vpack.c.b16 %v858, %v856
      %v963 = vpack.c.b16 %v859, %v857
      %v964 = vpack.c.b16 %v862, %v860
      %v965 = vpack.c.b16 %v863, %v861
      %v966 = vpack.c.b16 %v866, %v864
      %v967 = vpack.c.b16 %v867, %v865
      %v968 = vpack.c.b16 %v870, %v868
      %v969 = vpack.c.b16 %v871, %v869
      %v970 = vpack.c.b16 %v874, %v872
      %v971 = vpack.c.b16 %v875, %v873
      %v972 = vpack.c.b16 %v878, %v876
      %v973 = vpack.c.b16 %v879, %v877
      %v974 = vpack.c.b16 %v882, %v880
      %v975 = vpack.c.b16 %v883, %v881
      %v976 = vpack.c.b16 %v886, %v884
      %v977 = vpack.c.b16 %v887, %v885
      %v978 = vpack.c.b16 %v890, %v888
      %v979 = vpack.c.b16 %v891, %v889
      %v980 = vpack.c.b16 %v894, %v892
      %v981 = vpack.c.b16 %v895, %v893
      %v982 = vpack.c.b16 %v898, %v896
      %v983 = vpack.c.b16 %v899, %v897
      %v984 = vpack.c.b16 %v902, %v900
      %v985 = vpack.c.b16 %v903, %v901
      %v986 = vpack.c.b16 %v906, %v904
      %v987 = vpack.c.b16 %v907, %v905
      %1068 = vmatprep.subr.bf16.mxu0 %v923
      %1069 = vmatpush1.bf16.msra.mxu0 %v922
      %1070 = vmatprep.subr.bf16.mxu0 %v921
      %1071 = vmatpush1.bf16.msra.mxu0 %v920
      %1072 = vmatprep.subr.bf16.mxu0 %v919
      %1073 = vmatpush1.bf16.msra.mxu0 %v918
      %1074 = vmatprep.subr.bf16.mxu0 %v917
      %1075 = vmatpush1.bf16.msra.mxu0 %v916
      %1076 = vmatprep.subr.bf16.mxu0 %v915
      %1077 = vmatpush1.bf16.msra.mxu0 %v914
      %1078 = vmatprep.subr.bf16.mxu0 %v913
      %1079 = vmatpush1.bf16.msra.mxu0 %v912
      %1080 = vmatprep.subr.bf16.mxu0 %v911
      %1081 = vmatpush1.bf16.msra.mxu0 %v910
      %1082 = vmatprep.subr.bf16.mxu0 %v909
      %1083 = vmatpush1.bf16.msra.mxu0 %v908
      %1084 = vmatprep.subr.bf16.mxu0 %v939
      %1085 = vmatpush2.bf16.msra.mxu0 %v938
      %1086 = vmatprep.subr.bf16.mxu0 %v937
      %1087 = vmatpush2.bf16.msra.mxu0 %v936
      %1088 = vmatprep.subr.bf16.mxu0 %v935
      %1089 = vmatpush2.bf16.msra.mxu0 %v934
      %1090 = vmatprep.subr.bf16.mxu0 %v933
      %1091 = vmatpush2.bf16.msra.mxu0 %v932
      %1092 = vmatprep.subr.bf16.mxu0 %v931
      %1093 = vmatpush2.bf16.msra.mxu0 %v930
      %1094 = vmatprep.subr.bf16.mxu0 %v929
      %1095 = vmatpush2.bf16.msra.mxu0 %v928
      %1096 = vmatprep.subr.bf16.mxu0 %v927
      %1097 = vmatpush2.bf16.msra.mxu0 %v926
      %1098 = vmatprep.subr.bf16.mxu0 %v925
      %1099 = vmatpush2.bf16.msra.mxu0 %v924
      %1100 = vmatprep.mubr.bf16.mxu0 %v629
      %1101 = vmatmul.mubr.bf16.gmra.mxu0 %v628
      %v1102 = vpop.f32.mrf.mxu0
      %v1103 = vadd.f32 %v557, %v1102
      %v1104 = vpop.f32.mrf.mxu0
      %v1105 = vadd.f32 %v561, %v1104
      %v1106 = vpop.f32.mrf.mxu0
      %v1107 = vadd.f32 %v557, %v1106
      %v1108 = vpop.f32.mrf.mxu0
      %v1109 = vadd.f32 %v561, %v1108
      %1110 = vmatprep.mubr.bf16.mxu0 %v634
      %1111 = vmatmul.mubr.bf16.gmra.mxu0 %v633
      %v1112 = vpop.f32.mrf.mxu0
      %v1113 = vadd.f32 %v557, %v1112
      %v1114 = vpop.f32.mrf.mxu0
      %v1115 = vadd.f32 %v561, %v1114
      %v1116 = vpop.f32.mrf.mxu0
      %v1117 = vadd.f32 %v557, %v1116
      %v1118 = vpop.f32.mrf.mxu0
      %v1119 = vadd.f32 %v561, %v1118
      %1120 = vmatprep.mubr.bf16.mxu0 %v639
      %1121 = vmatmul.mubr.bf16.gmra.mxu0 %v638
      %v1122 = vpop.f32.mrf.mxu0
      %v1123 = vadd.f32 %v557, %v1122
      %v1124 = vpop.f32.mrf.mxu0
      %v1125 = vadd.f32 %v561, %v1124
      %v1126 = vpop.f32.mrf.mxu0
      %v1127 = vadd.f32 %v557, %v1126
      %v1128 = vpop.f32.mrf.mxu0
      %v1129 = vadd.f32 %v561, %v1128
      %1130 = vmatprep.mubr.bf16.mxu0 %v644
      %1131 = vmatmul.mubr.bf16.gmra.mxu0 %v643
      %v1132 = vpop.f32.mrf.mxu0
      %v1133 = vadd.f32 %v557, %v1132
      %v1134 = vpop.f32.mrf.mxu0
      %v1135 = vadd.f32 %v561, %v1134
      %v1136 = vpop.f32.mrf.mxu0
      %v1137 = vadd.f32 %v557, %v1136
      %v1138 = vpop.f32.mrf.mxu0
      %v1139 = vadd.f32 %v561, %v1138
      %1140 = vdwg.mxu0
      %1141 = vmatprep.subr.bf16.mxu0 %v955
      %1142 = vmatpush1.bf16.msra.mxu0 %v954
      %1143 = vmatprep.subr.bf16.mxu0 %v953
      %1144 = vmatpush1.bf16.msra.mxu0 %v952
      %1145 = vmatprep.subr.bf16.mxu0 %v951
      %1146 = vmatpush1.bf16.msra.mxu0 %v950
      %1147 = vmatprep.subr.bf16.mxu0 %v949
      %1148 = vmatpush1.bf16.msra.mxu0 %v948
      %1149 = vmatprep.subr.bf16.mxu0 %v947
      %1150 = vmatpush1.bf16.msra.mxu0 %v946
      %1151 = vmatprep.subr.bf16.mxu0 %v945
      %1152 = vmatpush1.bf16.msra.mxu0 %v944
      %1153 = vmatprep.subr.bf16.mxu0 %v943
      %1154 = vmatpush1.bf16.msra.mxu0 %v942
      %1155 = vmatprep.subr.bf16.mxu0 %v941
      %1156 = vmatpush1.bf16.msra.mxu0 %v940
      %1157 = vmatprep.subr.bf16.mxu0 %v971
      %1158 = vmatpush2.bf16.msra.mxu0 %v970
      %1159 = vmatprep.subr.bf16.mxu0 %v969
      %1160 = vmatpush2.bf16.msra.mxu0 %v968
      %1161 = vmatprep.subr.bf16.mxu0 %v967
      %1162 = vmatpush2.bf16.msra.mxu0 %v966
      %1163 = vmatprep.subr.bf16.mxu0 %v965
      %1164 = vmatpush2.bf16.msra.mxu0 %v964
      %1165 = vmatprep.subr.bf16.mxu0 %v963
      %1166 = vmatpush2.bf16.msra.mxu0 %v962
      %1167 = vmatprep.subr.bf16.mxu0 %v961
      %1168 = vmatpush2.bf16.msra.mxu0 %v960
      %1169 = vmatprep.subr.bf16.mxu0 %v959
      %1170 = vmatpush2.bf16.msra.mxu0 %v958
      %1171 = vmatprep.subr.bf16.mxu0 %v957
      %1172 = vmatpush2.bf16.msra.mxu0 %v956
      %1173 = vmatprep.mubr.bf16.mxu0 %v631
      %1174 = vmatmul.mubr.bf16.gmra.mxu0 %v630
      %v1175 = vpop.f32.mrf.mxu0
      %v1176 = vadd.f32 %v1103, %v1175
      %v1177 = vpop.f32.mrf.mxu0
      %v1178 = vadd.f32 %v1105, %v1177
      %v1179 = vpop.f32.mrf.mxu0
      %v1180 = vadd.f32 %v1107, %v1179
      %v1181 = vpop.f32.mrf.mxu0
      %v1182 = vadd.f32 %v1109, %v1181
      %1183 = vmatprep.mubr.bf16.mxu0 %v636
      %1184 = vmatmul.mubr.bf16.gmra.mxu0 %v635
      %v1185 = vpop.f32.mrf.mxu0
      %v1186 = vadd.f32 %v1113, %v1185
      %v1187 = vpop.f32.mrf.mxu0
      %v1188 = vadd.f32 %v1115, %v1187
      %v1189 = vpop.f32.mrf.mxu0
      %v1190 = vadd.f32 %v1117, %v1189
      %v1191 = vpop.f32.mrf.mxu0
      %v1192 = vadd.f32 %v1119, %v1191
      %1193 = vmatprep.mubr.bf16.mxu0 %v641
      %1194 = vmatmul.mubr.bf16.gmra.mxu0 %v640
      %v1195 = vpop.f32.mrf.mxu0
      %v1196 = vadd.f32 %v1123, %v1195
      %v1197 = vpop.f32.mrf.mxu0
      %v1198 = vadd.f32 %v1125, %v1197
      %v1199 = vpop.f32.mrf.mxu0
      %v1200 = vadd.f32 %v1127, %v1199
      %v1201 = vpop.f32.mrf.mxu0
      %v1202 = vadd.f32 %v1129, %v1201
      %1203 = vmatprep.mubr.bf16.mxu0 %v646
      %1204 = vmatmul.mubr.bf16.gmra.mxu0 %v645
      %v1205 = vpop.f32.mrf.mxu0
      %v1206 = vadd.f32 %v1133, %v1205
      %v1207 = vpop.f32.mrf.mxu0
      %v1208 = vadd.f32 %v1135, %v1207
      %v1209 = vpop.f32.mrf.mxu0
      %v1210 = vadd.f32 %v1137, %v1209
      %v1211 = vpop.f32.mrf.mxu0
      %v1212 = vadd.f32 %v1139, %v1211
      %1213 = vdwg.mxu0
      %1214 = vmatprep.subr.bf16.mxu0 %v987
      %1215 = vmatpush1.bf16.msra.mxu0 %v986
      %1216 = vmatprep.subr.bf16.mxu0 %v985
      %1217 = vmatpush1.bf16.msra.mxu0 %v984
      %1218 = vmatprep.subr.bf16.mxu0 %v983
      %1219 = vmatpush1.bf16.msra.mxu0 %v982
      %1220 = vmatprep.subr.bf16.mxu0 %v981
      %1221 = vmatpush1.bf16.msra.mxu0 %v980
      %1222 = vmatprep.subr.bf16.mxu0 %v979
      %1223 = vmatpush1.bf16.msra.mxu0 %v978
      %1224 = vmatprep.subr.bf16.mxu0 %v977
      %1225 = vmatpush1.bf16.msra.mxu0 %v976
      %1226 = vmatprep.subr.bf16.mxu0 %v975
      %1227 = vmatpush1.bf16.msra.mxu0 %v974
      %1228 = vmatprep.subr.bf16.mxu0 %v973
      %1229 = vmatpush1.bf16.msra.mxu0 %v972
      %1230 = vmatprep.subr.bf16.mxu0 0
      %1231 = vmatpush2.bf16.msra.mxu0 0
      %1232 = vmatprep.subr.bf16.mxu0 0
      %1233 = vmatpush2.bf16.msra.mxu0 0
      %1234 = vmatprep.subr.bf16.mxu0 0
      %1235 = vmatpush2.bf16.msra.mxu0 0
      %1236 = vmatprep.subr.bf16.mxu0 0
      %1237 = vmatpush2.bf16.msra.mxu0 0
      %1238 = vmatprep.subr.bf16.mxu0 0
      %1239 = vmatpush2.bf16.msra.mxu0 0
      %1240 = vmatprep.subr.bf16.mxu0 0
      %1241 = vmatpush2.bf16.msra.mxu0 0
      %1242 = vmatprep.subr.bf16.mxu0 0
      %1243 = vmatpush2.bf16.msra.mxu0 0
      %1244 = vmatprep.subr.bf16.mxu0 0
      %1245 = vmatpush2.bf16.msra.mxu0 0
      %1246 = vmatprep.mubr.bf16.mxu0 0
      %1247 = vmatmul.mubr.bf16.gmra.mxu0 %v632
      %v1248 = vpop.f32.mrf.mxu0
      %v1249 = vadd.f32 %v1176, %v1248
      %v1250 = vpop.f32.mrf.mxu0
      %v1251 = vadd.f32 %v1178, %v1250
      %v1252 = vpop.f32.mrf.mxu0
      %v1253 = vadd.f32 %v1180, %v1252
      %v1254 = vpop.f32.mrf.mxu0
      %v1255 = vadd.f32 %v1182, %v1254
      %1256 = vmatprep.mubr.bf16.mxu0 0
      %1257 = vmatmul.mubr.bf16.gmra.mxu0 %v637
      %v1258 = vpop.f32.mrf.mxu0
      %v1259 = vadd.f32 %v1186, %v1258
      %v1260 = vpop.f32.mrf.mxu0
      %v1261 = vadd.f32 %v1188, %v1260
      %v1262 = vpop.f32.mrf.mxu0
      %v1263 = vadd.f32 %v1190, %v1262
      %v1264 = vpop.f32.mrf.mxu0
      %v1265 = vadd.f32 %v1192, %v1264
      %1266 = vmatprep.mubr.bf16.mxu0 0
      %1267 = vmatmul.mubr.bf16.gmra.mxu0 %v642
      %v1268 = vpop.f32.mrf.mxu0
      %v1269 = vadd.f32 %v1196, %v1268
      %v1270 = vpop.f32.mrf.mxu0
      %v1271 = vadd.f32 %v1198, %v1270
      %v1272 = vpop.f32.mrf.mxu0
      %v1273 = vadd.f32 %v1200, %v1272
      %v1274 = vpop.f32.mrf.mxu0
      %v1275 = vadd.f32 %v1202, %v1274
      %1276 = vmatprep.mubr.bf16.mxu0 0
      %1277 = vmatmul.mubr.bf16.gmra.mxu0 %v647
      %v1278 = vpop.f32.mrf.mxu0
      %v1279 = vadd.f32 %v1206, %v1278
      %v1280 = vpop.f32.mrf.mxu0
      %v1281 = vadd.f32 %v1208, %v1280
      %v1282 = vpop.f32.mrf.mxu0
      %v1283 = vadd.f32 %v1210, %v1282
      %v1284 = vpop.f32.mrf.mxu0
      %v1285 = vadd.f32 %v1212, %v1284
      %1286 = vdwg.mxu0
      %1287 = vst [vmem:[#allocation2] sm:$0xff] %v1249
      %1288 = vst [vmem:[#allocation2 + $0x8] sm:$0xff] %v1251
      %1289 = vst [vmem:[#allocation2 + $0x10] sm:$0xff] %v1253
      %1290 = vst [vmem:[#allocation2 + $0x18] sm:$0xff] %v1255
      %1291 = vst [vmem:[#allocation2 + $0x20] sm:$0xff] %v1259
      %1292 = vst [vmem:[#allocation2 + $0x28] sm:$0xff] %v1261
      %1293 = vst [vmem:[#allocation2 + $0x30] sm:$0xff] %v1263
      %1294 = vst [vmem:[#allocation2 + $0x38] sm:$0xff] %v1265
      %1295 = vst [vmem:[#allocation2 + $0x40] sm:$0xff] %v1269
      %1296 = vst [vmem:[#allocation2 + $0x48] sm:$0xff] %v1271
      %1297 = vst [vmem:[#allocation2 + $0x50] sm:$0xff] %v1273
      %1298 = vst [vmem:[#allocation2 + $0x58] sm:$0xff] %v1275
      %1299 = vst [vmem:[#allocation2 + $0x60] sm:$0xff] %v1279
      %1300 = vst [vmem:[#allocation2 + $0x68] sm:$0xff] %v1281
      %1301 = vst [vmem:[#allocation2 + $0x70] sm:$0xff] %v1283
      %1302 = vst [vmem:[#allocation2 + $0x78] sm:$0xff] %v1285
      %v1303 = vld [vmem:[%s2] sm:$0xff]
      %v1304 = vld [vmem:[%s2 + $0x8] sm:$0xff]
      %v1305 = vld [vmem:[%s2 + $0x10] sm:$0xff]
      %v1306 = vld [vmem:[%s2 + $0x18] sm:$0xff]
      %v1307 = vld [vmem:[%s2 + $0x20] sm:$0xff]
      %v1308 = vld [vmem:[%s2 + $0x28] sm:$0xff]
      %v1309 = vld [vmem:[%s2 + $0x30] sm:$0xff]
      %v1310 = vld [vmem:[%s2 + $0x38] sm:$0xff]
      %s1311 = smul.u32 0, 2
      %s1312 = smul.addr %s1311, 8
      %s1313 = scalar_lea.vmem [#allocation2], %s1312
      %v1314 = vld [vmem:[%s1313] sm:$0xff]
      %v1315 = vld [vmem:[%s1313 + $0x8] sm:$0xff]
      %v1324 = vunpack.c.l.b16 %v1303
      %v1325 = vunpack.c.h.b16 %v1303
      %v1326 = vunpack.c.l.b16 %v1304
      %v1327 = vunpack.c.h.b16 %v1304
      %v1328 = vunpack.c.l.b16 %v1305
      %v1329 = vunpack.c.h.b16 %v1305
      %v1330 = vunpack.c.l.b16 %v1306
      %v1331 = vunpack.c.h.b16 %v1306
      %v1332 = vunpack.c.l.b16 %v1307
      %v1333 = vunpack.c.h.b16 %v1307
      %v1334 = vunpack.c.l.b16 %v1308
      %v1335 = vunpack.c.h.b16 %v1308
      %v1336 = vunpack.c.l.b16 %v1309
      %v1337 = vunpack.c.h.b16 %v1309
      %v1338 = vunpack.c.l.b16 %v1310
      %v1339 = vunpack.c.h.b16 %v1310
      %v1340 = vpack.c.b16 %v1326, %v1324
      %v1341 = vpack.c.b16 %v1327, %v1325
      %v1342 = vpack.c.b16 %v1330, %v1328
      %v1343 = vpack.c.b16 %v1331, %v1329
      %v1344 = vpack.c.b16 %v1334, %v1332
      %v1345 = vpack.c.b16 %v1335, %v1333
      %v1346 = vpack.c.b16 %v1338, %v1336
      %v1347 = vpack.c.b16 %v1339, %v1337
      %vm1356 = vcmask 523264
      %v1358 = vsel %vm1356, 0, 0
      %1360 = vmatprep.subr.bf16.mxu0 0
      %1361 = vmatpush1.bf16.msra.mxu0 0
      %1362 = vmatprep.subr.bf16.mxu0 0
      %1363 = vmatpush1.bf16.msra.mxu0 0
      %1364 = vmatprep.subr.bf16.mxu0 0
      %1365 = vmatpush1.bf16.msra.mxu0 0
      %1366 = vmatprep.subr.bf16.mxu0 0
      %1367 = vmatpush1.bf16.msra.mxu0 0
      %1368 = vmatprep.subr.bf16.mxu0 %v1347
      %1369 = vmatpush1.bf16.msra.mxu0 %v1346
      %1370 = vmatprep.subr.bf16.mxu0 %v1345
      %1371 = vmatpush1.bf16.msra.mxu0 %v1344
      %1372 = vmatprep.subr.bf16.mxu0 %v1343
      %1373 = vmatpush1.bf16.msra.mxu0 %v1342
      %1374 = vmatprep.subr.bf16.mxu0 %v1341
      %1375 = vmatpush1.bf16.msra.mxu0 %v1340
      %1376 = vmatprep.subr.bf16.mxu0 0
      %1377 = vmatpush2.bf16.msra.mxu0 0
      %1378 = vmatprep.subr.bf16.mxu0 0
      %1379 = vmatpush2.bf16.msra.mxu0 0
      %1380 = vmatprep.subr.bf16.mxu0 0
      %1381 = vmatpush2.bf16.msra.mxu0 0
      %1382 = vmatprep.subr.bf16.mxu0 0
      %1383 = vmatpush2.bf16.msra.mxu0 0
      %1384 = vmatprep.subr.bf16.mxu0 0
      %1385 = vmatpush2.bf16.msra.mxu0 0
      %1386 = vmatprep.subr.bf16.mxu0 0
      %1387 = vmatpush2.bf16.msra.mxu0 0
      %1388 = vmatprep.subr.bf16.mxu0 0
      %1389 = vmatpush2.bf16.msra.mxu0 0
      %1390 = vmatprep.subr.bf16.mxu0 0
      %1391 = vmatpush2.bf16.msra.mxu0 0
      %1392 = vmatprep.mubr.bf16.mxu0 0
      %1393 = vmatmul.mubr.bf16.gmra.mxu0 %v1358
      %v1394 = vpop.f32.mrf.mxu0
      %v1395 = vadd.f32 0.0, %v1394
      %v1396 = vpop.f32.mrf.mxu0
      %v1397 = vadd.f32 0.0, %v1396
      %v1398 = vpop.f32.mrf.mxu0
      %v1399 = vpop.f32.mrf.mxu0
      %1400 = vdwg.mxu0
      %v1401 = vadd.f32 %v1314, %v1395
      %v1402 = vadd.f32 %v1315, %v1397
      %v1403 = vxor.u32 %v1401, 2147483648
      %v1404 = vmul.f32 %v1403, 1.442695
      %v1405 = vpow.pop %v1404
      %v1406 = vadd.f32 %v1405, 1.0
      %v1407 = vrcp.pop %v1406
      %v1408 = vmul.f32 1.0, %v1407
      %v1409 = vtanh.pop %v1402
      %v1410 = vxor.u32 %v1402, 2147483648
      %v1411 = vmul.f32 %v1410, 1.442695
      %v1412 = vpow.pop %v1411
      %v1413 = vadd.f32 %v1412, 1.0
      %v1414 = vrcp.pop %v1413
      %v1415 = vmul.f32 1.0, %v1414
      %v1416 = vmul.f32 %v1408, 0.0
      %v1417 = vmul.f32 %v1408, %v1409
      %1419 = vrot.lane.b32.xlu0 %v1417, 64
      %v1420 = vpop.permute.xlu0 %1419
      %v1422 = vadd.f32 %v1416, %v1420
      %v1423 = vtanh.pop %v1422
      %v1424 = vmul.f32 %v1415, %v1423
      %1426 = vrot.lane.b32.xlu0 %v1424, 64
      %v1427 = vpop.permute.xlu0 %1426
      %vm1429 = vcmask 261120
      %1430 = vst.msk [vmem:[#allocation3] sm:$0xff] %vm1429, %v1427
      %1431 = vrot.lane.b32.xlu0 %v1424, 32
      %v1432 = vpop.permute.xlu0 %1431
      %s1434 = scalar_lea.vmem [#allocation4], 56
      %1435 = vst.msk [vmem:[%s1434] sm:$0xff] %vm1429, %v1432
      %s1436 = smul.u32 1, 2
      %s1437 = smul.addr %s1436, 8
      %s1438 = scalar_lea.vmem [#allocation2], %s1437
      %v1439 = vld [vmem:[%s1438] sm:$0xff]
      %v1440 = vld [vmem:[%s1438 + $0x8] sm:$0xff]
      %v1441 = vpack.c.bf16 %v1424, %v1424
      %1443 = vrot.lane.b32.xlu0 %v1441, 64
      %v1444 = vpop.permute.xlu0 %1443
      %v1446 = vsel %vm1356, %v1444, 0
      %1448 = vmatprep.subr.bf16.mxu0 0
      %1449 = vmatpush1.bf16.msra.mxu0 0
      %1450 = vmatprep.subr.bf16.mxu0 0
      %1451 = vmatpush1.bf16.msra.mxu0 0
      %1452 = vmatprep.subr.bf16.mxu0 0
      %1453 = vmatpush1.bf16.msra.mxu0 0
      %1454 = vmatprep.subr.bf16.mxu0 0
      %1455 = vmatpush1.bf16.msra.mxu0 0
      %1456 = vmatprep.subr.bf16.mxu0 %v1347
      %1457 = vmatpush1.bf16.msra.mxu0 %v1346
      %1458 = vmatprep.subr.bf16.mxu0 %v1345
      %1459 = vmatpush1.bf16.msra.mxu0 %v1344
      %1460 = vmatprep.subr.bf16.mxu0 %v1343
      %1461 = vmatpush1.bf16.msra.mxu0 %v1342
      %1462 = vmatprep.subr.bf16.mxu0 %v1341
      %1463 = vmatpush1.bf16.msra.mxu0 %v1340
      %1464 = vmatprep.subr.bf16.mxu0 0
      %1465 = vmatpush2.bf16.msra.mxu0 0
      %1466 = vmatprep.subr.bf16.mxu0 0
      %1467 = vmatpush2.bf16.msra.mxu0 0
      %1468 = vmatprep.subr.bf16.mxu0 0
      %1469 = vmatpush2.bf16.msra.mxu0 0
      %1470 = vmatprep.subr.bf16.mxu0 0
      %1471 = vmatpush2.bf16.msra.mxu0 0
      %1472 = vmatprep.subr.bf16.mxu0 0
      %1473 = vmatpush2.bf16.msra.mxu0 0
      %1474 = vmatprep.subr.bf16.mxu0 0
      %1475 = vmatpush2.bf16.msra.mxu0 0
      %1476 = vmatprep.subr.bf16.mxu0 0
      %1477 = vmatpush2.bf16.msra.mxu0 0
      %1478 = vmatprep.subr.bf16.mxu0 0
      %1479 = vmatpush2.bf16.msra.mxu0 0
      %1480 = vmatprep.mubr.bf16.mxu0 0
      %1481 = vmatmul.mubr.bf16.gmra.mxu0 %v1446
      %v1482 = vpop.f32.mrf.mxu0
      %v1483 = vadd.f32 0.0, %v1482
      %v1484 = vpop.f32.mrf.mxu0
      %v1485 = vadd.f32 0.0, %v1484
      %v1486 = vpop.f32.mrf.mxu0
      %v1487 = vpop.f32.mrf.mxu0
      %1488 = vdwg.mxu0
      %v1489 = vadd.f32 %v1439, %v1483
      %v1490 = vadd.f32 %v1440, %v1485
      %v1491 = vxor.u32 %v1489, 2147483648
      %v1492 = vmul.f32 %v1491, 1.442695
      %v1493 = vpow.pop %v1492
      %v1494 = vadd.f32 %v1493, 1.0
      %v1495 = vrcp.pop %v1494
      %v1496 = vmul.f32 1.0, %v1495
      %v1497 = vtanh.pop %v1490
      %v1498 = vxor.u32 %v1490, 2147483648
      %v1499 = vmul.f32 %v1498, 1.442695
      %v1500 = vpow.pop %v1499
      %v1501 = vadd.f32 %v1500, 1.0
      %v1502 = vrcp.pop %v1501
      %v1503 = vmul.f32 1.0, %v1502
      %v1504 = vmul.f32 %v1496, %v1422
      %v1505 = vmul.f32 %v1496, %v1497
      %1507 = vrot.lane.b32.xlu0 %v1505, 64
      %v1508 = vpop.permute.xlu0 %1507
      %v1510 = vadd.f32 %v1504, %v1508
      %v1511 = vtanh.pop %v1510
      %v1512 = vmul.f32 %v1503, %v1511
      %1514 = vrot.lane.b32.xlu0 %v1512, 64
      %v1515 = vpop.permute.xlu0 %1514
      %s1517 = scalar_lea.vmem [#allocation3], 8
      %1518 = vst.msk [vmem:[%s1517] sm:$0xff] %vm1429, %v1515
      %1519 = vrot.lane.b32.xlu0 %v1512, 32
      %v1520 = vpop.permute.xlu0 %1519
      %s1522 = scalar_lea.vmem [#allocation4], 48
      %1523 = vst.msk [vmem:[%s1522] sm:$0xff] %vm1429, %v1520
      %s1524 = smul.u32 2, 2
      %s1525 = smul.addr %s1524, 8
      %s1526 = scalar_lea.vmem [#allocation2], %s1525
      %v1527 = vld [vmem:[%s1526] sm:$0xff]
      %v1528 = vld [vmem:[%s1526 + $0x8] sm:$0xff]
      %v1529 = vpack.c.bf16 %v1512, %v1512
      %1531 = vrot.lane.b32.xlu0 %v1529, 64
      %v1532 = vpop.permute.xlu0 %1531
      %v1534 = vsel %vm1356, %v1532, 0
      %1536 = vmatprep.subr.bf16.mxu0 0
      %1537 = vmatpush1.bf16.msra.mxu0 0
      %1538 = vmatprep.subr.bf16.mxu0 0
      %1539 = vmatpush1.bf16.msra.mxu0 0
      %1540 = vmatprep.subr.bf16.mxu0 0
      %1541 = vmatpush1.bf16.msra.mxu0 0
      %1542 = vmatprep.subr.bf16.mxu0 0
      %1543 = vmatpush1.bf16.msra.mxu0 0
      %1544 = vmatprep.subr.bf16.mxu0 %v1347
      %1545 = vmatpush1.bf16.msra.mxu0 %v1346
      %1546 = vmatprep.subr.bf16.mxu0 %v1345
      %1547 = vmatpush1.bf16.msra.mxu0 %v1344
      %1548 = vmatprep.subr.bf16.mxu0 %v1343
      %1549 = vmatpush1.bf16.msra.mxu0 %v1342
      %1550 = vmatprep.subr.bf16.mxu0 %v1341
      %1551 = vmatpush1.bf16.msra.mxu0 %v1340
      %1552 = vmatprep.subr.bf16.mxu0 0
      %1553 = vmatpush2.bf16.msra.mxu0 0
      %1554 = vmatprep.subr.bf16.mxu0 0
      %1555 = vmatpush2.bf16.msra.mxu0 0
      %1556 = vmatprep.subr.bf16.mxu0 0
      %1557 = vmatpush2.bf16.msra.mxu0 0
      %1558 = vmatprep.subr.bf16.mxu0 0
      %1559 = vmatpush2.bf16.msra.mxu0 0
      %1560 = vmatprep.subr.bf16.mxu0 0
      %1561 = vmatpush2.bf16.msra.mxu0 0
      %1562 = vmatprep.subr.bf16.mxu0 0
      %1563 = vmatpush2.bf16.msra.mxu0 0
      %1564 = vmatprep.subr.bf16.mxu0 0
      %1565 = vmatpush2.bf16.msra.mxu0 0
      %1566 = vmatprep.subr.bf16.mxu0 0
      %1567 = vmatpush2.bf16.msra.mxu0 0
      %1568 = vmatprep.mubr.bf16.mxu0 0
      %1569 = vmatmul.mubr.bf16.gmra.mxu0 %v1534
      %v1570 = vpop.f32.mrf.mxu0
      %v1571 = vadd.f32 0.0, %v1570
      %v1572 = vpop.f32.mrf.mxu0
      %v1573 = vadd.f32 0.0, %v1572
      %v1574 = vpop.f32.mrf.mxu0
      %v1575 = vpop.f32.mrf.mxu0
      %1576 = vdwg.mxu0
      %v1577 = vadd.f32 %v1527, %v1571
      %v1578 = vadd.f32 %v1528, %v1573
      %v1579 = vxor.u32 %v1577, 2147483648
      %v1580 = vmul.f32 %v1579, 1.442695
      %v1581 = vpow.pop %v1580
      %v1582 = vadd.f32 %v1581, 1.0
      %v1583 = vrcp.pop %v1582
      %v1584 = vmul.f32 1.0, %v1583
      %v1585 = vtanh.pop %v1578
      %v1586 = vxor.u32 %v1578, 2147483648
      %v1587 = vmul.f32 %v1586, 1.442695
      %v1588 = vpow.pop %v1587
      %v1589 = vadd.f32 %v1588, 1.0
      %v1590 = vrcp.pop %v1589
      %v1591 = vmul.f32 1.0, %v1590
      %v1592 = vmul.f32 %v1584, %v1510
      %v1593 = vmul.f32 %v1584, %v1585
      %1595 = vrot.lane.b32.xlu0 %v1593, 64
      %v1596 = vpop.permute.xlu0 %1595
      %v1598 = vadd.f32 %v1592, %v1596
      %v1599 = vtanh.pop %v1598
      %v1600 = vmul.f32 %v1591, %v1599
      %1602 = vrot.lane.b32.xlu0 %v1600, 64
      %v1603 = vpop.permute.xlu0 %1602
      %s1605 = scalar_lea.vmem [#allocation3], 16
      %1606 = vst.msk [vmem:[%s1605] sm:$0xff] %vm1429, %v1603
      %1607 = vrot.lane.b32.xlu0 %v1600, 32
      %v1608 = vpop.permute.xlu0 %1607
      %s1610 = scalar_lea.vmem [#allocation4], 40
      %1611 = vst.msk [vmem:[%s1610] sm:$0xff] %vm1429, %v1608
      %s1612 = smul.u32 3, 2
      %s1613 = smul.addr %s1612, 8
      %s1614 = scalar_lea.vmem [#allocation2], %s1613
      %v1615 = vld [vmem:[%s1614] sm:$0xff]
      %v1616 = vld [vmem:[%s1614 + $0x8] sm:$0xff]
      %v1617 = vpack.c.bf16 %v1600, %v1600
      %1619 = vrot.lane.b32.xlu0 %v1617, 64
      %v1620 = vpop.permute.xlu0 %1619
      %v1622 = vsel %vm1356, %v1620, 0
      %1624 = vmatprep.subr.bf16.mxu0 0
      %1625 = vmatpush1.bf16.msra.mxu0 0
      %1626 = vmatprep.subr.bf16.mxu0 0
      %1627 = vmatpush1.bf16.msra.mxu0 0
      %1628 = vmatprep.subr.bf16.mxu0 0
      %1629 = vmatpush1.bf16.msra.mxu0 0
      %1630 = vmatprep.subr.bf16.mxu0 0
      %1631 = vmatpush1.bf16.msra.mxu0 0
      %1632 = vmatprep.subr.bf16.mxu0 %v1347
      %1633 = vmatpush1.bf16.msra.mxu0 %v1346
      %1634 = vmatprep.subr.bf16.mxu0 %v1345
      %1635 = vmatpush1.bf16.msra.mxu0 %v1344
      %1636 = vmatprep.subr.bf16.mxu0 %v1343
      %1637 = vmatpush1.bf16.msra.mxu0 %v1342
      %1638 = vmatprep.subr.bf16.mxu0 %v1341
      %1639 = vmatpush1.bf16.msra.mxu0 %v1340
      %1640 = vmatprep.subr.bf16.mxu0 0
      %1641 = vmatpush2.bf16.msra.mxu0 0
      %1642 = vmatprep.subr.bf16.mxu0 0
      %1643 = vmatpush2.bf16.msra.mxu0 0
      %1644 = vmatprep.subr.bf16.mxu0 0
      %1645 = vmatpush2.bf16.msra.mxu0 0
      %1646 = vmatprep.subr.bf16.mxu0 0
      %1647 = vmatpush2.bf16.msra.mxu0 0
      %1648 = vmatprep.subr.bf16.mxu0 0
      %1649 = vmatpush2.bf16.msra.mxu0 0
      %1650 = vmatprep.subr.bf16.mxu0 0
      %1651 = vmatpush2.bf16.msra.mxu0 0
      %1652 = vmatprep.subr.bf16.mxu0 0
      %1653 = vmatpush2.bf16.msra.mxu0 0
      %1654 = vmatprep.subr.bf16.mxu0 0
      %1655 = vmatpush2.bf16.msra.mxu0 0
      %1656 = vmatprep.mubr.bf16.mxu0 0
      %1657 = vmatmul.mubr.bf16.gmra.mxu0 %v1622
      %v1658 = vpop.f32.mrf.mxu0
      %v1659 = vadd.f32 0.0, %v1658
      %v1660 = vpop.f32.mrf.mxu0
      %v1661 = vadd.f32 0.0, %v1660
      %v1662 = vpop.f32.mrf.mxu0
      %v1663 = vpop.f32.mrf.mxu0
      %1664 = vdwg.mxu0
      %v1665 = vadd.f32 %v1615, %v1659
      %v1666 = vadd.f32 %v1616, %v1661
      %v1667 = vxor.u32 %v1665, 2147483648
      %v1668 = vmul.f32 %v1667, 1.442695
      %v1669 = vpow.pop %v1668
      %v1670 = vadd.f32 %v1669, 1.0
      %v1671 = vrcp.pop %v1670
      %v1672 = vmul.f32 1.0, %v1671
      %v1673 = vtanh.pop %v1666
      %v1674 = vxor.u32 %v1666, 2147483648
      %v1675 = vmul.f32 %v1674, 1.442695
      %v1676 = vpow.pop %v1675
      %v1677 = vadd.f32 %v1676, 1.0
      %v1678 = vrcp.pop %v1677
      %v1679 = vmul.f32 1.0, %v1678
      %v1680 = vmul.f32 %v1672, %v1598
      %v1681 = vmul.f32 %v1672, %v1673
      %1683 = vrot.lane.b32.xlu0 %v1681, 64
      %v1684 = vpop.permute.xlu0 %1683
      %v1686 = vadd.f32 %v1680, %v1684
      %v1687 = vtanh.pop %v1686
      %v1688 = vmul.f32 %v1679, %v1687
      %1690 = vrot.lane.b32.xlu0 %v1688, 64
      %v1691 = vpop.permute.xlu0 %1690
      %s1693 = scalar_lea.vmem [#allocation3], 24
      %1694 = vst.msk [vmem:[%s1693] sm:$0xff] %vm1429, %v1691
      %1695 = vrot.lane.b32.xlu0 %v1688, 32
      %v1696 = vpop.permute.xlu0 %1695
      %s1698 = scalar_lea.vmem [#allocation4], 32
      %1699 = vst.msk [vmem:[%s1698] sm:$0xff] %vm1429, %v1696
      %s1700 = smul.u32 4, 2
      %s1701 = smul.addr %s1700, 8
      %s1702 = scalar_lea.vmem [#allocation2], %s1701
      %v1703 = vld [vmem:[%s1702] sm:$0xff]
      %v1704 = vld [vmem:[%s1702 + $0x8] sm:$0xff]
      %v1705 = vpack.c.bf16 %v1688, %v1688
      %1707 = vrot.lane.b32.xlu0 %v1705, 64
      %v1708 = vpop.permute.xlu0 %1707
      %v1710 = vsel %vm1356, %v1708, 0
      %1712 = vmatprep.subr.bf16.mxu0 0
      %1713 = vmatpush1.bf16.msra.mxu0 0
      %1714 = vmatprep.subr.bf16.mxu0 0
      %1715 = vmatpush1.bf16.msra.mxu0 0
      %1716 = vmatprep.subr.bf16.mxu0 0
      %1717 = vmatpush1.bf16.msra.mxu0 0
      %1718 = vmatprep.subr.bf16.mxu0 0
      %1719 = vmatpush1.bf16.msra.mxu0 0
      %1720 = vmatprep.subr.bf16.mxu0 %v1347
      %1721 = vmatpush1.bf16.msra.mxu0 %v1346
      %1722 = vmatprep.subr.bf16.mxu0 %v1345
      %1723 = vmatpush1.bf16.msra.mxu0 %v1344
      %1724 = vmatprep.subr.bf16.mxu0 %v1343
      %1725 = vmatpush1.bf16.msra.mxu0 %v1342
      %1726 = vmatprep.subr.bf16.mxu0 %v1341
      %1727 = vmatpush1.bf16.msra.mxu0 %v1340
      %1728 = vmatprep.subr.bf16.mxu0 0
      %1729 = vmatpush2.bf16.msra.mxu0 0
      %1730 = vmatprep.subr.bf16.mxu0 0
      %1731 = vmatpush2.bf16.msra.mxu0 0
      %1732 = vmatprep.subr.bf16.mxu0 0
      %1733 = vmatpush2.bf16.msra.mxu0 0
      %1734 = vmatprep.subr.bf16.mxu0 0
      %1735 = vmatpush2.bf16.msra.mxu0 0
      %1736 = vmatprep.subr.bf16.mxu0 0
      %1737 = vmatpush2.bf16.msra.mxu0 0
      %1738 = vmatprep.subr.bf16.mxu0 0
      %1739 = vmatpush2.bf16.msra.mxu0 0
      %1740 = vmatprep.subr.bf16.mxu0 0
      %1741 = vmatpush2.bf16.msra.mxu0 0
      %1742 = vmatprep.subr.bf16.mxu0 0
      %1743 = vmatpush2.bf16.msra.mxu0 0
      %1744 = vmatprep.mubr.bf16.mxu0 0
      %1745 = vmatmul.mubr.bf16.gmra.mxu0 %v1710
      %v1746 = vpop.f32.mrf.mxu0
      %v1747 = vadd.f32 0.0, %v1746
      %v1748 = vpop.f32.mrf.mxu0
      %v1749 = vadd.f32 0.0, %v1748
      %v1750 = vpop.f32.mrf.mxu0
      %v1751 = vpop.f32.mrf.mxu0
      %1752 = vdwg.mxu0
      %v1753 = vadd.f32 %v1703, %v1747
      %v1754 = vadd.f32 %v1704, %v1749
      %v1755 = vxor.u32 %v1753, 2147483648
      %v1756 = vmul.f32 %v1755, 1.442695
      %v1757 = vpow.pop %v1756
      %v1758 = vadd.f32 %v1757, 1.0
      %v1759 = vrcp.pop %v1758
      %v1760 = vmul.f32 1.0, %v1759
      %v1761 = vtanh.pop %v1754
      %v1762 = vxor.u32 %v1754, 2147483648
      %v1763 = vmul.f32 %v1762, 1.442695
      %v1764 = vpow.pop %v1763
      %v1765 = vadd.f32 %v1764, 1.0
      %v1766 = vrcp.pop %v1765
      %v1767 = vmul.f32 1.0, %v1766
      %v1768 = vmul.f32 %v1760, %v1686
      %v1769 = vmul.f32 %v1760, %v1761
      %1771 = vrot.lane.b32.xlu0 %v1769, 64
      %v1772 = vpop.permute.xlu0 %1771
      %v1774 = vadd.f32 %v1768, %v1772
      %v1775 = vtanh.pop %v1774
      %v1776 = vmul.f32 %v1767, %v1775
      %1778 = vrot.lane.b32.xlu0 %v1776, 64
      %v1779 = vpop.permute.xlu0 %1778
      %s1781 = scalar_lea.vmem [#allocation3], 32
      %1782 = vst.msk [vmem:[%s1781] sm:$0xff] %vm1429, %v1779
      %1783 = vrot.lane.b32.xlu0 %v1776, 32
      %v1784 = vpop.permute.xlu0 %1783
      %s1786 = scalar_lea.vmem [#allocation4], 24
      %1787 = vst.msk [vmem:[%s1786] sm:$0xff] %vm1429, %v1784
      %s1788 = smul.u32 5, 2
      %s1789 = smul.addr %s1788, 8
      %s1790 = scalar_lea.vmem [#allocation2], %s1789
      %v1791 = vld [vmem:[%s1790] sm:$0xff]
      %v1792 = vld [vmem:[%s1790 + $0x8] sm:$0xff]
      %v1793 = vpack.c.bf16 %v1776, %v1776
      %1795 = vrot.lane.b32.xlu0 %v1793, 64
      %v1796 = vpop.permute.xlu0 %1795
      %v1798 = vsel %vm1356, %v1796, 0
      %1800 = vmatprep.subr.bf16.mxu0 0
      %1801 = vmatpush1.bf16.msra.mxu0 0
      %1802 = vmatprep.subr.bf16.mxu0 0
      %1803 = vmatpush1.bf16.msra.mxu0 0
      %1804 = vmatprep.subr.bf16.mxu0 0
      %1805 = vmatpush1.bf16.msra.mxu0 0
      %1806 = vmatprep.subr.bf16.mxu0 0
      %1807 = vmatpush1.bf16.msra.mxu0 0
      %1808 = vmatprep.subr.bf16.mxu0 %v1347
      %1809 = vmatpush1.bf16.msra.mxu0 %v1346
      %1810 = vmatprep.subr.bf16.mxu0 %v1345
      %1811 = vmatpush1.bf16.msra.mxu0 %v1344
      %1812 = vmatprep.subr.bf16.mxu0 %v1343
      %1813 = vmatpush1.bf16.msra.mxu0 %v1342
      %1814 = vmatprep.subr.bf16.mxu0 %v1341
      %1815 = vmatpush1.bf16.msra.mxu0 %v1340
      %1816 = vmatprep.subr.bf16.mxu0 0
      %1817 = vmatpush2.bf16.msra.mxu0 0
      %1818 = vmatprep.subr.bf16.mxu0 0
      %1819 = vmatpush2.bf16.msra.mxu0 0
      %1820 = vmatprep.subr.bf16.mxu0 0
      %1821 = vmatpush2.bf16.msra.mxu0 0
      %1822 = vmatprep.subr.bf16.mxu0 0
      %1823 = vmatpush2.bf16.msra.mxu0 0
      %1824 = vmatprep.subr.bf16.mxu0 0
      %1825 = vmatpush2.bf16.msra.mxu0 0
      %1826 = vmatprep.subr.bf16.mxu0 0
      %1827 = vmatpush2.bf16.msra.mxu0 0
      %1828 = vmatprep.subr.bf16.mxu0 0
      %1829 = vmatpush2.bf16.msra.mxu0 0
      %1830 = vmatprep.subr.bf16.mxu0 0
      %1831 = vmatpush2.bf16.msra.mxu0 0
      %1832 = vmatprep.mubr.bf16.mxu0 0
      %1833 = vmatmul.mubr.bf16.gmra.mxu0 %v1798
      %v1834 = vpop.f32.mrf.mxu0
      %v1835 = vadd.f32 0.0, %v1834
      %v1836 = vpop.f32.mrf.mxu0
      %v1837 = vadd.f32 0.0, %v1836
      %v1838 = vpop.f32.mrf.mxu0
      %v1839 = vpop.f32.mrf.mxu0
      %1840 = vdwg.mxu0
      %v1841 = vadd.f32 %v1791, %v1835
      %v1842 = vadd.f32 %v1792, %v1837
      %v1843 = vxor.u32 %v1841, 2147483648
      %v1844 = vmul.f32 %v1843, 1.442695
      %v1845 = vpow.pop %v1844
      %v1846 = vadd.f32 %v1845, 1.0
      %v1847 = vrcp.pop %v1846
      %v1848 = vmul.f32 1.0, %v1847
      %v1849 = vtanh.pop %v1842
      %v1850 = vxor.u32 %v1842, 2147483648
      %v1851 = vmul.f32 %v1850, 1.442695
      %v1852 = vpow.pop %v1851
      %v1853 = vadd.f32 %v1852, 1.0
      %v1854 = vrcp.pop %v1853
      %v1855 = vmul.f32 1.0, %v1854
      %v1856 = vmul.f32 %v1848, %v1774
      %v1857 = vmul.f32 %v1848, %v1849
      %1859 = vrot.lane.b32.xlu0 %v1857, 64
      %v1860 = vpop.permute.xlu0 %1859
      %v1862 = vadd.f32 %v1856, %v1860
      %v1863 = vtanh.pop %v1862
      %v1864 = vmul.f32 %v1855, %v1863
      %1866 = vrot.lane.b32.xlu0 %v1864, 64
      %v1867 = vpop.permute.xlu0 %1866
      %s1869 = scalar_lea.vmem [#allocation3], 40
      %1870 = vst.msk [vmem:[%s1869] sm:$0xff] %vm1429, %v1867
      %1871 = vrot.lane.b32.xlu0 %v1864, 32
      %v1872 = vpop.permute.xlu0 %1871
      %s1874 = scalar_lea.vmem [#allocation4], 16
      %1875 = vst.msk [vmem:[%s1874] sm:$0xff] %vm1429, %v1872
      %s1876 = smul.u32 6, 2
      %s1877 = smul.addr %s1876, 8
      %s1878 = scalar_lea.vmem [#allocation2], %s1877
      %v1879 = vld [vmem:[%s1878] sm:$0xff]
      %v1880 = vld [vmem:[%s1878 + $0x8] sm:$0xff]
      %v1881 = vpack.c.bf16 %v1864, %v1864
      %1883 = vrot.lane.b32.xlu0 %v1881, 64
      %v1884 = vpop.permute.xlu0 %1883
      %v1886 = vsel %vm1356, %v1884, 0
      %1888 = vmatprep.subr.bf16.mxu0 0
      %1889 = vmatpush1.bf16.msra.mxu0 0
      %1890 = vmatprep.subr.bf16.mxu0 0
      %1891 = vmatpush1.bf16.msra.mxu0 0
      %1892 = vmatprep.subr.bf16.mxu0 0
      %1893 = vmatpush1.bf16.msra.mxu0 0
      %1894 = vmatprep.subr.bf16.mxu0 0
      %1895 = vmatpush1.bf16.msra.mxu0 0
      %1896 = vmatprep.subr.bf16.mxu0 %v1347
      %1897 = vmatpush1.bf16.msra.mxu0 %v1346
      %1898 = vmatprep.subr.bf16.mxu0 %v1345
      %1899 = vmatpush1.bf16.msra.mxu0 %v1344
      %1900 = vmatprep.subr.bf16.mxu0 %v1343
      %1901 = vmatpush1.bf16.msra.mxu0 %v1342
      %1902 = vmatprep.subr.bf16.mxu0 %v1341
      %1903 = vmatpush1.bf16.msra.mxu0 %v1340
      %1904 = vmatprep.subr.bf16.mxu0 0
      %1905 = vmatpush2.bf16.msra.mxu0 0
      %1906 = vmatprep.subr.bf16.mxu0 0
      %1907 = vmatpush2.bf16.msra.mxu0 0
      %1908 = vmatprep.subr.bf16.mxu0 0
      %1909 = vmatpush2.bf16.msra.mxu0 0
      %1910 = vmatprep.subr.bf16.mxu0 0
      %1911 = vmatpush2.bf16.msra.mxu0 0
      %1912 = vmatprep.subr.bf16.mxu0 0
      %1913 = vmatpush2.bf16.msra.mxu0 0
      %1914 = vmatprep.subr.bf16.mxu0 0
      %1915 = vmatpush2.bf16.msra.mxu0 0
      %1916 = vmatprep.subr.bf16.mxu0 0
      %1917 = vmatpush2.bf16.msra.mxu0 0
      %1918 = vmatprep.subr.bf16.mxu0 0
      %1919 = vmatpush2.bf16.msra.mxu0 0
      %1920 = vmatprep.mubr.bf16.mxu0 0
      %1921 = vmatmul.mubr.bf16.gmra.mxu0 %v1886
      %v1922 = vpop.f32.mrf.mxu0
      %v1923 = vadd.f32 0.0, %v1922
      %v1924 = vpop.f32.mrf.mxu0
      %v1925 = vadd.f32 0.0, %v1924
      %v1926 = vpop.f32.mrf.mxu0
      %v1927 = vpop.f32.mrf.mxu0
      %1928 = vdwg.mxu0
      %v1929 = vadd.f32 %v1879, %v1923
      %v1930 = vadd.f32 %v1880, %v1925
      %v1931 = vxor.u32 %v1929, 2147483648
      %v1932 = vmul.f32 %v1931, 1.442695
      %v1933 = vpow.pop %v1932
      %v1934 = vadd.f32 %v1933, 1.0
      %v1935 = vrcp.pop %v1934
      %v1936 = vmul.f32 1.0, %v1935
      %v1937 = vtanh.pop %v1930
      %v1938 = vxor.u32 %v1930, 2147483648
      %v1939 = vmul.f32 %v1938, 1.442695
      %v1940 = vpow.pop %v1939
      %v1941 = vadd.f32 %v1940, 1.0
      %v1942 = vrcp.pop %v1941
      %v1943 = vmul.f32 1.0, %v1942
      %v1944 = vmul.f32 %v1936, %v1862
      %v1945 = vmul.f32 %v1936, %v1937
      %1947 = vrot.lane.b32.xlu0 %v1945, 64
      %v1948 = vpop.permute.xlu0 %1947
      %v1950 = vadd.f32 %v1944, %v1948
      %v1951 = vtanh.pop %v1950
      %v1952 = vmul.f32 %v1943, %v1951
      %1954 = vrot.lane.b32.xlu0 %v1952, 64
      %v1955 = vpop.permute.xlu0 %1954
      %s1957 = scalar_lea.vmem [#allocation3], 48
      %1958 = vst.msk [vmem:[%s1957] sm:$0xff] %vm1429, %v1955
      %1959 = vrot.lane.b32.xlu0 %v1952, 32
      %v1960 = vpop.permute.xlu0 %1959
      %s1962 = scalar_lea.vmem [#allocation4], 8
      %1963 = vst.msk [vmem:[%s1962] sm:$0xff] %vm1429, %v1960
      %s1964 = smul.u32 7, 2
      %s1965 = smul.addr %s1964, 8
      %s1966 = scalar_lea.vmem [#allocation2], %s1965
      %v1967 = vld [vmem:[%s1966] sm:$0xff]
      %v1968 = vld [vmem:[%s1966 + $0x8] sm:$0xff]
      %v1969 = vpack.c.bf16 %v1952, %v1952
      %1971 = vrot.lane.b32.xlu0 %v1969, 64
      %v1972 = vpop.permute.xlu0 %1971
      %v1974 = vsel %vm1356, %v1972, 0
      %1976 = vmatprep.subr.bf16.mxu0 0
      %1977 = vmatpush1.bf16.msra.mxu0 0
      %1978 = vmatprep.subr.bf16.mxu0 0
      %1979 = vmatpush1.bf16.msra.mxu0 0
      %1980 = vmatprep.subr.bf16.mxu0 0
      %1981 = vmatpush1.bf16.msra.mxu0 0
      %1982 = vmatprep.subr.bf16.mxu0 0
      %1983 = vmatpush1.bf16.msra.mxu0 0
      %1984 = vmatprep.subr.bf16.mxu0 %v1347
      %1985 = vmatpush1.bf16.msra.mxu0 %v1346
      %1986 = vmatprep.subr.bf16.mxu0 %v1345
      %1987 = vmatpush1.bf16.msra.mxu0 %v1344
      %1988 = vmatprep.subr.bf16.mxu0 %v1343
      %1989 = vmatpush1.bf16.msra.mxu0 %v1342
      %1990 = vmatprep.subr.bf16.mxu0 %v1341
      %1991 = vmatpush1.bf16.msra.mxu0 %v1340
      %1992 = vmatprep.subr.bf16.mxu0 0
      %1993 = vmatpush2.bf16.msra.mxu0 0
      %1994 = vmatprep.subr.bf16.mxu0 0
      %1995 = vmatpush2.bf16.msra.mxu0 0
      %1996 = vmatprep.subr.bf16.mxu0 0
      %1997 = vmatpush2.bf16.msra.mxu0 0
      %1998 = vmatprep.subr.bf16.mxu0 0
      %1999 = vmatpush2.bf16.msra.mxu0 0
      %2000 = vmatprep.subr.bf16.mxu0 0
      %2001 = vmatpush2.bf16.msra.mxu0 0
      %2002 = vmatprep.subr.bf16.mxu0 0
      %2003 = vmatpush2.bf16.msra.mxu0 0
      %2004 = vmatprep.subr.bf16.mxu0 0
      %2005 = vmatpush2.bf16.msra.mxu0 0
      %2006 = vmatprep.subr.bf16.mxu0 0
      %2007 = vmatpush2.bf16.msra.mxu0 0
      %2008 = vmatprep.mubr.bf16.mxu0 0
      %2009 = vmatmul.mubr.bf16.gmra.mxu0 %v1974
      %v2010 = vpop.f32.mrf.mxu0
      %v2011 = vadd.f32 0.0, %v2010
      %v2012 = vpop.f32.mrf.mxu0
      %v2013 = vadd.f32 0.0, %v2012
      %v2014 = vpop.f32.mrf.mxu0
      %v2015 = vpop.f32.mrf.mxu0
      %2016 = vdwg.mxu0
      %v2017 = vadd.f32 %v1967, %v2011
      %v2018 = vadd.f32 %v1968, %v2013
      %v2019 = vxor.u32 %v2017, 2147483648
      %v2020 = vmul.f32 %v2019, 1.442695
      %v2021 = vpow.pop %v2020
      %v2022 = vadd.f32 %v2021, 1.0
      %v2023 = vrcp.pop %v2022
      %v2024 = vmul.f32 1.0, %v2023
      %v2025 = vtanh.pop %v2018
      %v2026 = vxor.u32 %v2018, 2147483648
      %v2027 = vmul.f32 %v2026, 1.442695
      %v2028 = vpow.pop %v2027
      %v2029 = vadd.f32 %v2028, 1.0
      %v2030 = vrcp.pop %v2029
      %v2031 = vmul.f32 1.0, %v2030
      %v2032 = vmul.f32 %v2024, %v1950
      %v2033 = vmul.f32 %v2024, %v2025
      %2035 = vrot.lane.b32.xlu0 %v2033, 64
      %v2036 = vpop.permute.xlu0 %2035
      %v2038 = vadd.f32 %v2032, %v2036
      %v2039 = vtanh.pop %v2038
      %v2040 = vmul.f32 %v2031, %v2039
      %2042 = vrot.lane.b32.xlu0 %v2040, 64
      %v2043 = vpop.permute.xlu0 %2042
      %s2045 = scalar_lea.vmem [#allocation3], 56
      %2046 = vst.msk [vmem:[%s2045] sm:$0xff] %vm1429, %v2043
      %2047 = vrot.lane.b32.xlu0 %v2040, 32
      %v2048 = vpop.permute.xlu0 %2047
      %2050 = vst.msk [vmem:[#allocation4] sm:$0xff] %vm1429, %v2048
      %v2051 = vld [vmem:[#allocation3] sm:$0xff]
      %v2052 = vld [vmem:[#allocation3 + $0x8] sm:$0xff]
      %v2053 = vld [vmem:[#allocation3 + $0x10] sm:$0xff]
      %v2054 = vld [vmem:[#allocation3 + $0x18] sm:$0xff]
      %v2055 = vld [vmem:[#allocation3 + $0x20] sm:$0xff]
      %v2056 = vld [vmem:[#allocation3 + $0x28] sm:$0xff]
      %v2057 = vld [vmem:[#allocation3 + $0x30] sm:$0xff]
      %v2058 = vld [vmem:[#allocation3 + $0x38] sm:$0xff]
      %v2059 = vpack.c.bf16 %v2052, %v2051
      %v2060 = vpack.c.bf16 %v2054, %v2053
      %v2061 = vpack.c.bf16 %v2056, %v2055
      %v2062 = vpack.c.bf16 %v2058, %v2057
      %v2063 = vld [vmem:[%s4] sm:$0xf]
      %v2064 = vld [vmem:[%s4 + $0x4] sm:$0xf]
      %v2065 = vld [vmem:[%s4 + $0x8] sm:$0xf]
      %v2066 = vld [vmem:[%s4 + $0xc] sm:$0xf]
      %v2067 = vld [vmem:[#allocation4] sm:$0xff]
      %v2068 = vld [vmem:[#allocation4 + $0x8] sm:$0xff]
      %v2069 = vld [vmem:[#allocation4 + $0x10] sm:$0xff]
      %v2070 = vld [vmem:[#allocation4 + $0x18] sm:$0xff]
      %v2071 = vld [vmem:[#allocation4 + $0x20] sm:$0xff]
      %v2072 = vld [vmem:[#allocation4 + $0x28] sm:$0xff]
      %v2073 = vld [vmem:[#allocation4 + $0x30] sm:$0xff]
      %v2074 = vld [vmem:[#allocation4 + $0x38] sm:$0xff]
      %v2075 = vpack.c.bf16 %v2068, %v2067
      %v2076 = vpack.c.bf16 %v2070, %v2069
      %v2077 = vpack.c.bf16 %v2072, %v2071
      %v2078 = vpack.c.bf16 %v2074, %v2073
      %v2079 = vld [vmem:[%s5] sm:$0xf]
      %v2080 = vld [vmem:[%s5 + $0x4] sm:$0xf]
      %v2081 = vld [vmem:[%s5 + $0x8] sm:$0xf]
      %v2082 = vld [vmem:[%s5 + $0xc] sm:$0xf]
      %v2087 = vunpack.c.l.b16 %v2079
      %v2088 = vunpack.c.l.b16 %v2080
      %v2089 = vunpack.c.l.b16 %v2081
      %v2090 = vunpack.c.l.b16 %v2082
      %v2091 = vpack.c.b16 %v2088, %v2087
      %v2092 = vpack.c.b16 %v2090, %v2089
      %v2096 = vsel %vm1429, %v2075, 0
      %v2099 = vsel %vm1429, %v2076, 0
      %v2102 = vsel %vm1429, %v2077, 0
      %v2105 = vsel %vm1429, %v2078, 0
      %2107 = vmatprep.subr.bf16.mxu0 0
      %2108 = vmatpush1.bf16.msra.mxu0 0
      %2109 = vmatprep.subr.bf16.mxu0 0
      %2110 = vmatpush1.bf16.msra.mxu0 0
      %2111 = vmatprep.subr.bf16.mxu0 0
      %2112 = vmatpush1.bf16.msra.mxu0 0
      %2113 = vmatprep.subr.bf16.mxu0 0
      %2114 = vmatpush1.bf16.msra.mxu0 0
      %2115 = vmatprep.subr.bf16.mxu0 0
      %2116 = vmatpush1.bf16.msra.mxu0 0
      %2117 = vmatprep.subr.bf16.mxu0 0
      %2118 = vmatpush1.bf16.msra.mxu0 0
      %2119 = vmatprep.subr.bf16.mxu0 0
      %2120 = vmatpush1.bf16.msra.mxu0 %v2092
      %2121 = vmatprep.subr.bf16.mxu0 0
      %2122 = vmatpush1.bf16.msra.mxu0 %v2091
      %2123 = vmatprep.subr.bf16.mxu0 0
      %2124 = vmatpush2.bf16.msra.mxu0 0
      %2125 = vmatprep.subr.bf16.mxu0 0
      %2126 = vmatpush2.bf16.msra.mxu0 0
      %2127 = vmatprep.subr.bf16.mxu0 0
      %2128 = vmatpush2.bf16.msra.mxu0 0
      %2129 = vmatprep.subr.bf16.mxu0 0
      %2130 = vmatpush2.bf16.msra.mxu0 0
      %2131 = vmatprep.subr.bf16.mxu0 0
      %2132 = vmatpush2.bf16.msra.mxu0 0
      %2133 = vmatprep.subr.bf16.mxu0 0
      %2134 = vmatpush2.bf16.msra.mxu0 0
      %2135 = vmatprep.subr.bf16.mxu0 0
      %2136 = vmatpush2.bf16.msra.mxu0 0
      %2137 = vmatprep.subr.bf16.mxu0 0
      %2138 = vmatpush2.bf16.msra.mxu0 0
      %2139 = vmatprep.mubr.bf16.mxu0 0
      %2140 = vmatmul.mubr.bf16.gmra.mxu0 %v2096
      %v2141 = vpop.f32.mrf.mxu0
      %v2142 = vadd.f32 0.0, %v2141
      %v2143 = vpop.f32.mrf.mxu0
      %v2144 = vpop.f32.mrf.mxu0
      %v2145 = vadd.f32 0.0, %v2144
      %v2146 = vpop.f32.mrf.mxu0
      %2147 = vmatprep.mubr.bf16.mxu0 0
      %2148 = vmatmul.mubr.bf16.gmra.mxu0 %v2099
      %v2149 = vpop.f32.mrf.mxu0
      %v2150 = vadd.f32 0.0, %v2149
      %v2151 = vpop.f32.mrf.mxu0
      %v2152 = vpop.f32.mrf.mxu0
      %v2153 = vadd.f32 0.0, %v2152
      %v2154 = vpop.f32.mrf.mxu0
      %2155 = vmatprep.mubr.bf16.mxu0 0
      %2156 = vmatmul.mubr.bf16.gmra.mxu0 %v2102
      %v2157 = vpop.f32.mrf.mxu0
      %v2158 = vadd.f32 0.0, %v2157
      %v2159 = vpop.f32.mrf.mxu0
      %v2160 = vpop.f32.mrf.mxu0
      %v2161 = vadd.f32 0.0, %v2160
      %v2162 = vpop.f32.mrf.mxu0
      %2163 = vmatprep.mubr.bf16.mxu0 0
      %2164 = vmatmul.mubr.bf16.gmra.mxu0 %v2105
      %v2165 = vpop.f32.mrf.mxu0
      %v2166 = vadd.f32 0.0, %v2165
      %v2167 = vpop.f32.mrf.mxu0
      %v2168 = vpop.f32.mrf.mxu0
      %v2169 = vadd.f32 0.0, %v2168
      %v2170 = vpop.f32.mrf.mxu0
      %2171 = vdwg.mxu0
      %v2176 = vunpack.c.l.b16 %v2063
      %v2177 = vunpack.c.l.b16 %v2064
      %v2178 = vunpack.c.l.b16 %v2065
      %v2179 = vunpack.c.l.b16 %v2066
      %v2180 = vpack.c.b16 %v2177, %v2176
      %v2181 = vpack.c.b16 %v2179, %v2178
      %v2185 = vsel %vm1429, %v2059, 0
      %v2188 = vsel %vm1429, %v2060, 0
      %v2191 = vsel %vm1429, %v2061, 0
      %v2194 = vsel %vm1429, %v2062, 0
      %2196 = vmatprep.subr.bf16.mxu0 0
      %2197 = vmatpush1.bf16.msra.mxu0 0
      %2198 = vmatprep.subr.bf16.mxu0 0
      %2199 = vmatpush1.bf16.msra.mxu0 0
      %2200 = vmatprep.subr.bf16.mxu0 0
      %2201 = vmatpush1.bf16.msra.mxu0 0
      %2202 = vmatprep.subr.bf16.mxu0 0
      %2203 = vmatpush1.bf16.msra.mxu0 0
      %2204 = vmatprep.subr.bf16.mxu0 0
      %2205 = vmatpush1.bf16.msra.mxu0 0
      %2206 = vmatprep.subr.bf16.mxu0 0
      %2207 = vmatpush1.bf16.msra.mxu0 0
      %2208 = vmatprep.subr.bf16.mxu0 0
      %2209 = vmatpush1.bf16.msra.mxu0 %v2181
      %2210 = vmatprep.subr.bf16.mxu0 0
      %2211 = vmatpush1.bf16.msra.mxu0 %v2180
      %2212 = vmatprep.subr.bf16.mxu0 0
      %2213 = vmatpush2.bf16.msra.mxu0 0
      %2214 = vmatprep.subr.bf16.mxu0 0
      %2215 = vmatpush2.bf16.msra.mxu0 0
      %2216 = vmatprep.subr.bf16.mxu0 0
      %2217 = vmatpush2.bf16.msra.mxu0 0
      %2218 = vmatprep.subr.bf16.mxu0 0
      %2219 = vmatpush2.bf16.msra.mxu0 0
      %2220 = vmatprep.subr.bf16.mxu0 0
      %2221 = vmatpush2.bf16.msra.mxu0 0
      %2222 = vmatprep.subr.bf16.mxu0 0
      %2223 = vmatpush2.bf16.msra.mxu0 0
      %2224 = vmatprep.subr.bf16.mxu0 0
      %2225 = vmatpush2.bf16.msra.mxu0 0
      %2226 = vmatprep.subr.bf16.mxu0 0
      %2227 = vmatpush2.bf16.msra.mxu0 0
      %2228 = vmatprep.mubr.bf16.mxu0 0
      %2229 = vmatmul.mubr.bf16.gmra.mxu0 %v2185
      %v2230 = vpop.f32.mrf.mxu0
      %v2231 = vadd.f32 %v2142, %v2230
      %v2232 = vpop.f32.mrf.mxu0
      %v2233 = vpop.f32.mrf.mxu0
      %v2234 = vadd.f32 %v2145, %v2233
      %v2235 = vpop.f32.mrf.mxu0
      %2236 = vmatprep.mubr.bf16.mxu0 0
      %2237 = vmatmul.mubr.bf16.gmra.mxu0 %v2188
      %v2238 = vpop.f32.mrf.mxu0
      %v2239 = vadd.f32 %v2150, %v2238
      %v2240 = vpop.f32.mrf.mxu0
      %v2241 = vpop.f32.mrf.mxu0
      %v2242 = vadd.f32 %v2153, %v2241
      %v2243 = vpop.f32.mrf.mxu0
      %2244 = vmatprep.mubr.bf16.mxu0 0
      %2245 = vmatmul.mubr.bf16.gmra.mxu0 %v2191
      %v2246 = vpop.f32.mrf.mxu0
      %v2247 = vadd.f32 %v2158, %v2246
      %v2248 = vpop.f32.mrf.mxu0
      %v2249 = vpop.f32.mrf.mxu0
      %v2250 = vadd.f32 %v2161, %v2249
      %v2251 = vpop.f32.mrf.mxu0
      %2252 = vmatprep.mubr.bf16.mxu0 0
      %2253 = vmatmul.mubr.bf16.gmra.mxu0 %v2194
      %v2254 = vpop.f32.mrf.mxu0
      %v2255 = vadd.f32 %v2166, %v2254
      %v2256 = vpop.f32.mrf.mxu0
      %v2257 = vpop.f32.mrf.mxu0
      %v2258 = vadd.f32 %v2169, %v2257
      %v2259 = vpop.f32.mrf.mxu0
      %2260 = vdwg.mxu0
      %2269 = vrot.lane.b32.xlu0 %v2231, 96
      %v2270 = vpop.permute.xlu0 %2269
      %2271 = vrot.lane.b32.xlu0 %v2234, 96
      %v2272 = vpop.permute.xlu0 %2271
      %2273 = vrot.lane.b32.xlu0 %v2239, 96
      %v2274 = vpop.permute.xlu0 %2273
      %2275 = vrot.lane.b32.xlu0 %v2242, 96
      %v2276 = vpop.permute.xlu0 %2275
      %2277 = vrot.lane.b32.xlu0 %v2247, 96
      %v2278 = vpop.permute.xlu0 %2277
      %2279 = vrot.lane.b32.xlu0 %v2250, 96
      %v2280 = vpop.permute.xlu0 %2279
      %2281 = vrot.lane.b32.xlu0 %v2255, 96
      %v2282 = vpop.permute.xlu0 %2281
      %2283 = vrot.lane.b32.xlu0 %v2258, 96
      %v2284 = vpop.permute.xlu0 %2283
      %v2293 = vadd.f32 %v2231, %v2270
      %v2294 = vadd.f32 %v2231, %v2272
      %v2295 = vadd.f32 %v2231, %v2274
      %v2296 = vadd.f32 %v2231, %v2276
      %v2297 = vadd.f32 %v2231, %v2278
      %v2298 = vadd.f32 %v2231, %v2280
      %v2299 = vadd.f32 %v2231, %v2282
      %v2300 = vadd.f32 %v2231, %v2284
      %v2301 = vadd.f32 %v2234, %v2270
      %v2302 = vadd.f32 %v2234, %v2272
      %v2303 = vadd.f32 %v2234, %v2274
      %v2304 = vadd.f32 %v2234, %v2276
      %v2305 = vadd.f32 %v2234, %v2278
      %v2306 = vadd.f32 %v2234, %v2280
      %v2307 = vadd.f32 %v2234, %v2282
      %v2308 = vadd.f32 %v2234, %v2284
      %v2309 = vadd.f32 %v2239, %v2270
      %v2310 = vadd.f32 %v2239, %v2272
      %v2311 = vadd.f32 %v2239, %v2274
      %v2312 = vadd.f32 %v2239, %v2276
      %v2313 = vadd.f32 %v2239, %v2278
      %v2314 = vadd.f32 %v2239, %v2280
      %v2315 = vadd.f32 %v2239, %v2282
      %v2316 = vadd.f32 %v2239, %v2284
      %v2317 = vadd.f32 %v2242, %v2270
      %v2318 = vadd.f32 %v2242, %v2272
      %v2319 = vadd.f32 %v2242, %v2274
      %v2320 = vadd.f32 %v2242, %v2276
      %v2321 = vadd.f32 %v2242, %v2278
      %v2322 = vadd.f32 %v2242, %v2280
      %v2323 = vadd.f32 %v2242, %v2282
      %v2324 = vadd.f32 %v2242, %v2284
      %v2325 = vadd.f32 %v2247, %v2270
      %v2326 = vadd.f32 %v2247, %v2272
      %v2327 = vadd.f32 %v2247, %v2274
      %v2328 = vadd.f32 %v2247, %v2276
      %v2329 = vadd.f32 %v2247, %v2278
      %v2330 = vadd.f32 %v2247, %v2280
      %v2331 = vadd.f32 %v2247, %v2282
      %v2332 = vadd.f32 %v2247, %v2284
      %v2333 = vadd.f32 %v2250, %v2270
      %v2334 = vadd.f32 %v2250, %v2272
      %v2335 = vadd.f32 %v2250, %v2274
      %v2336 = vadd.f32 %v2250, %v2276
      %v2337 = vadd.f32 %v2250, %v2278
      %v2338 = vadd.f32 %v2250, %v2280
      %v2339 = vadd.f32 %v2250, %v2282
      %v2340 = vadd.f32 %v2250, %v2284
      %v2341 = vadd.f32 %v2255, %v2270
      %v2342 = vadd.f32 %v2255, %v2272
      %v2343 = vadd.f32 %v2255, %v2274
      %v2344 = vadd.f32 %v2255, %v2276
      %v2345 = vadd.f32 %v2255, %v2278
      %v2346 = vadd.f32 %v2255, %v2280
      %v2347 = vadd.f32 %v2255, %v2282
      %v2348 = vadd.f32 %v2255, %v2284
      %v2349 = vadd.f32 %v2258, %v2270
      %v2350 = vadd.f32 %v2258, %v2272
      %v2351 = vadd.f32 %v2258, %v2274
      %v2352 = vadd.f32 %v2258, %v2276
      %v2353 = vadd.f32 %v2258, %v2278
      %v2354 = vadd.f32 %v2258, %v2280
      %v2355 = vadd.f32 %v2258, %v2282
      %v2356 = vadd.f32 %v2258, %v2284
      %v2357 = vld [vmem:[%s6] sm:$0x1]
      %v2359 = vlaneseq
      %v2360 = vshrl.u32 %v2359, 7
      %v2361 = vsub.s32 0, %v2360
      %v2362 = vrot.slane %v2357, %v2361
      %v2364 = vadd.f32 %v2293, %v2362
      %v2365 = vadd.f32 %v2294, %v2362
      %v2366 = vadd.f32 %v2295, %v2362
      %v2367 = vadd.f32 %v2296, %v2362
      %v2368 = vadd.f32 %v2297, %v2362
      %v2369 = vadd.f32 %v2298, %v2362
      %v2370 = vadd.f32 %v2299, %v2362
      %v2371 = vadd.f32 %v2300, %v2362
      %v2372 = vadd.f32 %v2301, %v2362
      %v2373 = vadd.f32 %v2302, %v2362
      %v2374 = vadd.f32 %v2303, %v2362
      %v2375 = vadd.f32 %v2304, %v2362
      %v2376 = vadd.f32 %v2305, %v2362
      %v2377 = vadd.f32 %v2306, %v2362
      %v2378 = vadd.f32 %v2307, %v2362
      %v2379 = vadd.f32 %v2308, %v2362
      %v2380 = vadd.f32 %v2309, %v2362
      %v2381 = vadd.f32 %v2310, %v2362
      %v2382 = vadd.f32 %v2311, %v2362
      %v2383 = vadd.f32 %v2312, %v2362
      %v2384 = vadd.f32 %v2313, %v2362
      %v2385 = vadd.f32 %v2314, %v2362
      %v2386 = vadd.f32 %v2315, %v2362
      %v2387 = vadd.f32 %v2316, %v2362
      %v2388 = vadd.f32 %v2317, %v2362
      %v2389 = vadd.f32 %v2318, %v2362
      %v2390 = vadd.f32 %v2319, %v2362
      %v2391 = vadd.f32 %v2320, %v2362
      %v2392 = vadd.f32 %v2321, %v2362
      %v2393 = vadd.f32 %v2322, %v2362
      %v2394 = vadd.f32 %v2323, %v2362
      %v2395 = vadd.f32 %v2324, %v2362
      %v2396 = vadd.f32 %v2325, %v2362
      %v2397 = vadd.f32 %v2326, %v2362
      %v2398 = vadd.f32 %v2327, %v2362
      %v2399 = vadd.f32 %v2328, %v2362
      %v2400 = vadd.f32 %v2329, %v2362
      %v2401 = vadd.f32 %v2330, %v2362
      %v2402 = vadd.f32 %v2331, %v2362
      %v2403 = vadd.f32 %v2332, %v2362
      %v2404 = vadd.f32 %v2333, %v2362
      %v2405 = vadd.f32 %v2334, %v2362
      %v2406 = vadd.f32 %v2335, %v2362
      %v2407 = vadd.f32 %v2336, %v2362
      %v2408 = vadd.f32 %v2337, %v2362
      %v2409 = vadd.f32 %v2338, %v2362
      %v2410 = vadd.f32 %v2339, %v2362
      %v2411 = vadd.f32 %v2340, %v2362
      %v2412 = vadd.f32 %v2341, %v2362
      %v2413 = vadd.f32 %v2342, %v2362
      %v2414 = vadd.f32 %v2343, %v2362
      %v2415 = vadd.f32 %v2344, %v2362
      %v2416 = vadd.f32 %v2345, %v2362
      %v2417 = vadd.f32 %v2346, %v2362
      %v2418 = vadd.f32 %v2347, %v2362
      %v2419 = vadd.f32 %v2348, %v2362
      %v2420 = vadd.f32 %v2349, %v2362
      %v2421 = vadd.f32 %v2350, %v2362
      %v2422 = vadd.f32 %v2351, %v2362
      %v2423 = vadd.f32 %v2352, %v2362
      %v2424 = vadd.f32 %v2353, %v2362
      %v2425 = vadd.f32 %v2354, %v2362
      %v2426 = vadd.f32 %v2355, %v2362
      %v2427 = vadd.f32 %v2356, %v2362
      %v2428 = vmax.f32 %v2364, 0.0
      %v2429 = vmax.f32 %v2365, 0.0
      %v2430 = vmax.f32 %v2366, 0.0
      %v2431 = vmax.f32 %v2367, 0.0
      %v2432 = vmax.f32 %v2368, 0.0
      %v2433 = vmax.f32 %v2369, 0.0
      %v2434 = vmax.f32 %v2370, 0.0
      %v2435 = vmax.f32 %v2371, 0.0
      %v2436 = vmax.f32 %v2372, 0.0
      %v2437 = vmax.f32 %v2373, 0.0
      %v2438 = vmax.f32 %v2374, 0.0
      %v2439 = vmax.f32 %v2375, 0.0
      %v2440 = vmax.f32 %v2376, 0.0
      %v2441 = vmax.f32 %v2377, 0.0
      %v2442 = vmax.f32 %v2378, 0.0
      %v2443 = vmax.f32 %v2379, 0.0
      %v2444 = vmax.f32 %v2380, 0.0
      %v2445 = vmax.f32 %v2381, 0.0
      %v2446 = vmax.f32 %v2382, 0.0
      %v2447 = vmax.f32 %v2383, 0.0
      %v2448 = vmax.f32 %v2384, 0.0
      %v2449 = vmax.f32 %v2385, 0.0
      %v2450 = vmax.f32 %v2386, 0.0
      %v2451 = vmax.f32 %v2387, 0.0
      %v2452 = vmax.f32 %v2388, 0.0
      %v2453 = vmax.f32 %v2389, 0.0
      %v2454 = vmax.f32 %v2390, 0.0
      %v2455 = vmax.f32 %v2391, 0.0
      %v2456 = vmax.f32 %v2392, 0.0
      %v2457 = vmax.f32 %v2393, 0.0
      %v2458 = vmax.f32 %v2394, 0.0
      %v2459 = vmax.f32 %v2395, 0.0
      %v2460 = vmax.f32 %v2396, 0.0
      %v2461 = vmax.f32 %v2397, 0.0
      %v2462 = vmax.f32 %v2398, 0.0
      %v2463 = vmax.f32 %v2399, 0.0
      %v2464 = vmax.f32 %v2400, 0.0
      %v2465 = vmax.f32 %v2401, 0.0
      %v2466 = vmax.f32 %v2402, 0.0
      %v2467 = vmax.f32 %v2403, 0.0
      %v2468 = vmax.f32 %v2404, 0.0
      %v2469 = vmax.f32 %v2405, 0.0
      %v2470 = vmax.f32 %v2406, 0.0
      %v2471 = vmax.f32 %v2407, 0.0
      %v2472 = vmax.f32 %v2408, 0.0
      %v2473 = vmax.f32 %v2409, 0.0
      %v2474 = vmax.f32 %v2410, 0.0
      %v2475 = vmax.f32 %v2411, 0.0
      %v2476 = vmax.f32 %v2412, 0.0
      %v2477 = vmax.f32 %v2413, 0.0
      %v2478 = vmax.f32 %v2414, 0.0
      %v2479 = vmax.f32 %v2415, 0.0
      %v2480 = vmax.f32 %v2416, 0.0
      %v2481 = vmax.f32 %v2417, 0.0
      %v2482 = vmax.f32 %v2418, 0.0
      %v2483 = vmax.f32 %v2419, 0.0
      %v2484 = vmax.f32 %v2420, 0.0
      %v2485 = vmax.f32 %v2421, 0.0
      %v2486 = vmax.f32 %v2422, 0.0
      %v2487 = vmax.f32 %v2423, 0.0
      %v2488 = vmax.f32 %v2424, 0.0
      %v2489 = vmax.f32 %v2425, 0.0
      %v2490 = vmax.f32 %v2426, 0.0
      %v2491 = vmax.f32 %v2427, 0.0
      %v2492 = vpack.c.bf16 %v2429, %v2428
      %v2493 = vpack.c.bf16 %v2431, %v2430
      %v2494 = vpack.c.bf16 %v2433, %v2432
      %v2495 = vpack.c.bf16 %v2435, %v2434
      %v2496 = vpack.c.bf16 %v2437, %v2436
      %v2497 = vpack.c.bf16 %v2439, %v2438
      %v2498 = vpack.c.bf16 %v2441, %v2440
      %v2499 = vpack.c.bf16 %v2443, %v2442
      %v2500 = vpack.c.bf16 %v2445, %v2444
      %v2501 = vpack.c.bf16 %v2447, %v2446
      %v2502 = vpack.c.bf16 %v2449, %v2448
      %v2503 = vpack.c.bf16 %v2451, %v2450
      %v2504 = vpack.c.bf16 %v2453, %v2452
      %v2505 = vpack.c.bf16 %v2455, %v2454
      %v2506 = vpack.c.bf16 %v2457, %v2456
      %v2507 = vpack.c.bf16 %v2459, %v2458
      %v2508 = vpack.c.bf16 %v2461, %v2460
      %v2509 = vpack.c.bf16 %v2463, %v2462
      %v2510 = vpack.c.bf16 %v2465, %v2464
      %v2511 = vpack.c.bf16 %v2467, %v2466
      %v2512 = vpack.c.bf16 %v2469, %v2468
      %v2513 = vpack.c.bf16 %v2471, %v2470
      %v2514 = vpack.c.bf16 %v2473, %v2472
      %v2515 = vpack.c.bf16 %v2475, %v2474
      %v2516 = vpack.c.bf16 %v2477, %v2476
      %v2517 = vpack.c.bf16 %v2479, %v2478
      %v2518 = vpack.c.bf16 %v2481, %v2480
      %v2519 = vpack.c.bf16 %v2483, %v2482
      %v2520 = vpack.c.bf16 %v2485, %v2484
      %v2521 = vpack.c.bf16 %v2487, %v2486
      %v2522 = vpack.c.bf16 %v2489, %v2488
      %v2523 = vpack.c.bf16 %v2491, %v2490
      %v2524 = vld [vmem:[%s7] sm:$0xf]
      %v2525 = vld [vmem:[%s7 + $0x4] sm:$0xf]
      %v2526 = vld [vmem:[%s7 + $0x8] sm:$0xf]
      %v2527 = vld [vmem:[%s7 + $0xc] sm:$0xf]
      %v2528 = vld [vmem:[%s8] sm:$0x1]
      %v2530 = vlaneseq
      %v2531 = vshrl.u32 %v2530, 7
      %v2532 = vsub.s32 0, %v2531
      %v2533 = vrot.slane %v2528, %v2532
      %v2539 = vunpack.c.l.b16 %v2524
      %v2540 = vunpack.c.l.b16 %v2525
      %v2541 = vunpack.c.l.b16 %v2526
      %v2542 = vunpack.c.l.b16 %v2527
      %v2543 = vpack.c.b16 %v2540, %v2539
      %v2544 = vpack.c.b16 %v2542, %v2541
      %v2548 = vsel %vm1429, %v2492, 0
      %v2551 = vsel %vm1429, %v2493, 0
      %v2554 = vsel %vm1429, %v2494, 0
      %v2557 = vsel %vm1429, %v2495, 0
      %v2560 = vsel %vm1429, %v2496, 0
      %v2563 = vsel %vm1429, %v2497, 0
      %v2566 = vsel %vm1429, %v2498, 0
      %v2569 = vsel %vm1429, %v2499, 0
      %v2572 = vsel %vm1429, %v2500, 0
      %v2575 = vsel %vm1429, %v2501, 0
      %v2578 = vsel %vm1429, %v2502, 0
      %v2581 = vsel %vm1429, %v2503, 0
      %v2584 = vsel %vm1429, %v2504, 0
      %v2587 = vsel %vm1429, %v2505, 0
      %v2590 = vsel %vm1429, %v2506, 0
      %v2593 = vsel %vm1429, %v2507, 0
      %v2596 = vsel %vm1429, %v2508, 0
      %v2599 = vsel %vm1429, %v2509, 0
      %v2602 = vsel %vm1429, %v2510, 0
      %v2605 = vsel %vm1429, %v2511, 0
      %v2608 = vsel %vm1429, %v2512, 0
      %v2611 = vsel %vm1429, %v2513, 0
      %v2614 = vsel %vm1429, %v2514, 0
      %v2617 = vsel %vm1429, %v2515, 0
      %v2620 = vsel %vm1429, %v2516, 0
      %v2623 = vsel %vm1429, %v2517, 0
      %v2626 = vsel %vm1429, %v2518, 0
      %v2629 = vsel %vm1429, %v2519, 0
      %v2632 = vsel %vm1429, %v2520, 0
      %v2635 = vsel %vm1429, %v2521, 0
      %v2638 = vsel %vm1429, %v2522, 0
      %v2641 = vsel %vm1429, %v2523, 0
      %2643 = vmatprep.subr.bf16.mxu0 0
      %2644 = vmatpush1.bf16.msra.mxu0 0
      %2645 = vmatprep.subr.bf16.mxu0 0
      %2646 = vmatpush1.bf16.msra.mxu0 0
      %2647 = vmatprep.subr.bf16.mxu0 0
      %2648 = vmatpush1.bf16.msra.mxu0 0
      %2649 = vmatprep.subr.bf16.mxu0 0
      %2650 = vmatpush1.bf16.msra.mxu0 0
      %2651 = vmatprep.subr.bf16.mxu0 0
      %2652 = vmatpush1.bf16.msra.mxu0 0
      %2653 = vmatprep.subr.bf16.mxu0 0
      %2654 = vmatpush1.bf16.msra.mxu0 0
      %2655 = vmatprep.subr.bf16.mxu0 0
      %2656 = vmatpush1.bf16.msra.mxu0 %v2544
      %2657 = vmatprep.subr.bf16.mxu0 0
      %2658 = vmatpush1.bf16.msra.mxu0 %v2543
      %2659 = vmatprep.subr.bf16.mxu0 0
      %2660 = vmatpush2.bf16.msra.mxu0 0
      %2661 = vmatprep.subr.bf16.mxu0 0
      %2662 = vmatpush2.bf16.msra.mxu0 0
      %2663 = vmatprep.subr.bf16.mxu0 0
      %2664 = vmatpush2.bf16.msra.mxu0 0
      %2665 = vmatprep.subr.bf16.mxu0 0
      %2666 = vmatpush2.bf16.msra.mxu0 0
      %2667 = vmatprep.subr.bf16.mxu0 0
      %2668 = vmatpush2.bf16.msra.mxu0 0
      %2669 = vmatprep.subr.bf16.mxu0 0
      %2670 = vmatpush2.bf16.msra.mxu0 0
      %2671 = vmatprep.subr.bf16.mxu0 0
      %2672 = vmatpush2.bf16.msra.mxu0 0
      %2673 = vmatprep.subr.bf16.mxu0 0
      %2674 = vmatpush2.bf16.msra.mxu0 0
      %2675 = vmatprep.mubr.bf16.mxu0 0
      %2676 = vmatmul.mubr.bf16.gmra.mxu0 %v2548
      %v2677 = vpop.f32.mrf.mxu0
      %v2678 = vadd.f32 %v2533, %v2677
      %v2679 = vpop.f32.mrf.mxu0
      %v2680 = vpop.f32.mrf.mxu0
      %v2681 = vadd.f32 %v2533, %v2680
      %v2682 = vpop.f32.mrf.mxu0
      %2683 = vmatprep.mubr.bf16.mxu0 0
      %2684 = vmatmul.mubr.bf16.gmra.mxu0 %v2551
      %v2685 = vpop.f32.mrf.mxu0
      %v2686 = vadd.f32 %v2533, %v2685
      %v2687 = vpop.f32.mrf.mxu0
      %v2688 = vpop.f32.mrf.mxu0
      %v2689 = vadd.f32 %v2533, %v2688
      %v2690 = vpop.f32.mrf.mxu0
      %2691 = vmatprep.mubr.bf16.mxu0 0
      %2692 = vmatmul.mubr.bf16.gmra.mxu0 %v2554
      %v2693 = vpop.f32.mrf.mxu0
      %v2694 = vadd.f32 %v2533, %v2693
      %v2695 = vpop.f32.mrf.mxu0
      %v2696 = vpop.f32.mrf.mxu0
      %v2697 = vadd.f32 %v2533, %v2696
      %v2698 = vpop.f32.mrf.mxu0
      %2699 = vmatprep.mubr.bf16.mxu0 0
      %2700 = vmatmul.mubr.bf16.gmra.mxu0 %v2557
      %v2701 = vpop.f32.mrf.mxu0
      %v2702 = vadd.f32 %v2533, %v2701
      %v2703 = vpop.f32.mrf.mxu0
      %v2704 = vpop.f32.mrf.mxu0
      %v2705 = vadd.f32 %v2533, %v2704
      %v2706 = vpop.f32.mrf.mxu0
      %2707 = vmatprep.mubr.bf16.mxu0 0
      %2708 = vmatmul.mubr.bf16.gmra.mxu0 %v2560
      %v2709 = vpop.f32.mrf.mxu0
      %v2710 = vadd.f32 %v2533, %v2709
      %v2711 = vpop.f32.mrf.mxu0
      %v2712 = vpop.f32.mrf.mxu0
      %v2713 = vadd.f32 %v2533, %v2712
      %v2714 = vpop.f32.mrf.mxu0
      %2715 = vmatprep.mubr.bf16.mxu0 0
      %2716 = vmatmul.mubr.bf16.gmra.mxu0 %v2563
      %v2717 = vpop.f32.mrf.mxu0
      %v2718 = vadd.f32 %v2533, %v2717
      %v2719 = vpop.f32.mrf.mxu0
      %v2720 = vpop.f32.mrf.mxu0
      %v2721 = vadd.f32 %v2533, %v2720
      %v2722 = vpop.f32.mrf.mxu0
      %2723 = vmatprep.mubr.bf16.mxu0 0
      %2724 = vmatmul.mubr.bf16.gmra.mxu0 %v2566
      %v2725 = vpop.f32.mrf.mxu0
      %v2726 = vadd.f32 %v2533, %v2725
      %v2727 = vpop.f32.mrf.mxu0
      %v2728 = vpop.f32.mrf.mxu0
      %v2729 = vadd.f32 %v2533, %v2728
      %v2730 = vpop.f32.mrf.mxu0
      %2731 = vmatprep.mubr.bf16.mxu0 0
      %2732 = vmatmul.mubr.bf16.gmra.mxu0 %v2569
      %v2733 = vpop.f32.mrf.mxu0
      %v2734 = vadd.f32 %v2533, %v2733
      %v2735 = vpop.f32.mrf.mxu0
      %v2736 = vpop.f32.mrf.mxu0
      %v2737 = vadd.f32 %v2533, %v2736
      %v2738 = vpop.f32.mrf.mxu0
      %2739 = vmatprep.mubr.bf16.mxu0 0
      %2740 = vmatmul.mubr.bf16.gmra.mxu0 %v2572
      %v2741 = vpop.f32.mrf.mxu0
      %v2742 = vadd.f32 %v2533, %v2741
      %v2743 = vpop.f32.mrf.mxu0
      %v2744 = vpop.f32.mrf.mxu0
      %v2745 = vadd.f32 %v2533, %v2744
      %v2746 = vpop.f32.mrf.mxu0
      %2747 = vmatprep.mubr.bf16.mxu0 0
      %2748 = vmatmul.mubr.bf16.gmra.mxu0 %v2575
      %v2749 = vpop.f32.mrf.mxu0
      %v2750 = vadd.f32 %v2533, %v2749
      %v2751 = vpop.f32.mrf.mxu0
      %v2752 = vpop.f32.mrf.mxu0
      %v2753 = vadd.f32 %v2533, %v2752
      %v2754 = vpop.f32.mrf.mxu0
      %2755 = vmatprep.mubr.bf16.mxu0 0
      %2756 = vmatmul.mubr.bf16.gmra.mxu0 %v2578
      %v2757 = vpop.f32.mrf.mxu0
      %v2758 = vadd.f32 %v2533, %v2757
      %v2759 = vpop.f32.mrf.mxu0
      %v2760 = vpop.f32.mrf.mxu0
      %v2761 = vadd.f32 %v2533, %v2760
      %v2762 = vpop.f32.mrf.mxu0
      %2763 = vmatprep.mubr.bf16.mxu0 0
      %2764 = vmatmul.mubr.bf16.gmra.mxu0 %v2581
      %v2765 = vpop.f32.mrf.mxu0
      %v2766 = vadd.f32 %v2533, %v2765
      %v2767 = vpop.f32.mrf.mxu0
      %v2768 = vpop.f32.mrf.mxu0
      %v2769 = vadd.f32 %v2533, %v2768
      %v2770 = vpop.f32.mrf.mxu0
      %2771 = vmatprep.mubr.bf16.mxu0 0
      %2772 = vmatmul.mubr.bf16.gmra.mxu0 %v2584
      %v2773 = vpop.f32.mrf.mxu0
      %v2774 = vadd.f32 %v2533, %v2773
      %v2775 = vpop.f32.mrf.mxu0
      %v2776 = vpop.f32.mrf.mxu0
      %v2777 = vadd.f32 %v2533, %v2776
      %v2778 = vpop.f32.mrf.mxu0
      %2779 = vmatprep.mubr.bf16.mxu0 0
      %2780 = vmatmul.mubr.bf16.gmra.mxu0 %v2587
      %v2781 = vpop.f32.mrf.mxu0
      %v2782 = vadd.f32 %v2533, %v2781
      %v2783 = vpop.f32.mrf.mxu0
      %v2784 = vpop.f32.mrf.mxu0
      %v2785 = vadd.f32 %v2533, %v2784
      %v2786 = vpop.f32.mrf.mxu0
      %2787 = vmatprep.mubr.bf16.mxu0 0
      %2788 = vmatmul.mubr.bf16.gmra.mxu0 %v2590
      %v2789 = vpop.f32.mrf.mxu0
      %v2790 = vadd.f32 %v2533, %v2789
      %v2791 = vpop.f32.mrf.mxu0
      %v2792 = vpop.f32.mrf.mxu0
      %v2793 = vadd.f32 %v2533, %v2792
      %v2794 = vpop.f32.mrf.mxu0
      %2795 = vmatprep.mubr.bf16.mxu0 0
      %2796 = vmatmul.mubr.bf16.gmra.mxu0 %v2593
      %v2797 = vpop.f32.mrf.mxu0
      %v2798 = vadd.f32 %v2533, %v2797
      %v2799 = vpop.f32.mrf.mxu0
      %v2800 = vpop.f32.mrf.mxu0
      %v2801 = vadd.f32 %v2533, %v2800
      %v2802 = vpop.f32.mrf.mxu0
      %2803 = vmatprep.mubr.bf16.mxu0 0
      %2804 = vmatmul.mubr.bf16.gmra.mxu0 %v2596
      %v2805 = vpop.f32.mrf.mxu0
      %v2806 = vadd.f32 %v2533, %v2805
      %v2807 = vpop.f32.mrf.mxu0
      %v2808 = vpop.f32.mrf.mxu0
      %v2809 = vadd.f32 %v2533, %v2808
      %v2810 = vpop.f32.mrf.mxu0
      %2811 = vmatprep.mubr.bf16.mxu0 0
      %2812 = vmatmul.mubr.bf16.gmra.mxu0 %v2599
      %v2813 = vpop.f32.mrf.mxu0
      %v2814 = vadd.f32 %v2533, %v2813
      %v2815 = vpop.f32.mrf.mxu0
      %v2816 = vpop.f32.mrf.mxu0
      %v2817 = vadd.f32 %v2533, %v2816
      %v2818 = vpop.f32.mrf.mxu0
      %2819 = vmatprep.mubr.bf16.mxu0 0
      %2820 = vmatmul.mubr.bf16.gmra.mxu0 %v2602
      %v2821 = vpop.f32.mrf.mxu0
      %v2822 = vadd.f32 %v2533, %v2821
      %v2823 = vpop.f32.mrf.mxu0
      %v2824 = vpop.f32.mrf.mxu0
      %v2825 = vadd.f32 %v2533, %v2824
      %v2826 = vpop.f32.mrf.mxu0
      %2827 = vmatprep.mubr.bf16.mxu0 0
      %2828 = vmatmul.mubr.bf16.gmra.mxu0 %v2605
      %v2829 = vpop.f32.mrf.mxu0
      %v2830 = vadd.f32 %v2533, %v2829
      %v2831 = vpop.f32.mrf.mxu0
      %v2832 = vpop.f32.mrf.mxu0
      %v2833 = vadd.f32 %v2533, %v2832
      %v2834 = vpop.f32.mrf.mxu0
      %2835 = vmatprep.mubr.bf16.mxu0 0
      %2836 = vmatmul.mubr.bf16.gmra.mxu0 %v2608
      %v2837 = vpop.f32.mrf.mxu0
      %v2838 = vadd.f32 %v2533, %v2837
      %v2839 = vpop.f32.mrf.mxu0
      %v2840 = vpop.f32.mrf.mxu0
      %v2841 = vadd.f32 %v2533, %v2840
      %v2842 = vpop.f32.mrf.mxu0
      %2843 = vmatprep.mubr.bf16.mxu0 0
      %2844 = vmatmul.mubr.bf16.gmra.mxu0 %v2611
      %v2845 = vpop.f32.mrf.mxu0
      %v2846 = vadd.f32 %v2533, %v2845
      %v2847 = vpop.f32.mrf.mxu0
      %v2848 = vpop.f32.mrf.mxu0
      %v2849 = vadd.f32 %v2533, %v2848
      %v2850 = vpop.f32.mrf.mxu0
      %2851 = vmatprep.mubr.bf16.mxu0 0
      %2852 = vmatmul.mubr.bf16.gmra.mxu0 %v2614
      %v2853 = vpop.f32.mrf.mxu0
      %v2854 = vadd.f32 %v2533, %v2853
      %v2855 = vpop.f32.mrf.mxu0
      %v2856 = vpop.f32.mrf.mxu0
      %v2857 = vadd.f32 %v2533, %v2856
      %v2858 = vpop.f32.mrf.mxu0
      %2859 = vmatprep.mubr.bf16.mxu0 0
      %2860 = vmatmul.mubr.bf16.gmra.mxu0 %v2617
      %v2861 = vpop.f32.mrf.mxu0
      %v2862 = vadd.f32 %v2533, %v2861
      %v2863 = vpop.f32.mrf.mxu0
      %v2864 = vpop.f32.mrf.mxu0
      %v2865 = vadd.f32 %v2533, %v2864
      %v2866 = vpop.f32.mrf.mxu0
      %2867 = vmatprep.mubr.bf16.mxu0 0
      %2868 = vmatmul.mubr.bf16.gmra.mxu0 %v2620
      %v2869 = vpop.f32.mrf.mxu0
      %v2870 = vadd.f32 %v2533, %v2869
      %v2871 = vpop.f32.mrf.mxu0
      %v2872 = vpop.f32.mrf.mxu0
      %v2873 = vadd.f32 %v2533, %v2872
      %v2874 = vpop.f32.mrf.mxu0
      %2875 = vmatprep.mubr.bf16.mxu0 0
      %2876 = vmatmul.mubr.bf16.gmra.mxu0 %v2623
      %v2877 = vpop.f32.mrf.mxu0
      %v2878 = vadd.f32 %v2533, %v2877
      %v2879 = vpop.f32.mrf.mxu0
      %v2880 = vpop.f32.mrf.mxu0
      %v2881 = vadd.f32 %v2533, %v2880
      %v2882 = vpop.f32.mrf.mxu0
      %2883 = vmatprep.mubr.bf16.mxu0 0
      %2884 = vmatmul.mubr.bf16.gmra.mxu0 %v2626
      %v2885 = vpop.f32.mrf.mxu0
      %v2886 = vadd.f32 %v2533, %v2885
      %v2887 = vpop.f32.mrf.mxu0
      %v2888 = vpop.f32.mrf.mxu0
      %v2889 = vadd.f32 %v2533, %v2888
      %v2890 = vpop.f32.mrf.mxu0
      %2891 = vmatprep.mubr.bf16.mxu0 0
      %2892 = vmatmul.mubr.bf16.gmra.mxu0 %v2629
      %v2893 = vpop.f32.mrf.mxu0
      %v2894 = vadd.f32 %v2533, %v2893
      %v2895 = vpop.f32.mrf.mxu0
      %v2896 = vpop.f32.mrf.mxu0
      %v2897 = vadd.f32 %v2533, %v2896
      %v2898 = vpop.f32.mrf.mxu0
      %2899 = vmatprep.mubr.bf16.mxu0 0
      %2900 = vmatmul.mubr.bf16.gmra.mxu0 %v2632
      %v2901 = vpop.f32.mrf.mxu0
      %v2902 = vadd.f32 %v2533, %v2901
      %v2903 = vpop.f32.mrf.mxu0
      %v2904 = vpop.f32.mrf.mxu0
      %v2905 = vadd.f32 %v2533, %v2904
      %v2906 = vpop.f32.mrf.mxu0
      %2907 = vmatprep.mubr.bf16.mxu0 0
      %2908 = vmatmul.mubr.bf16.gmra.mxu0 %v2635
      %v2909 = vpop.f32.mrf.mxu0
      %v2910 = vadd.f32 %v2533, %v2909
      %v2911 = vpop.f32.mrf.mxu0
      %v2912 = vpop.f32.mrf.mxu0
      %v2913 = vadd.f32 %v2533, %v2912
      %v2914 = vpop.f32.mrf.mxu0
      %2915 = vmatprep.mubr.bf16.mxu0 0
      %2916 = vmatmul.mubr.bf16.gmra.mxu0 %v2638
      %v2917 = vpop.f32.mrf.mxu0
      %v2918 = vadd.f32 %v2533, %v2917
      %v2919 = vpop.f32.mrf.mxu0
      %v2920 = vpop.f32.mrf.mxu0
      %v2921 = vadd.f32 %v2533, %v2920
      %v2922 = vpop.f32.mrf.mxu0
      %2923 = vmatprep.mubr.bf16.mxu0 0
      %2924 = vmatmul.mubr.bf16.gmra.mxu0 %v2641
      %v2925 = vpop.f32.mrf.mxu0
      %v2926 = vadd.f32 %v2533, %v2925
      %v2927 = vpop.f32.mrf.mxu0
      %v2928 = vpop.f32.mrf.mxu0
      %v2929 = vadd.f32 %v2533, %v2928
      %v2930 = vpop.f32.mrf.mxu0
      %2931 = vdwg.mxu0
      %v2932 = vmax.f32 %v2678, 0.0
      %v2933 = vmax.f32 %v2681, 0.0
      %v2934 = vmax.f32 %v2686, 0.0
      %v2935 = vmax.f32 %v2689, 0.0
      %v2936 = vmax.f32 %v2694, 0.0
      %v2937 = vmax.f32 %v2697, 0.0
      %v2938 = vmax.f32 %v2702, 0.0
      %v2939 = vmax.f32 %v2705, 0.0
      %v2940 = vmax.f32 %v2710, 0.0
      %v2941 = vmax.f32 %v2713, 0.0
      %v2942 = vmax.f32 %v2718, 0.0
      %v2943 = vmax.f32 %v2721, 0.0
      %v2944 = vmax.f32 %v2726, 0.0
      %v2945 = vmax.f32 %v2729, 0.0
      %v2946 = vmax.f32 %v2734, 0.0
      %v2947 = vmax.f32 %v2737, 0.0
      %v2948 = vmax.f32 %v2742, 0.0
      %v2949 = vmax.f32 %v2745, 0.0
      %v2950 = vmax.f32 %v2750, 0.0
      %v2951 = vmax.f32 %v2753, 0.0
      %v2952 = vmax.f32 %v2758, 0.0
      %v2953 = vmax.f32 %v2761, 0.0
      %v2954 = vmax.f32 %v2766, 0.0
      %v2955 = vmax.f32 %v2769, 0.0
      %v2956 = vmax.f32 %v2774, 0.0
      %v2957 = vmax.f32 %v2777, 0.0
      %v2958 = vmax.f32 %v2782, 0.0
      %v2959 = vmax.f32 %v2785, 0.0
      %v2960 = vmax.f32 %v2790, 0.0
      %v2961 = vmax.f32 %v2793, 0.0
      %v2962 = vmax.f32 %v2798, 0.0
      %v2963 = vmax.f32 %v2801, 0.0
      %v2964 = vmax.f32 %v2806, 0.0
      %v2965 = vmax.f32 %v2809, 0.0
      %v2966 = vmax.f32 %v2814, 0.0
      %v2967 = vmax.f32 %v2817, 0.0
      %v2968 = vmax.f32 %v2822, 0.0
      %v2969 = vmax.f32 %v2825, 0.0
      %v2970 = vmax.f32 %v2830, 0.0
      %v2971 = vmax.f32 %v2833, 0.0
      %v2972 = vmax.f32 %v2838, 0.0
      %v2973 = vmax.f32 %v2841, 0.0
      %v2974 = vmax.f32 %v2846, 0.0
      %v2975 = vmax.f32 %v2849, 0.0
      %v2976 = vmax.f32 %v2854, 0.0
      %v2977 = vmax.f32 %v2857, 0.0
      %v2978 = vmax.f32 %v2862, 0.0
      %v2979 = vmax.f32 %v2865, 0.0
      %v2980 = vmax.f32 %v2870, 0.0
      %v2981 = vmax.f32 %v2873, 0.0
      %v2982 = vmax.f32 %v2878, 0.0
      %v2983 = vmax.f32 %v2881, 0.0
      %v2984 = vmax.f32 %v2886, 0.0
      %v2985 = vmax.f32 %v2889, 0.0
      %v2986 = vmax.f32 %v2894, 0.0
      %v2987 = vmax.f32 %v2897, 0.0
      %v2988 = vmax.f32 %v2902, 0.0
      %v2989 = vmax.f32 %v2905, 0.0
      %v2990 = vmax.f32 %v2910, 0.0
      %v2991 = vmax.f32 %v2913, 0.0
      %v2992 = vmax.f32 %v2918, 0.0
      %v2993 = vmax.f32 %v2921, 0.0
      %v2994 = vmax.f32 %v2926, 0.0
      %v2995 = vmax.f32 %v2929, 0.0
      %v2996 = vpack.c.bf16 %v2933, %v2932
      %v2997 = vpack.c.bf16 %v2935, %v2934
      %v2998 = vpack.c.bf16 %v2937, %v2936
      %v2999 = vpack.c.bf16 %v2939, %v2938
      %v3000 = vpack.c.bf16 %v2941, %v2940
      %v3001 = vpack.c.bf16 %v2943, %v2942
      %v3002 = vpack.c.bf16 %v2945, %v2944
      %v3003 = vpack.c.bf16 %v2947, %v2946
      %v3004 = vpack.c.bf16 %v2949, %v2948
      %v3005 = vpack.c.bf16 %v2951, %v2950
      %v3006 = vpack.c.bf16 %v2953, %v2952
      %v3007 = vpack.c.bf16 %v2955, %v2954
      %v3008 = vpack.c.bf16 %v2957, %v2956
      %v3009 = vpack.c.bf16 %v2959, %v2958
      %v3010 = vpack.c.bf16 %v2961, %v2960
      %v3011 = vpack.c.bf16 %v2963, %v2962
      %v3012 = vpack.c.bf16 %v2965, %v2964
      %v3013 = vpack.c.bf16 %v2967, %v2966
      %v3014 = vpack.c.bf16 %v2969, %v2968
      %v3015 = vpack.c.bf16 %v2971, %v2970
      %v3016 = vpack.c.bf16 %v2973, %v2972
      %v3017 = vpack.c.bf16 %v2975, %v2974
      %v3018 = vpack.c.bf16 %v2977, %v2976
      %v3019 = vpack.c.bf16 %v2979, %v2978
      %v3020 = vpack.c.bf16 %v2981, %v2980
      %v3021 = vpack.c.bf16 %v2983, %v2982
      %v3022 = vpack.c.bf16 %v2985, %v2984
      %v3023 = vpack.c.bf16 %v2987, %v2986
      %v3024 = vpack.c.bf16 %v2989, %v2988
      %v3025 = vpack.c.bf16 %v2991, %v2990
      %v3026 = vpack.c.bf16 %v2993, %v2992
      %v3027 = vpack.c.bf16 %v2995, %v2994
      %v3028 = vld [vmem:[%s9] sm:$0xf]
      %v3029 = vld [vmem:[%s9 + $0x4] sm:$0xf]
      %v3030 = vld [vmem:[%s9 + $0x8] sm:$0xf]
      %v3031 = vld [vmem:[%s9 + $0xc] sm:$0xf]
      %v3032 = vld [vmem:[%s10] sm:$0x1]
      %v3034 = vlaneseq
      %v3035 = vshrl.u32 %v3034, 7
      %v3036 = vsub.s32 0, %v3035
      %v3037 = vrot.slane %v3032, %v3036
      %v3043 = vunpack.c.l.b16 %v3028
      %v3044 = vunpack.c.l.b16 %v3029
      %v3045 = vunpack.c.l.b16 %v3030
      %v3046 = vunpack.c.l.b16 %v3031
      %v3047 = vpack.c.b16 %v3044, %v3043
      %v3048 = vpack.c.b16 %v3046, %v3045
      %v3052 = vsel %vm1429, %v2996, 0
      %v3055 = vsel %vm1429, %v2997, 0
      %v3058 = vsel %vm1429, %v2998, 0
      %v3061 = vsel %vm1429, %v2999, 0
      %v3064 = vsel %vm1429, %v3000, 0
      %v3067 = vsel %vm1429, %v3001, 0
      %v3070 = vsel %vm1429, %v3002, 0
      %v3073 = vsel %vm1429, %v3003, 0
      %v3076 = vsel %vm1429, %v3004, 0
      %v3079 = vsel %vm1429, %v3005, 0
      %v3082 = vsel %vm1429, %v3006, 0
      %v3085 = vsel %vm1429, %v3007, 0
      %v3088 = vsel %vm1429, %v3008, 0
      %v3091 = vsel %vm1429, %v3009, 0
      %v3094 = vsel %vm1429, %v3010, 0
      %v3097 = vsel %vm1429, %v3011, 0
      %v3100 = vsel %vm1429, %v3012, 0
      %v3103 = vsel %vm1429, %v3013, 0
      %v3106 = vsel %vm1429, %v3014, 0
      %v3109 = vsel %vm1429, %v3015, 0
      %v3112 = vsel %vm1429, %v3016, 0
      %v3115 = vsel %vm1429, %v3017, 0
      %v3118 = vsel %vm1429, %v3018, 0
      %v3121 = vsel %vm1429, %v3019, 0
      %v3124 = vsel %vm1429, %v3020, 0
      %v3127 = vsel %vm1429, %v3021, 0
      %v3130 = vsel %vm1429, %v3022, 0
      %v3133 = vsel %vm1429, %v3023, 0
      %v3136 = vsel %vm1429, %v3024, 0
      %v3139 = vsel %vm1429, %v3025, 0
      %v3142 = vsel %vm1429, %v3026, 0
      %v3145 = vsel %vm1429, %v3027, 0
      %3147 = vmatprep.subr.bf16.mxu0 0
      %3148 = vmatpush1.bf16.msra.mxu0 0
      %3149 = vmatprep.subr.bf16.mxu0 0
      %3150 = vmatpush1.bf16.msra.mxu0 0
      %3151 = vmatprep.subr.bf16.mxu0 0
      %3152 = vmatpush1.bf16.msra.mxu0 0
      %3153 = vmatprep.subr.bf16.mxu0 0
      %3154 = vmatpush1.bf16.msra.mxu0 0
      %3155 = vmatprep.subr.bf16.mxu0 0
      %3156 = vmatpush1.bf16.msra.mxu0 0
      %3157 = vmatprep.subr.bf16.mxu0 0
      %3158 = vmatpush1.bf16.msra.mxu0 0
      %3159 = vmatprep.subr.bf16.mxu0 0
      %3160 = vmatpush1.bf16.msra.mxu0 %v3048
      %3161 = vmatprep.subr.bf16.mxu0 0
      %3162 = vmatpush1.bf16.msra.mxu0 %v3047
      %3163 = vmatprep.subr.bf16.mxu0 0
      %3164 = vmatpush2.bf16.msra.mxu0 0
      %3165 = vmatprep.subr.bf16.mxu0 0
      %3166 = vmatpush2.bf16.msra.mxu0 0
      %3167 = vmatprep.subr.bf16.mxu0 0
      %3168 = vmatpush2.bf16.msra.mxu0 0
      %3169 = vmatprep.subr.bf16.mxu0 0
      %3170 = vmatpush2.bf16.msra.mxu0 0
      %3171 = vmatprep.subr.bf16.mxu0 0
      %3172 = vmatpush2.bf16.msra.mxu0 0
      %3173 = vmatprep.subr.bf16.mxu0 0
      %3174 = vmatpush2.bf16.msra.mxu0 0
      %3175 = vmatprep.subr.bf16.mxu0 0
      %3176 = vmatpush2.bf16.msra.mxu0 0
      %3177 = vmatprep.subr.bf16.mxu0 0
      %3178 = vmatpush2.bf16.msra.mxu0 0
      %3179 = vmatprep.mubr.bf16.mxu0 0
      %3180 = vmatmul.mubr.bf16.gmra.mxu0 %v3052
      %v3181 = vpop.f32.mrf.mxu0
      %v3182 = vadd.f32 %v3037, %v3181
      %v3183 = vpop.f32.mrf.mxu0
      %v3184 = vpop.f32.mrf.mxu0
      %v3185 = vadd.f32 %v3037, %v3184
      %v3186 = vpop.f32.mrf.mxu0
      %3187 = vmatprep.mubr.bf16.mxu0 0
      %3188 = vmatmul.mubr.bf16.gmra.mxu0 %v3055
      %v3189 = vpop.f32.mrf.mxu0
      %v3190 = vadd.f32 %v3037, %v3189
      %v3191 = vpop.f32.mrf.mxu0
      %v3192 = vpop.f32.mrf.mxu0
      %v3193 = vadd.f32 %v3037, %v3192
      %v3194 = vpop.f32.mrf.mxu0
      %3195 = vmatprep.mubr.bf16.mxu0 0
      %3196 = vmatmul.mubr.bf16.gmra.mxu0 %v3058
      %v3197 = vpop.f32.mrf.mxu0
      %v3198 = vadd.f32 %v3037, %v3197
      %v3199 = vpop.f32.mrf.mxu0
      %v3200 = vpop.f32.mrf.mxu0
      %v3201 = vadd.f32 %v3037, %v3200
      %v3202 = vpop.f32.mrf.mxu0
      %3203 = vmatprep.mubr.bf16.mxu0 0
      %3204 = vmatmul.mubr.bf16.gmra.mxu0 %v3061
      %v3205 = vpop.f32.mrf.mxu0
      %v3206 = vadd.f32 %v3037, %v3205
      %v3207 = vpop.f32.mrf.mxu0
      %v3208 = vpop.f32.mrf.mxu0
      %v3209 = vadd.f32 %v3037, %v3208
      %v3210 = vpop.f32.mrf.mxu0
      %3211 = vmatprep.mubr.bf16.mxu0 0
      %3212 = vmatmul.mubr.bf16.gmra.mxu0 %v3064
      %v3213 = vpop.f32.mrf.mxu0
      %v3214 = vadd.f32 %v3037, %v3213
      %v3215 = vpop.f32.mrf.mxu0
      %v3216 = vpop.f32.mrf.mxu0
      %v3217 = vadd.f32 %v3037, %v3216
      %v3218 = vpop.f32.mrf.mxu0
      %3219 = vmatprep.mubr.bf16.mxu0 0
      %3220 = vmatmul.mubr.bf16.gmra.mxu0 %v3067
      %v3221 = vpop.f32.mrf.mxu0
      %v3222 = vadd.f32 %v3037, %v3221
      %v3223 = vpop.f32.mrf.mxu0
      %v3224 = vpop.f32.mrf.mxu0
      %v3225 = vadd.f32 %v3037, %v3224
      %v3226 = vpop.f32.mrf.mxu0
      %3227 = vmatprep.mubr.bf16.mxu0 0
      %3228 = vmatmul.mubr.bf16.gmra.mxu0 %v3070
      %v3229 = vpop.f32.mrf.mxu0
      %v3230 = vadd.f32 %v3037, %v3229
      %v3231 = vpop.f32.mrf.mxu0
      %v3232 = vpop.f32.mrf.mxu0
      %v3233 = vadd.f32 %v3037, %v3232
      %v3234 = vpop.f32.mrf.mxu0
      %3235 = vmatprep.mubr.bf16.mxu0 0
      %3236 = vmatmul.mubr.bf16.gmra.mxu0 %v3073
      %v3237 = vpop.f32.mrf.mxu0
      %v3238 = vadd.f32 %v3037, %v3237
      %v3239 = vpop.f32.mrf.mxu0
      %v3240 = vpop.f32.mrf.mxu0
      %v3241 = vadd.f32 %v3037, %v3240
      %v3242 = vpop.f32.mrf.mxu0
      %3243 = vmatprep.mubr.bf16.mxu0 0
      %3244 = vmatmul.mubr.bf16.gmra.mxu0 %v3076
      %v3245 = vpop.f32.mrf.mxu0
      %v3246 = vadd.f32 %v3037, %v3245
      %v3247 = vpop.f32.mrf.mxu0
      %v3248 = vpop.f32.mrf.mxu0
      %v3249 = vadd.f32 %v3037, %v3248
      %v3250 = vpop.f32.mrf.mxu0
      %3251 = vmatprep.mubr.bf16.mxu0 0
      %3252 = vmatmul.mubr.bf16.gmra.mxu0 %v3079
      %v3253 = vpop.f32.mrf.mxu0
      %v3254 = vadd.f32 %v3037, %v3253
      %v3255 = vpop.f32.mrf.mxu0
      %v3256 = vpop.f32.mrf.mxu0
      %v3257 = vadd.f32 %v3037, %v3256
      %v3258 = vpop.f32.mrf.mxu0
      %3259 = vmatprep.mubr.bf16.mxu0 0
      %3260 = vmatmul.mubr.bf16.gmra.mxu0 %v3082
      %v3261 = vpop.f32.mrf.mxu0
      %v3262 = vadd.f32 %v3037, %v3261
      %v3263 = vpop.f32.mrf.mxu0
      %v3264 = vpop.f32.mrf.mxu0
      %v3265 = vadd.f32 %v3037, %v3264
      %v3266 = vpop.f32.mrf.mxu0
      %3267 = vmatprep.mubr.bf16.mxu0 0
      %3268 = vmatmul.mubr.bf16.gmra.mxu0 %v3085
      %v3269 = vpop.f32.mrf.mxu0
      %v3270 = vadd.f32 %v3037, %v3269
      %v3271 = vpop.f32.mrf.mxu0
      %v3272 = vpop.f32.mrf.mxu0
      %v3273 = vadd.f32 %v3037, %v3272
      %v3274 = vpop.f32.mrf.mxu0
      %3275 = vmatprep.mubr.bf16.mxu0 0
      %3276 = vmatmul.mubr.bf16.gmra.mxu0 %v3088
      %v3277 = vpop.f32.mrf.mxu0
      %v3278 = vadd.f32 %v3037, %v3277
      %v3279 = vpop.f32.mrf.mxu0
      %v3280 = vpop.f32.mrf.mxu0
      %v3281 = vadd.f32 %v3037, %v3280
      %v3282 = vpop.f32.mrf.mxu0
      %3283 = vmatprep.mubr.bf16.mxu0 0
      %3284 = vmatmul.mubr.bf16.gmra.mxu0 %v3091
      %v3285 = vpop.f32.mrf.mxu0
      %v3286 = vadd.f32 %v3037, %v3285
      %v3287 = vpop.f32.mrf.mxu0
      %v3288 = vpop.f32.mrf.mxu0
      %v3289 = vadd.f32 %v3037, %v3288
      %v3290 = vpop.f32.mrf.mxu0
      %3291 = vmatprep.mubr.bf16.mxu0 0
      %3292 = vmatmul.mubr.bf16.gmra.mxu0 %v3094
      %v3293 = vpop.f32.mrf.mxu0
      %v3294 = vadd.f32 %v3037, %v3293
      %v3295 = vpop.f32.mrf.mxu0
      %v3296 = vpop.f32.mrf.mxu0
      %v3297 = vadd.f32 %v3037, %v3296
      %v3298 = vpop.f32.mrf.mxu0
      %3299 = vmatprep.mubr.bf16.mxu0 0
      %3300 = vmatmul.mubr.bf16.gmra.mxu0 %v3097
      %v3301 = vpop.f32.mrf.mxu0
      %v3302 = vadd.f32 %v3037, %v3301
      %v3303 = vpop.f32.mrf.mxu0
      %v3304 = vpop.f32.mrf.mxu0
      %v3305 = vadd.f32 %v3037, %v3304
      %v3306 = vpop.f32.mrf.mxu0
      %3307 = vmatprep.mubr.bf16.mxu0 0
      %3308 = vmatmul.mubr.bf16.gmra.mxu0 %v3100
      %v3309 = vpop.f32.mrf.mxu0
      %v3310 = vadd.f32 %v3037, %v3309
      %v3311 = vpop.f32.mrf.mxu0
      %v3312 = vpop.f32.mrf.mxu0
      %v3313 = vadd.f32 %v3037, %v3312
      %v3314 = vpop.f32.mrf.mxu0
      %3315 = vmatprep.mubr.bf16.mxu0 0
      %3316 = vmatmul.mubr.bf16.gmra.mxu0 %v3103
      %v3317 = vpop.f32.mrf.mxu0
      %v3318 = vadd.f32 %v3037, %v3317
      %v3319 = vpop.f32.mrf.mxu0
      %v3320 = vpop.f32.mrf.mxu0
      %v3321 = vadd.f32 %v3037, %v3320
      %v3322 = vpop.f32.mrf.mxu0
      %3323 = vmatprep.mubr.bf16.mxu0 0
      %3324 = vmatmul.mubr.bf16.gmra.mxu0 %v3106
      %v3325 = vpop.f32.mrf.mxu0
      %v3326 = vadd.f32 %v3037, %v3325
      %v3327 = vpop.f32.mrf.mxu0
      %v3328 = vpop.f32.mrf.mxu0
      %v3329 = vadd.f32 %v3037, %v3328
      %v3330 = vpop.f32.mrf.mxu0
      %3331 = vmatprep.mubr.bf16.mxu0 0
      %3332 = vmatmul.mubr.bf16.gmra.mxu0 %v3109
      %v3333 = vpop.f32.mrf.mxu0
      %v3334 = vadd.f32 %v3037, %v3333
      %v3335 = vpop.f32.mrf.mxu0
      %v3336 = vpop.f32.mrf.mxu0
      %v3337 = vadd.f32 %v3037, %v3336
      %v3338 = vpop.f32.mrf.mxu0
      %3339 = vmatprep.mubr.bf16.mxu0 0
      %3340 = vmatmul.mubr.bf16.gmra.mxu0 %v3112
      %v3341 = vpop.f32.mrf.mxu0
      %v3342 = vadd.f32 %v3037, %v3341
      %v3343 = vpop.f32.mrf.mxu0
      %v3344 = vpop.f32.mrf.mxu0
      %v3345 = vadd.f32 %v3037, %v3344
      %v3346 = vpop.f32.mrf.mxu0
      %3347 = vmatprep.mubr.bf16.mxu0 0
      %3348 = vmatmul.mubr.bf16.gmra.mxu0 %v3115
      %v3349 = vpop.f32.mrf.mxu0
      %v3350 = vadd.f32 %v3037, %v3349
      %v3351 = vpop.f32.mrf.mxu0
      %v3352 = vpop.f32.mrf.mxu0
      %v3353 = vadd.f32 %v3037, %v3352
      %v3354 = vpop.f32.mrf.mxu0
      %3355 = vmatprep.mubr.bf16.mxu0 0
      %3356 = vmatmul.mubr.bf16.gmra.mxu0 %v3118
      %v3357 = vpop.f32.mrf.mxu0
      %v3358 = vadd.f32 %v3037, %v3357
      %v3359 = vpop.f32.mrf.mxu0
      %v3360 = vpop.f32.mrf.mxu0
      %v3361 = vadd.f32 %v3037, %v3360
      %v3362 = vpop.f32.mrf.mxu0
      %3363 = vmatprep.mubr.bf16.mxu0 0
      %3364 = vmatmul.mubr.bf16.gmra.mxu0 %v3121
      %v3365 = vpop.f32.mrf.mxu0
      %v3366 = vadd.f32 %v3037, %v3365
      %v3367 = vpop.f32.mrf.mxu0
      %v3368 = vpop.f32.mrf.mxu0
      %v3369 = vadd.f32 %v3037, %v3368
      %v3370 = vpop.f32.mrf.mxu0
      %3371 = vmatprep.mubr.bf16.mxu0 0
      %3372 = vmatmul.mubr.bf16.gmra.mxu0 %v3124
      %v3373 = vpop.f32.mrf.mxu0
      %v3374 = vadd.f32 %v3037, %v3373
      %v3375 = vpop.f32.mrf.mxu0
      %v3376 = vpop.f32.mrf.mxu0
      %v3377 = vadd.f32 %v3037, %v3376
      %v3378 = vpop.f32.mrf.mxu0
      %3379 = vmatprep.mubr.bf16.mxu0 0
      %3380 = vmatmul.mubr.bf16.gmra.mxu0 %v3127
      %v3381 = vpop.f32.mrf.mxu0
      %v3382 = vadd.f32 %v3037, %v3381
      %v3383 = vpop.f32.mrf.mxu0
      %v3384 = vpop.f32.mrf.mxu0
      %v3385 = vadd.f32 %v3037, %v3384
      %v3386 = vpop.f32.mrf.mxu0
      %3387 = vmatprep.mubr.bf16.mxu0 0
      %3388 = vmatmul.mubr.bf16.gmra.mxu0 %v3130
      %v3389 = vpop.f32.mrf.mxu0
      %v3390 = vadd.f32 %v3037, %v3389
      %v3391 = vpop.f32.mrf.mxu0
      %v3392 = vpop.f32.mrf.mxu0
      %v3393 = vadd.f32 %v3037, %v3392
      %v3394 = vpop.f32.mrf.mxu0
      %3395 = vmatprep.mubr.bf16.mxu0 0
      %3396 = vmatmul.mubr.bf16.gmra.mxu0 %v3133
      %v3397 = vpop.f32.mrf.mxu0
      %v3398 = vadd.f32 %v3037, %v3397
      %v3399 = vpop.f32.mrf.mxu0
      %v3400 = vpop.f32.mrf.mxu0
      %v3401 = vadd.f32 %v3037, %v3400
      %v3402 = vpop.f32.mrf.mxu0
      %3403 = vmatprep.mubr.bf16.mxu0 0
      %3404 = vmatmul.mubr.bf16.gmra.mxu0 %v3136
      %v3405 = vpop.f32.mrf.mxu0
      %v3406 = vadd.f32 %v3037, %v3405
      %v3407 = vpop.f32.mrf.mxu0
      %v3408 = vpop.f32.mrf.mxu0
      %v3409 = vadd.f32 %v3037, %v3408
      %v3410 = vpop.f32.mrf.mxu0
      %3411 = vmatprep.mubr.bf16.mxu0 0
      %3412 = vmatmul.mubr.bf16.gmra.mxu0 %v3139
      %v3413 = vpop.f32.mrf.mxu0
      %v3414 = vadd.f32 %v3037, %v3413
      %v3415 = vpop.f32.mrf.mxu0
      %v3416 = vpop.f32.mrf.mxu0
      %v3417 = vadd.f32 %v3037, %v3416
      %v3418 = vpop.f32.mrf.mxu0
      %3419 = vmatprep.mubr.bf16.mxu0 0
      %3420 = vmatmul.mubr.bf16.gmra.mxu0 %v3142
      %v3421 = vpop.f32.mrf.mxu0
      %v3422 = vadd.f32 %v3037, %v3421
      %v3423 = vpop.f32.mrf.mxu0
      %v3424 = vpop.f32.mrf.mxu0
      %v3425 = vadd.f32 %v3037, %v3424
      %v3426 = vpop.f32.mrf.mxu0
      %3427 = vmatprep.mubr.bf16.mxu0 0
      %3428 = vmatmul.mubr.bf16.gmra.mxu0 %v3145
      %v3429 = vpop.f32.mrf.mxu0
      %v3430 = vadd.f32 %v3037, %v3429
      %v3431 = vpop.f32.mrf.mxu0
      %v3432 = vpop.f32.mrf.mxu0
      %v3433 = vadd.f32 %v3037, %v3432
      %v3434 = vpop.f32.mrf.mxu0
      %3435 = vdwg.mxu0
      %v3436 = vmax.f32 %v3182, 0.0
      %v3437 = vmax.f32 %v3185, 0.0
      %v3438 = vmax.f32 %v3190, 0.0
      %v3439 = vmax.f32 %v3193, 0.0
      %v3440 = vmax.f32 %v3198, 0.0
      %v3441 = vmax.f32 %v3201, 0.0
      %v3442 = vmax.f32 %v3206, 0.0
      %v3443 = vmax.f32 %v3209, 0.0
      %v3444 = vmax.f32 %v3214, 0.0
      %v3445 = vmax.f32 %v3217, 0.0
      %v3446 = vmax.f32 %v3222, 0.0
      %v3447 = vmax.f32 %v3225, 0.0
      %v3448 = vmax.f32 %v3230, 0.0
      %v3449 = vmax.f32 %v3233, 0.0
      %v3450 = vmax.f32 %v3238, 0.0
      %v3451 = vmax.f32 %v3241, 0.0
      %v3452 = vmax.f32 %v3246, 0.0
      %v3453 = vmax.f32 %v3249, 0.0
      %v3454 = vmax.f32 %v3254, 0.0
      %v3455 = vmax.f32 %v3257, 0.0
      %v3456 = vmax.f32 %v3262, 0.0
      %v3457 = vmax.f32 %v3265, 0.0
      %v3458 = vmax.f32 %v3270, 0.0
      %v3459 = vmax.f32 %v3273, 0.0
      %v3460 = vmax.f32 %v3278, 0.0
      %v3461 = vmax.f32 %v3281, 0.0
      %v3462 = vmax.f32 %v3286, 0.0
      %v3463 = vmax.f32 %v3289, 0.0
      %v3464 = vmax.f32 %v3294, 0.0
      %v3465 = vmax.f32 %v3297, 0.0
      %v3466 = vmax.f32 %v3302, 0.0
      %v3467 = vmax.f32 %v3305, 0.0
      %v3468 = vmax.f32 %v3310, 0.0
      %v3469 = vmax.f32 %v3313, 0.0
      %v3470 = vmax.f32 %v3318, 0.0
      %v3471 = vmax.f32 %v3321, 0.0
      %v3472 = vmax.f32 %v3326, 0.0
      %v3473 = vmax.f32 %v3329, 0.0
      %v3474 = vmax.f32 %v3334, 0.0
      %v3475 = vmax.f32 %v3337, 0.0
      %v3476 = vmax.f32 %v3342, 0.0
      %v3477 = vmax.f32 %v3345, 0.0
      %v3478 = vmax.f32 %v3350, 0.0
      %v3479 = vmax.f32 %v3353, 0.0
      %v3480 = vmax.f32 %v3358, 0.0
      %v3481 = vmax.f32 %v3361, 0.0
      %v3482 = vmax.f32 %v3366, 0.0
      %v3483 = vmax.f32 %v3369, 0.0
      %v3484 = vmax.f32 %v3374, 0.0
      %v3485 = vmax.f32 %v3377, 0.0
      %v3486 = vmax.f32 %v3382, 0.0
      %v3487 = vmax.f32 %v3385, 0.0
      %v3488 = vmax.f32 %v3390, 0.0
      %v3489 = vmax.f32 %v3393, 0.0
      %v3490 = vmax.f32 %v3398, 0.0
      %v3491 = vmax.f32 %v3401, 0.0
      %v3492 = vmax.f32 %v3406, 0.0
      %v3493 = vmax.f32 %v3409, 0.0
      %v3494 = vmax.f32 %v3414, 0.0
      %v3495 = vmax.f32 %v3417, 0.0
      %v3496 = vmax.f32 %v3422, 0.0
      %v3497 = vmax.f32 %v3425, 0.0
      %v3498 = vmax.f32 %v3430, 0.0
      %v3499 = vmax.f32 %v3433, 0.0
      %v3500 = vpack.c.bf16 %v3437, %v3436
      %v3501 = vpack.c.bf16 %v3439, %v3438
      %v3502 = vpack.c.bf16 %v3441, %v3440
      %v3503 = vpack.c.bf16 %v3443, %v3442
      %v3504 = vpack.c.bf16 %v3445, %v3444
      %v3505 = vpack.c.bf16 %v3447, %v3446
      %v3506 = vpack.c.bf16 %v3449, %v3448
      %v3507 = vpack.c.bf16 %v3451, %v3450
      %v3508 = vpack.c.bf16 %v3453, %v3452
      %v3509 = vpack.c.bf16 %v3455, %v3454
      %v3510 = vpack.c.bf16 %v3457, %v3456
      %v3511 = vpack.c.bf16 %v3459, %v3458
      %v3512 = vpack.c.bf16 %v3461, %v3460
      %v3513 = vpack.c.bf16 %v3463, %v3462
      %v3514 = vpack.c.bf16 %v3465, %v3464
      %v3515 = vpack.c.bf16 %v3467, %v3466
      %v3516 = vpack.c.bf16 %v3469, %v3468
      %v3517 = vpack.c.bf16 %v3471, %v3470
      %v3518 = vpack.c.bf16 %v3473, %v3472
      %v3519 = vpack.c.bf16 %v3475, %v3474
      %v3520 = vpack.c.bf16 %v3477, %v3476
      %v3521 = vpack.c.bf16 %v3479, %v3478
      %v3522 = vpack.c.bf16 %v3481, %v3480
      %v3523 = vpack.c.bf16 %v3483, %v3482
      %v3524 = vpack.c.bf16 %v3485, %v3484
      %v3525 = vpack.c.bf16 %v3487, %v3486
      %v3526 = vpack.c.bf16 %v3489, %v3488
      %v3527 = vpack.c.bf16 %v3491, %v3490
      %v3528 = vpack.c.bf16 %v3493, %v3492
      %v3529 = vpack.c.bf16 %v3495, %v3494
      %v3530 = vpack.c.bf16 %v3497, %v3496
      %v3531 = vpack.c.bf16 %v3499, %v3498
      %v3532 = vld [vmem:[%s11] sm:$0xf]
      %v3533 = vld [vmem:[%s11 + $0x4] sm:$0xf]
      %v3534 = vld [vmem:[%s11 + $0x8] sm:$0xf]
      %v3535 = vld [vmem:[%s11 + $0xc] sm:$0xf]
      %v3536 = vld [vmem:[%s12] sm:$0x1]
      %v3538 = vlaneseq
      %v3539 = vshrl.u32 %v3538, 7
      %v3540 = vsub.s32 0, %v3539
      %v3541 = vrot.slane %v3536, %v3540
      %v3547 = vunpack.c.l.b16 %v3532
      %v3548 = vunpack.c.l.b16 %v3533
      %v3549 = vunpack.c.l.b16 %v3534
      %v3550 = vunpack.c.l.b16 %v3535
      %v3551 = vpack.c.b16 %v3548, %v3547
      %v3552 = vpack.c.b16 %v3550, %v3549
      %v3556 = vsel %vm1429, %v3500, 0
      %v3559 = vsel %vm1429, %v3501, 0
      %v3562 = vsel %vm1429, %v3502, 0
      %v3565 = vsel %vm1429, %v3503, 0
      %v3568 = vsel %vm1429, %v3504, 0
      %v3571 = vsel %vm1429, %v3505, 0
      %v3574 = vsel %vm1429, %v3506, 0
      %v3577 = vsel %vm1429, %v3507, 0
      %v3580 = vsel %vm1429, %v3508, 0
      %v3583 = vsel %vm1429, %v3509, 0
      %v3586 = vsel %vm1429, %v3510, 0
      %v3589 = vsel %vm1429, %v3511, 0
      %v3592 = vsel %vm1429, %v3512, 0
      %v3595 = vsel %vm1429, %v3513, 0
      %v3598 = vsel %vm1429, %v3514, 0
      %v3601 = vsel %vm1429, %v3515, 0
      %v3604 = vsel %vm1429, %v3516, 0
      %v3607 = vsel %vm1429, %v3517, 0
      %v3610 = vsel %vm1429, %v3518, 0
      %v3613 = vsel %vm1429, %v3519, 0
      %v3616 = vsel %vm1429, %v3520, 0
      %v3619 = vsel %vm1429, %v3521, 0
      %v3622 = vsel %vm1429, %v3522, 0
      %v3625 = vsel %vm1429, %v3523, 0
      %v3628 = vsel %vm1429, %v3524, 0
      %v3631 = vsel %vm1429, %v3525, 0
      %v3634 = vsel %vm1429, %v3526, 0
      %v3637 = vsel %vm1429, %v3527, 0
      %v3640 = vsel %vm1429, %v3528, 0
      %v3643 = vsel %vm1429, %v3529, 0
      %v3646 = vsel %vm1429, %v3530, 0
      %v3649 = vsel %vm1429, %v3531, 0
      %3651 = vmatprep.subr.bf16.mxu0 0
      %3652 = vmatpush1.bf16.msra.mxu0 0
      %3653 = vmatprep.subr.bf16.mxu0 0
      %3654 = vmatpush1.bf16.msra.mxu0 0
      %3655 = vmatprep.subr.bf16.mxu0 0
      %3656 = vmatpush1.bf16.msra.mxu0 0
      %3657 = vmatprep.subr.bf16.mxu0 0
      %3658 = vmatpush1.bf16.msra.mxu0 0
      %3659 = vmatprep.subr.bf16.mxu0 0
      %3660 = vmatpush1.bf16.msra.mxu0 0
      %3661 = vmatprep.subr.bf16.mxu0 0
      %3662 = vmatpush1.bf16.msra.mxu0 0
      %3663 = vmatprep.subr.bf16.mxu0 0
      %3664 = vmatpush1.bf16.msra.mxu0 %v3552
      %3665 = vmatprep.subr.bf16.mxu0 0
      %3666 = vmatpush1.bf16.msra.mxu0 %v3551
      %3667 = vmatprep.subr.bf16.mxu0 0
      %3668 = vmatpush2.bf16.msra.mxu0 0
      %3669 = vmatprep.subr.bf16.mxu0 0
      %3670 = vmatpush2.bf16.msra.mxu0 0
      %3671 = vmatprep.subr.bf16.mxu0 0
      %3672 = vmatpush2.bf16.msra.mxu0 0
      %3673 = vmatprep.subr.bf16.mxu0 0
      %3674 = vmatpush2.bf16.msra.mxu0 0
      %3675 = vmatprep.subr.bf16.mxu0 0
      %3676 = vmatpush2.bf16.msra.mxu0 0
      %3677 = vmatprep.subr.bf16.mxu0 0
      %3678 = vmatpush2.bf16.msra.mxu0 0
      %3679 = vmatprep.subr.bf16.mxu0 0
      %3680 = vmatpush2.bf16.msra.mxu0 0
      %3681 = vmatprep.subr.bf16.mxu0 0
      %3682 = vmatpush2.bf16.msra.mxu0 0
      %3683 = vmatprep.mubr.bf16.mxu0 0
      %3684 = vmatmul.mubr.bf16.gmra.mxu0 %v3556
      %v3685 = vpop.f32.mrf.mxu0
      %v3686 = vadd.f32 %v3541, %v3685
      %v3687 = vpop.f32.mrf.mxu0
      %v3688 = vpop.f32.mrf.mxu0
      %v3689 = vadd.f32 %v3541, %v3688
      %v3690 = vpop.f32.mrf.mxu0
      %3691 = vmatprep.mubr.bf16.mxu0 0
      %3692 = vmatmul.mubr.bf16.gmra.mxu0 %v3559
      %v3693 = vpop.f32.mrf.mxu0
      %v3694 = vadd.f32 %v3541, %v3693
      %v3695 = vpop.f32.mrf.mxu0
      %v3696 = vpop.f32.mrf.mxu0
      %v3697 = vadd.f32 %v3541, %v3696
      %v3698 = vpop.f32.mrf.mxu0
      %3699 = vmatprep.mubr.bf16.mxu0 0
      %3700 = vmatmul.mubr.bf16.gmra.mxu0 %v3562
      %v3701 = vpop.f32.mrf.mxu0
      %v3702 = vadd.f32 %v3541, %v3701
      %v3703 = vpop.f32.mrf.mxu0
      %v3704 = vpop.f32.mrf.mxu0
      %v3705 = vadd.f32 %v3541, %v3704
      %v3706 = vpop.f32.mrf.mxu0
      %3707 = vmatprep.mubr.bf16.mxu0 0
      %3708 = vmatmul.mubr.bf16.gmra.mxu0 %v3565
      %v3709 = vpop.f32.mrf.mxu0
      %v3710 = vadd.f32 %v3541, %v3709
      %v3711 = vpop.f32.mrf.mxu0
      %v3712 = vpop.f32.mrf.mxu0
      %v3713 = vadd.f32 %v3541, %v3712
      %v3714 = vpop.f32.mrf.mxu0
      %3715 = vmatprep.mubr.bf16.mxu0 0
      %3716 = vmatmul.mubr.bf16.gmra.mxu0 %v3568
      %v3717 = vpop.f32.mrf.mxu0
      %v3718 = vadd.f32 %v3541, %v3717
      %v3719 = vpop.f32.mrf.mxu0
      %v3720 = vpop.f32.mrf.mxu0
      %v3721 = vadd.f32 %v3541, %v3720
      %v3722 = vpop.f32.mrf.mxu0
      %3723 = vmatprep.mubr.bf16.mxu0 0
      %3724 = vmatmul.mubr.bf16.gmra.mxu0 %v3571
      %v3725 = vpop.f32.mrf.mxu0
      %v3726 = vadd.f32 %v3541, %v3725
      %v3727 = vpop.f32.mrf.mxu0
      %v3728 = vpop.f32.mrf.mxu0
      %v3729 = vadd.f32 %v3541, %v3728
      %v3730 = vpop.f32.mrf.mxu0
      %3731 = vmatprep.mubr.bf16.mxu0 0
      %3732 = vmatmul.mubr.bf16.gmra.mxu0 %v3574
      %v3733 = vpop.f32.mrf.mxu0
      %v3734 = vadd.f32 %v3541, %v3733
      %v3735 = vpop.f32.mrf.mxu0
      %v3736 = vpop.f32.mrf.mxu0
      %v3737 = vadd.f32 %v3541, %v3736
      %v3738 = vpop.f32.mrf.mxu0
      %3739 = vmatprep.mubr.bf16.mxu0 0
      %3740 = vmatmul.mubr.bf16.gmra.mxu0 %v3577
      %v3741 = vpop.f32.mrf.mxu0
      %v3742 = vadd.f32 %v3541, %v3741
      %v3743 = vpop.f32.mrf.mxu0
      %v3744 = vpop.f32.mrf.mxu0
      %v3745 = vadd.f32 %v3541, %v3744
      %v3746 = vpop.f32.mrf.mxu0
      %3747 = vmatprep.mubr.bf16.mxu0 0
      %3748 = vmatmul.mubr.bf16.gmra.mxu0 %v3580
      %v3749 = vpop.f32.mrf.mxu0
      %v3750 = vadd.f32 %v3541, %v3749
      %v3751 = vpop.f32.mrf.mxu0
      %v3752 = vpop.f32.mrf.mxu0
      %v3753 = vadd.f32 %v3541, %v3752
      %v3754 = vpop.f32.mrf.mxu0
      %3755 = vmatprep.mubr.bf16.mxu0 0
      %3756 = vmatmul.mubr.bf16.gmra.mxu0 %v3583
      %v3757 = vpop.f32.mrf.mxu0
      %v3758 = vadd.f32 %v3541, %v3757
      %v3759 = vpop.f32.mrf.mxu0
      %v3760 = vpop.f32.mrf.mxu0
      %v3761 = vadd.f32 %v3541, %v3760
      %v3762 = vpop.f32.mrf.mxu0
      %3763 = vmatprep.mubr.bf16.mxu0 0
      %3764 = vmatmul.mubr.bf16.gmra.mxu0 %v3586
      %v3765 = vpop.f32.mrf.mxu0
      %v3766 = vadd.f32 %v3541, %v3765
      %v3767 = vpop.f32.mrf.mxu0
      %v3768 = vpop.f32.mrf.mxu0
      %v3769 = vadd.f32 %v3541, %v3768
      %v3770 = vpop.f32.mrf.mxu0
      %3771 = vmatprep.mubr.bf16.mxu0 0
      %3772 = vmatmul.mubr.bf16.gmra.mxu0 %v3589
      %v3773 = vpop.f32.mrf.mxu0
      %v3774 = vadd.f32 %v3541, %v3773
      %v3775 = vpop.f32.mrf.mxu0
      %v3776 = vpop.f32.mrf.mxu0
      %v3777 = vadd.f32 %v3541, %v3776
      %v3778 = vpop.f32.mrf.mxu0
      %3779 = vmatprep.mubr.bf16.mxu0 0
      %3780 = vmatmul.mubr.bf16.gmra.mxu0 %v3592
      %v3781 = vpop.f32.mrf.mxu0
      %v3782 = vadd.f32 %v3541, %v3781
      %v3783 = vpop.f32.mrf.mxu0
      %v3784 = vpop.f32.mrf.mxu0
      %v3785 = vadd.f32 %v3541, %v3784
      %v3786 = vpop.f32.mrf.mxu0
      %3787 = vmatprep.mubr.bf16.mxu0 0
      %3788 = vmatmul.mubr.bf16.gmra.mxu0 %v3595
      %v3789 = vpop.f32.mrf.mxu0
      %v3790 = vadd.f32 %v3541, %v3789
      %v3791 = vpop.f32.mrf.mxu0
      %v3792 = vpop.f32.mrf.mxu0
      %v3793 = vadd.f32 %v3541, %v3792
      %v3794 = vpop.f32.mrf.mxu0
      %3795 = vmatprep.mubr.bf16.mxu0 0
      %3796 = vmatmul.mubr.bf16.gmra.mxu0 %v3598
      %v3797 = vpop.f32.mrf.mxu0
      %v3798 = vadd.f32 %v3541, %v3797
      %v3799 = vpop.f32.mrf.mxu0
      %v3800 = vpop.f32.mrf.mxu0
      %v3801 = vadd.f32 %v3541, %v3800
      %v3802 = vpop.f32.mrf.mxu0
      %3803 = vmatprep.mubr.bf16.mxu0 0
      %3804 = vmatmul.mubr.bf16.gmra.mxu0 %v3601
      %v3805 = vpop.f32.mrf.mxu0
      %v3806 = vadd.f32 %v3541, %v3805
      %v3807 = vpop.f32.mrf.mxu0
      %v3808 = vpop.f32.mrf.mxu0
      %v3809 = vadd.f32 %v3541, %v3808
      %v3810 = vpop.f32.mrf.mxu0
      %3811 = vmatprep.mubr.bf16.mxu0 0
      %3812 = vmatmul.mubr.bf16.gmra.mxu0 %v3604
      %v3813 = vpop.f32.mrf.mxu0
      %v3814 = vadd.f32 %v3541, %v3813
      %v3815 = vpop.f32.mrf.mxu0
      %v3816 = vpop.f32.mrf.mxu0
      %v3817 = vadd.f32 %v3541, %v3816
      %v3818 = vpop.f32.mrf.mxu0
      %3819 = vmatprep.mubr.bf16.mxu0 0
      %3820 = vmatmul.mubr.bf16.gmra.mxu0 %v3607
      %v3821 = vpop.f32.mrf.mxu0
      %v3822 = vadd.f32 %v3541, %v3821
      %v3823 = vpop.f32.mrf.mxu0
      %v3824 = vpop.f32.mrf.mxu0
      %v3825 = vadd.f32 %v3541, %v3824
      %v3826 = vpop.f32.mrf.mxu0
      %3827 = vmatprep.mubr.bf16.mxu0 0
      %3828 = vmatmul.mubr.bf16.gmra.mxu0 %v3610
      %v3829 = vpop.f32.mrf.mxu0
      %v3830 = vadd.f32 %v3541, %v3829
      %v3831 = vpop.f32.mrf.mxu0
      %v3832 = vpop.f32.mrf.mxu0
      %v3833 = vadd.f32 %v3541, %v3832
      %v3834 = vpop.f32.mrf.mxu0
      %3835 = vmatprep.mubr.bf16.mxu0 0
      %3836 = vmatmul.mubr.bf16.gmra.mxu0 %v3613
      %v3837 = vpop.f32.mrf.mxu0
      %v3838 = vadd.f32 %v3541, %v3837
      %v3839 = vpop.f32.mrf.mxu0
      %v3840 = vpop.f32.mrf.mxu0
      %v3841 = vadd.f32 %v3541, %v3840
      %v3842 = vpop.f32.mrf.mxu0
      %3843 = vmatprep.mubr.bf16.mxu0 0
      %3844 = vmatmul.mubr.bf16.gmra.mxu0 %v3616
      %v3845 = vpop.f32.mrf.mxu0
      %v3846 = vadd.f32 %v3541, %v3845
      %v3847 = vpop.f32.mrf.mxu0
      %v3848 = vpop.f32.mrf.mxu0
      %v3849 = vadd.f32 %v3541, %v3848
      %v3850 = vpop.f32.mrf.mxu0
      %3851 = vmatprep.mubr.bf16.mxu0 0
      %3852 = vmatmul.mubr.bf16.gmra.mxu0 %v3619
      %v3853 = vpop.f32.mrf.mxu0
      %v3854 = vadd.f32 %v3541, %v3853
      %v3855 = vpop.f32.mrf.mxu0
      %v3856 = vpop.f32.mrf.mxu0
      %v3857 = vadd.f32 %v3541, %v3856
      %v3858 = vpop.f32.mrf.mxu0
      %3859 = vmatprep.mubr.bf16.mxu0 0
      %3860 = vmatmul.mubr.bf16.gmra.mxu0 %v3622
      %v3861 = vpop.f32.mrf.mxu0
      %v3862 = vadd.f32 %v3541, %v3861
      %v3863 = vpop.f32.mrf.mxu0
      %v3864 = vpop.f32.mrf.mxu0
      %v3865 = vadd.f32 %v3541, %v3864
      %v3866 = vpop.f32.mrf.mxu0
      %3867 = vmatprep.mubr.bf16.mxu0 0
      %3868 = vmatmul.mubr.bf16.gmra.mxu0 %v3625
      %v3869 = vpop.f32.mrf.mxu0
      %v3870 = vadd.f32 %v3541, %v3869
      %v3871 = vpop.f32.mrf.mxu0
      %v3872 = vpop.f32.mrf.mxu0
      %v3873 = vadd.f32 %v3541, %v3872
      %v3874 = vpop.f32.mrf.mxu0
      %3875 = vmatprep.mubr.bf16.mxu0 0
      %3876 = vmatmul.mubr.bf16.gmra.mxu0 %v3628
      %v3877 = vpop.f32.mrf.mxu0
      %v3878 = vadd.f32 %v3541, %v3877
      %v3879 = vpop.f32.mrf.mxu0
      %v3880 = vpop.f32.mrf.mxu0
      %v3881 = vadd.f32 %v3541, %v3880
      %v3882 = vpop.f32.mrf.mxu0
      %3883 = vmatprep.mubr.bf16.mxu0 0
      %3884 = vmatmul.mubr.bf16.gmra.mxu0 %v3631
      %v3885 = vpop.f32.mrf.mxu0
      %v3886 = vadd.f32 %v3541, %v3885
      %v3887 = vpop.f32.mrf.mxu0
      %v3888 = vpop.f32.mrf.mxu0
      %v3889 = vadd.f32 %v3541, %v3888
      %v3890 = vpop.f32.mrf.mxu0
      %3891 = vmatprep.mubr.bf16.mxu0 0
      %3892 = vmatmul.mubr.bf16.gmra.mxu0 %v3634
      %v3893 = vpop.f32.mrf.mxu0
      %v3894 = vadd.f32 %v3541, %v3893
      %v3895 = vpop.f32.mrf.mxu0
      %v3896 = vpop.f32.mrf.mxu0
      %v3897 = vadd.f32 %v3541, %v3896
      %v3898 = vpop.f32.mrf.mxu0
      %3899 = vmatprep.mubr.bf16.mxu0 0
      %3900 = vmatmul.mubr.bf16.gmra.mxu0 %v3637
      %v3901 = vpop.f32.mrf.mxu0
      %v3902 = vadd.f32 %v3541, %v3901
      %v3903 = vpop.f32.mrf.mxu0
      %v3904 = vpop.f32.mrf.mxu0
      %v3905 = vadd.f32 %v3541, %v3904
      %v3906 = vpop.f32.mrf.mxu0
      %3907 = vmatprep.mubr.bf16.mxu0 0
      %3908 = vmatmul.mubr.bf16.gmra.mxu0 %v3640
      %v3909 = vpop.f32.mrf.mxu0
      %v3910 = vadd.f32 %v3541, %v3909
      %v3911 = vpop.f32.mrf.mxu0
      %v3912 = vpop.f32.mrf.mxu0
      %v3913 = vadd.f32 %v3541, %v3912
      %v3914 = vpop.f32.mrf.mxu0
      %3915 = vmatprep.mubr.bf16.mxu0 0
      %3916 = vmatmul.mubr.bf16.gmra.mxu0 %v3643
      %v3917 = vpop.f32.mrf.mxu0
      %v3918 = vadd.f32 %v3541, %v3917
      %v3919 = vpop.f32.mrf.mxu0
      %v3920 = vpop.f32.mrf.mxu0
      %v3921 = vadd.f32 %v3541, %v3920
      %v3922 = vpop.f32.mrf.mxu0
      %3923 = vmatprep.mubr.bf16.mxu0 0
      %3924 = vmatmul.mubr.bf16.gmra.mxu0 %v3646
      %v3925 = vpop.f32.mrf.mxu0
      %v3926 = vadd.f32 %v3541, %v3925
      %v3927 = vpop.f32.mrf.mxu0
      %v3928 = vpop.f32.mrf.mxu0
      %v3929 = vadd.f32 %v3541, %v3928
      %v3930 = vpop.f32.mrf.mxu0
      %3931 = vmatprep.mubr.bf16.mxu0 0
      %3932 = vmatmul.mubr.bf16.gmra.mxu0 %v3649
      %v3933 = vpop.f32.mrf.mxu0
      %v3934 = vadd.f32 %v3541, %v3933
      %v3935 = vpop.f32.mrf.mxu0
      %v3936 = vpop.f32.mrf.mxu0
      %v3937 = vadd.f32 %v3541, %v3936
      %v3938 = vpop.f32.mrf.mxu0
      %3939 = vdwg.mxu0
      %3940 = vmax.xlane.f32.xlu0 %v3686
      %v3941 = vpop.xlane.xlu0 %3940
      %3942 = vmax.xlane.f32.xlu0 %v3689
      %v3943 = vpop.xlane.xlu0 %3942
      %3944 = vmax.xlane.f32.xlu0 %v3694
      %v3945 = vpop.xlane.xlu0 %3944
      %3946 = vmax.xlane.f32.xlu0 %v3697
      %v3947 = vpop.xlane.xlu0 %3946
      %3948 = vmax.xlane.f32.xlu0 %v3702
      %v3949 = vpop.xlane.xlu0 %3948
      %3950 = vmax.xlane.f32.xlu0 %v3705
      %v3951 = vpop.xlane.xlu0 %3950
      %3952 = vmax.xlane.f32.xlu0 %v3710
      %v3953 = vpop.xlane.xlu0 %3952
      %3954 = vmax.xlane.f32.xlu0 %v3713
      %v3955 = vpop.xlane.xlu0 %3954
      %3956 = vmax.xlane.f32.xlu0 %v3718
      %v3957 = vpop.xlane.xlu0 %3956
      %3958 = vmax.xlane.f32.xlu0 %v3721
      %v3959 = vpop.xlane.xlu0 %3958
      %3960 = vmax.xlane.f32.xlu0 %v3726
      %v3961 = vpop.xlane.xlu0 %3960
      %3962 = vmax.xlane.f32.xlu0 %v3729
      %v3963 = vpop.xlane.xlu0 %3962
      %3964 = vmax.xlane.f32.xlu0 %v3734
      %v3965 = vpop.xlane.xlu0 %3964
      %3966 = vmax.xlane.f32.xlu0 %v3737
      %v3967 = vpop.xlane.xlu0 %3966
      %3968 = vmax.xlane.f32.xlu0 %v3742
      %v3969 = vpop.xlane.xlu0 %3968
      %3970 = vmax.xlane.f32.xlu0 %v3745
      %v3971 = vpop.xlane.xlu0 %3970
      %3972 = vmax.xlane.f32.xlu0 %v3750
      %v3973 = vpop.xlane.xlu0 %3972
      %3974 = vmax.xlane.f32.xlu0 %v3753
      %v3975 = vpop.xlane.xlu0 %3974
      %3976 = vmax.xlane.f32.xlu0 %v3758
      %v3977 = vpop.xlane.xlu0 %3976
      %3978 = vmax.xlane.f32.xlu0 %v3761
      %v3979 = vpop.xlane.xlu0 %3978
      %3980 = vmax.xlane.f32.xlu0 %v3766
      %v3981 = vpop.xlane.xlu0 %3980
      %3982 = vmax.xlane.f32.xlu0 %v3769
      %v3983 = vpop.xlane.xlu0 %3982
      %3984 = vmax.xlane.f32.xlu0 %v3774
      %v3985 = vpop.xlane.xlu0 %3984
      %3986 = vmax.xlane.f32.xlu0 %v3777
      %v3987 = vpop.xlane.xlu0 %3986
      %3988 = vmax.xlane.f32.xlu0 %v3782
      %v3989 = vpop.xlane.xlu0 %3988
      %3990 = vmax.xlane.f32.xlu0 %v3785
      %v3991 = vpop.xlane.xlu0 %3990
      %3992 = vmax.xlane.f32.xlu0 %v3790
      %v3993 = vpop.xlane.xlu0 %3992
      %3994 = vmax.xlane.f32.xlu0 %v3793
      %v3995 = vpop.xlane.xlu0 %3994
      %3996 = vmax.xlane.f32.xlu0 %v3798
      %v3997 = vpop.xlane.xlu0 %3996
      %3998 = vmax.xlane.f32.xlu0 %v3801
      %v3999 = vpop.xlane.xlu0 %3998
      %4000 = vmax.xlane.f32.xlu0 %v3806
      %v4001 = vpop.xlane.xlu0 %4000
      %4002 = vmax.xlane.f32.xlu0 %v3809
      %v4003 = vpop.xlane.xlu0 %4002
      %4004 = vmax.xlane.f32.xlu0 %v3814
      %v4005 = vpop.xlane.xlu0 %4004
      %4006 = vmax.xlane.f32.xlu0 %v3817
      %v4007 = vpop.xlane.xlu0 %4006
      %4008 = vmax.xlane.f32.xlu0 %v3822
      %v4009 = vpop.xlane.xlu0 %4008
      %4010 = vmax.xlane.f32.xlu0 %v3825
      %v4011 = vpop.xlane.xlu0 %4010
      %4012 = vmax.xlane.f32.xlu0 %v3830
      %v4013 = vpop.xlane.xlu0 %4012
      %4014 = vmax.xlane.f32.xlu0 %v3833
      %v4015 = vpop.xlane.xlu0 %4014
      %4016 = vmax.xlane.f32.xlu0 %v3838
      %v4017 = vpop.xlane.xlu0 %4016
      %4018 = vmax.xlane.f32.xlu0 %v3841
      %v4019 = vpop.xlane.xlu0 %4018
      %4020 = vmax.xlane.f32.xlu0 %v3846
      %v4021 = vpop.xlane.xlu0 %4020
      %4022 = vmax.xlane.f32.xlu0 %v3849
      %v4023 = vpop.xlane.xlu0 %4022
      %4024 = vmax.xlane.f32.xlu0 %v3854
      %v4025 = vpop.xlane.xlu0 %4024
      %4026 = vmax.xlane.f32.xlu0 %v3857
      %v4027 = vpop.xlane.xlu0 %4026
      %4028 = vmax.xlane.f32.xlu0 %v3862
      %v4029 = vpop.xlane.xlu0 %4028
      %4030 = vmax.xlane.f32.xlu0 %v3865
      %v4031 = vpop.xlane.xlu0 %4030
      %4032 = vmax.xlane.f32.xlu0 %v3870
      %v4033 = vpop.xlane.xlu0 %4032
      %4034 = vmax.xlane.f32.xlu0 %v3873
      %v4035 = vpop.xlane.xlu0 %4034
      %4036 = vmax.xlane.f32.xlu0 %v3878
      %v4037 = vpop.xlane.xlu0 %4036
      %4038 = vmax.xlane.f32.xlu0 %v3881
      %v4039 = vpop.xlane.xlu0 %4038
      %4040 = vmax.xlane.f32.xlu0 %v3886
      %v4041 = vpop.xlane.xlu0 %4040
      %4042 = vmax.xlane.f32.xlu0 %v3889
      %v4043 = vpop.xlane.xlu0 %4042
      %4044 = vmax.xlane.f32.xlu0 %v3894
      %v4045 = vpop.xlane.xlu0 %4044
      %4046 = vmax.xlane.f32.xlu0 %v3897
      %v4047 = vpop.xlane.xlu0 %4046
      %4048 = vmax.xlane.f32.xlu0 %v3902
      %v4049 = vpop.xlane.xlu0 %4048
      %4050 = vmax.xlane.f32.xlu0 %v3905
      %v4051 = vpop.xlane.xlu0 %4050
      %4052 = vmax.xlane.f32.xlu0 %v3910
      %v4053 = vpop.xlane.xlu0 %4052
      %4054 = vmax.xlane.f32.xlu0 %v3913
      %v4055 = vpop.xlane.xlu0 %4054
      %4056 = vmax.xlane.f32.xlu0 %v3918
      %v4057 = vpop.xlane.xlu0 %4056
      %4058 = vmax.xlane.f32.xlu0 %v3921
      %v4059 = vpop.xlane.xlu0 %4058
      %4060 = vmax.xlane.f32.xlu0 %v3926
      %v4061 = vpop.xlane.xlu0 %4060
      %4062 = vmax.xlane.f32.xlu0 %v3929
      %v4063 = vpop.xlane.xlu0 %4062
      %4064 = vmax.xlane.f32.xlu0 %v3934
      %v4065 = vpop.xlane.xlu0 %4064
      %4066 = vmax.xlane.f32.xlu0 %v3937
      %v4067 = vpop.xlane.xlu0 %4066
      %v4068 = vsub.f32 %v3686, %v3941
      %v4069 = vsub.f32 %v3689, %v3943
      %v4070 = vsub.f32 %v3694, %v3945
      %v4071 = vsub.f32 %v3697, %v3947
      %v4072 = vsub.f32 %v3702, %v3949
      %v4073 = vsub.f32 %v3705, %v3951
      %v4074 = vsub.f32 %v3710, %v3953
      %v4075 = vsub.f32 %v3713, %v3955
      %v4076 = vsub.f32 %v3718, %v3957
      %v4077 = vsub.f32 %v3721, %v3959
      %v4078 = vsub.f32 %v3726, %v3961
      %v4079 = vsub.f32 %v3729, %v3963
      %v4080 = vsub.f32 %v3734, %v3965
      %v4081 = vsub.f32 %v3737, %v3967
      %v4082 = vsub.f32 %v3742, %v3969
      %v4083 = vsub.f32 %v3745, %v3971
      %v4084 = vsub.f32 %v3750, %v3973
      %v4085 = vsub.f32 %v3753, %v3975
      %v4086 = vsub.f32 %v3758, %v3977
      %v4087 = vsub.f32 %v3761, %v3979
      %v4088 = vsub.f32 %v3766, %v3981
      %v4089 = vsub.f32 %v3769, %v3983
      %v4090 = vsub.f32 %v3774, %v3985
      %v4091 = vsub.f32 %v3777, %v3987
      %v4092 = vsub.f32 %v3782, %v3989
      %v4093 = vsub.f32 %v3785, %v3991
      %v4094 = vsub.f32 %v3790, %v3993
      %v4095 = vsub.f32 %v3793, %v3995
      %v4096 = vsub.f32 %v3798, %v3997
      %v4097 = vsub.f32 %v3801, %v3999
      %v4098 = vsub.f32 %v3806, %v4001
      %v4099 = vsub.f32 %v3809, %v4003
      %v4100 = vsub.f32 %v3814, %v4005
      %v4101 = vsub.f32 %v3817, %v4007
      %v4102 = vsub.f32 %v3822, %v4009
      %v4103 = vsub.f32 %v3825, %v4011
      %v4104 = vsub.f32 %v3830, %v4013
      %v4105 = vsub.f32 %v3833, %v4015
      %v4106 = vsub.f32 %v3838, %v4017
      %v4107 = vsub.f32 %v3841, %v4019
      %v4108 = vsub.f32 %v3846, %v4021
      %v4109 = vsub.f32 %v3849, %v4023
      %v4110 = vsub.f32 %v3854, %v4025
      %v4111 = vsub.f32 %v3857, %v4027
      %v4112 = vsub.f32 %v3862, %v4029
      %v4113 = vsub.f32 %v3865, %v4031
      %v4114 = vsub.f32 %v3870, %v4033
      %v4115 = vsub.f32 %v3873, %v4035
      %v4116 = vsub.f32 %v3878, %v4037
      %v4117 = vsub.f32 %v3881, %v4039
      %v4118 = vsub.f32 %v3886, %v4041
      %v4119 = vsub.f32 %v3889, %v4043
      %v4120 = vsub.f32 %v3894, %v4045
      %v4121 = vsub.f32 %v3897, %v4047
      %v4122 = vsub.f32 %v3902, %v4049
      %v4123 = vsub.f32 %v3905, %v4051
      %v4124 = vsub.f32 %v3910, %v4053
      %v4125 = vsub.f32 %v3913, %v4055
      %v4126 = vsub.f32 %v3918, %v4057
      %v4127 = vsub.f32 %v3921, %v4059
      %v4128 = vsub.f32 %v3926, %v4061
      %v4129 = vsub.f32 %v3929, %v4063
      %v4130 = vsub.f32 %v3934, %v4065
      %v4131 = vsub.f32 %v3937, %v4067
      %v4132 = vmul.f32 %v4068, 1.442695
      %v4133 = vpow.pop %v4132
      %v4134 = vmul.f32 %v4069, 1.442695
      %v4135 = vpow.pop %v4134
      %v4136 = vmul.f32 %v4070, 1.442695
      %v4137 = vpow.pop %v4136
      %v4138 = vmul.f32 %v4071, 1.442695
      %v4139 = vpow.pop %v4138
      %v4140 = vmul.f32 %v4072, 1.442695
      %v4141 = vpow.pop %v4140
      %v4142 = vmul.f32 %v4073, 1.442695
      %v4143 = vpow.pop %v4142
      %v4144 = vmul.f32 %v4074, 1.442695
      %v4145 = vpow.pop %v4144
      %v4146 = vmul.f32 %v4075, 1.442695
      %v4147 = vpow.pop %v4146
      %v4148 = vmul.f32 %v4076, 1.442695
      %v4149 = vpow.pop %v4148
      %v4150 = vmul.f32 %v4077, 1.442695
      %v4151 = vpow.pop %v4150
      %v4152 = vmul.f32 %v4078, 1.442695
      %v4153 = vpow.pop %v4152
      %v4154 = vmul.f32 %v4079, 1.442695
      %v4155 = vpow.pop %v4154
      %v4156 = vmul.f32 %v4080, 1.442695
      %v4157 = vpow.pop %v4156
      %v4158 = vmul.f32 %v4081, 1.442695
      %v4159 = vpow.pop %v4158
      %v4160 = vmul.f32 %v4082, 1.442695
      %v4161 = vpow.pop %v4160
      %v4162 = vmul.f32 %v4083, 1.442695
      %v4163 = vpow.pop %v4162
      %v4164 = vmul.f32 %v4084, 1.442695
      %v4165 = vpow.pop %v4164
      %v4166 = vmul.f32 %v4085, 1.442695
      %v4167 = vpow.pop %v4166
      %v4168 = vmul.f32 %v4086, 1.442695
      %v4169 = vpow.pop %v4168
      %v4170 = vmul.f32 %v4087, 1.442695
      %v4171 = vpow.pop %v4170
      %v4172 = vmul.f32 %v4088, 1.442695
      %v4173 = vpow.pop %v4172
      %v4174 = vmul.f32 %v4089, 1.442695
      %v4175 = vpow.pop %v4174
      %v4176 = vmul.f32 %v4090, 1.442695
      %v4177 = vpow.pop %v4176
      %v4178 = vmul.f32 %v4091, 1.442695
      %v4179 = vpow.pop %v4178
      %v4180 = vmul.f32 %v4092, 1.442695
      %v4181 = vpow.pop %v4180
      %v4182 = vmul.f32 %v4093, 1.442695
      %v4183 = vpow.pop %v4182
      %v4184 = vmul.f32 %v4094, 1.442695
      %v4185 = vpow.pop %v4184
      %v4186 = vmul.f32 %v4095, 1.442695
      %v4187 = vpow.pop %v4186
      %v4188 = vmul.f32 %v4096, 1.442695
      %v4189 = vpow.pop %v4188
      %v4190 = vmul.f32 %v4097, 1.442695
      %v4191 = vpow.pop %v4190
      %v4192 = vmul.f32 %v4098, 1.442695
      %v4193 = vpow.pop %v4192
      %v4194 = vmul.f32 %v4099, 1.442695
      %v4195 = vpow.pop %v4194
      %v4196 = vmul.f32 %v4100, 1.442695
      %v4197 = vpow.pop %v4196
      %v4198 = vmul.f32 %v4101, 1.442695
      %v4199 = vpow.pop %v4198
      %v4200 = vmul.f32 %v4102, 1.442695
      %v4201 = vpow.pop %v4200
      %v4202 = vmul.f32 %v4103, 1.442695
      %v4203 = vpow.pop %v4202
      %v4204 = vmul.f32 %v4104, 1.442695
      %v4205 = vpow.pop %v4204
      %v4206 = vmul.f32 %v4105, 1.442695
      %v4207 = vpow.pop %v4206
      %v4208 = vmul.f32 %v4106, 1.442695
      %v4209 = vpow.pop %v4208
      %v4210 = vmul.f32 %v4107, 1.442695
      %v4211 = vpow.pop %v4210
      %v4212 = vmul.f32 %v4108, 1.442695
      %v4213 = vpow.pop %v4212
      %v4214 = vmul.f32 %v4109, 1.442695
      %v4215 = vpow.pop %v4214
      %v4216 = vmul.f32 %v4110, 1.442695
      %v4217 = vpow.pop %v4216
      %v4218 = vmul.f32 %v4111, 1.442695
      %v4219 = vpow.pop %v4218
      %v4220 = vmul.f32 %v4112, 1.442695
      %v4221 = vpow.pop %v4220
      %v4222 = vmul.f32 %v4113, 1.442695
      %v4223 = vpow.pop %v4222
      %v4224 = vmul.f32 %v4114, 1.442695
      %v4225 = vpow.pop %v4224
      %v4226 = vmul.f32 %v4115, 1.442695
      %v4227 = vpow.pop %v4226
      %v4228 = vmul.f32 %v4116, 1.442695
      %v4229 = vpow.pop %v4228
      %v4230 = vmul.f32 %v4117, 1.442695
      %v4231 = vpow.pop %v4230
      %v4232 = vmul.f32 %v4118, 1.442695
      %v4233 = vpow.pop %v4232
      %v4234 = vmul.f32 %v4119, 1.442695
      %v4235 = vpow.pop %v4234
      %v4236 = vmul.f32 %v4120, 1.442695
      %v4237 = vpow.pop %v4236
      %v4238 = vmul.f32 %v4121, 1.442695
      %v4239 = vpow.pop %v4238
      %v4240 = vmul.f32 %v4122, 1.442695
      %v4241 = vpow.pop %v4240
      %v4242 = vmul.f32 %v4123, 1.442695
      %v4243 = vpow.pop %v4242
      %v4244 = vmul.f32 %v4124, 1.442695
      %v4245 = vpow.pop %v4244
      %v4246 = vmul.f32 %v4125, 1.442695
      %v4247 = vpow.pop %v4246
      %v4248 = vmul.f32 %v4126, 1.442695
      %v4249 = vpow.pop %v4248
      %v4250 = vmul.f32 %v4127, 1.442695
      %v4251 = vpow.pop %v4250
      %v4252 = vmul.f32 %v4128, 1.442695
      %v4253 = vpow.pop %v4252
      %v4254 = vmul.f32 %v4129, 1.442695
      %v4255 = vpow.pop %v4254
      %v4256 = vmul.f32 %v4130, 1.442695
      %v4257 = vpow.pop %v4256
      %v4258 = vmul.f32 %v4131, 1.442695
      %v4259 = vpow.pop %v4258
      %4260 = vadd.xlane.f32.xlu0 %v4133
      %v4261 = vpop.xlane.xlu0 %4260
      %4262 = vadd.xlane.f32.xlu0 %v4135
      %v4263 = vpop.xlane.xlu0 %4262
      %4264 = vadd.xlane.f32.xlu0 %v4137
      %v4265 = vpop.xlane.xlu0 %4264
      %4266 = vadd.xlane.f32.xlu0 %v4139
      %v4267 = vpop.xlane.xlu0 %4266
      %4268 = vadd.xlane.f32.xlu0 %v4141
      %v4269 = vpop.xlane.xlu0 %4268
      %4270 = vadd.xlane.f32.xlu0 %v4143
      %v4271 = vpop.xlane.xlu0 %4270
      %4272 = vadd.xlane.f32.xlu0 %v4145
      %v4273 = vpop.xlane.xlu0 %4272
      %4274 = vadd.xlane.f32.xlu0 %v4147
      %v4275 = vpop.xlane.xlu0 %4274
      %4276 = vadd.xlane.f32.xlu0 %v4149
      %v4277 = vpop.xlane.xlu0 %4276
      %4278 = vadd.xlane.f32.xlu0 %v4151
      %v4279 = vpop.xlane.xlu0 %4278
      %4280 = vadd.xlane.f32.xlu0 %v4153
      %v4281 = vpop.xlane.xlu0 %4280
      %4282 = vadd.xlane.f32.xlu0 %v4155
      %v4283 = vpop.xlane.xlu0 %4282
      %4284 = vadd.xlane.f32.xlu0 %v4157
      %v4285 = vpop.xlane.xlu0 %4284
      %4286 = vadd.xlane.f32.xlu0 %v4159
      %v4287 = vpop.xlane.xlu0 %4286
      %4288 = vadd.xlane.f32.xlu0 %v4161
      %v4289 = vpop.xlane.xlu0 %4288
      %4290 = vadd.xlane.f32.xlu0 %v4163
      %v4291 = vpop.xlane.xlu0 %4290
      %4292 = vadd.xlane.f32.xlu0 %v4165
      %v4293 = vpop.xlane.xlu0 %4292
      %4294 = vadd.xlane.f32.xlu0 %v4167
      %v4295 = vpop.xlane.xlu0 %4294
      %4296 = vadd.xlane.f32.xlu0 %v4169
      %v4297 = vpop.xlane.xlu0 %4296
      %4298 = vadd.xlane.f32.xlu0 %v4171
      %v4299 = vpop.xlane.xlu0 %4298
      %4300 = vadd.xlane.f32.xlu0 %v4173
      %v4301 = vpop.xlane.xlu0 %4300
      %4302 = vadd.xlane.f32.xlu0 %v4175
      %v4303 = vpop.xlane.xlu0 %4302
      %4304 = vadd.xlane.f32.xlu0 %v4177
      %v4305 = vpop.xlane.xlu0 %4304
      %4306 = vadd.xlane.f32.xlu0 %v4179
      %v4307 = vpop.xlane.xlu0 %4306
      %4308 = vadd.xlane.f32.xlu0 %v4181
      %v4309 = vpop.xlane.xlu0 %4308
      %4310 = vadd.xlane.f32.xlu0 %v4183
      %v4311 = vpop.xlane.xlu0 %4310
      %4312 = vadd.xlane.f32.xlu0 %v4185
      %v4313 = vpop.xlane.xlu0 %4312
      %4314 = vadd.xlane.f32.xlu0 %v4187
      %v4315 = vpop.xlane.xlu0 %4314
      %4316 = vadd.xlane.f32.xlu0 %v4189
      %v4317 = vpop.xlane.xlu0 %4316
      %4318 = vadd.xlane.f32.xlu0 %v4191
      %v4319 = vpop.xlane.xlu0 %4318
      %4320 = vadd.xlane.f32.xlu0 %v4193
      %v4321 = vpop.xlane.xlu0 %4320
      %4322 = vadd.xlane.f32.xlu0 %v4195
      %v4323 = vpop.xlane.xlu0 %4322
      %4324 = vadd.xlane.f32.xlu0 %v4197
      %v4325 = vpop.xlane.xlu0 %4324
      %4326 = vadd.xlane.f32.xlu0 %v4199
      %v4327 = vpop.xlane.xlu0 %4326
      %4328 = vadd.xlane.f32.xlu0 %v4201
      %v4329 = vpop.xlane.xlu0 %4328
      %4330 = vadd.xlane.f32.xlu0 %v4203
      %v4331 = vpop.xlane.xlu0 %4330
      %4332 = vadd.xlane.f32.xlu0 %v4205
      %v4333 = vpop.xlane.xlu0 %4332
      %4334 = vadd.xlane.f32.xlu0 %v4207
      %v4335 = vpop.xlane.xlu0 %4334
      %4336 = vadd.xlane.f32.xlu0 %v4209
      %v4337 = vpop.xlane.xlu0 %4336
      %4338 = vadd.xlane.f32.xlu0 %v4211
      %v4339 = vpop.xlane.xlu0 %4338
      %4340 = vadd.xlane.f32.xlu0 %v4213
      %v4341 = vpop.xlane.xlu0 %4340
      %4342 = vadd.xlane.f32.xlu0 %v4215
      %v4343 = vpop.xlane.xlu0 %4342
      %4344 = vadd.xlane.f32.xlu0 %v4217
      %v4345 = vpop.xlane.xlu0 %4344
      %4346 = vadd.xlane.f32.xlu0 %v4219
      %v4347 = vpop.xlane.xlu0 %4346
      %4348 = vadd.xlane.f32.xlu0 %v4221
      %v4349 = vpop.xlane.xlu0 %4348
      %4350 = vadd.xlane.f32.xlu0 %v4223
      %v4351 = vpop.xlane.xlu0 %4350
      %4352 = vadd.xlane.f32.xlu0 %v4225
      %v4353 = vpop.xlane.xlu0 %4352
      %4354 = vadd.xlane.f32.xlu0 %v4227
      %v4355 = vpop.xlane.xlu0 %4354
      %4356 = vadd.xlane.f32.xlu0 %v4229
      %v4357 = vpop.xlane.xlu0 %4356
      %4358 = vadd.xlane.f32.xlu0 %v4231
      %v4359 = vpop.xlane.xlu0 %4358
      %4360 = vadd.xlane.f32.xlu0 %v4233
      %v4361 = vpop.xlane.xlu0 %4360
      %4362 = vadd.xlane.f32.xlu0 %v4235
      %v4363 = vpop.xlane.xlu0 %4362
      %4364 = vadd.xlane.f32.xlu0 %v4237
      %v4365 = vpop.xlane.xlu0 %4364
      %4366 = vadd.xlane.f32.xlu0 %v4239
      %v4367 = vpop.xlane.xlu0 %4366
      %4368 = vadd.xlane.f32.xlu0 %v4241
      %v4369 = vpop.xlane.xlu0 %4368
      %4370 = vadd.xlane.f32.xlu0 %v4243
      %v4371 = vpop.xlane.xlu0 %4370
      %4372 = vadd.xlane.f32.xlu0 %v4245
      %v4373 = vpop.xlane.xlu0 %4372
      %4374 = vadd.xlane.f32.xlu0 %v4247
      %v4375 = vpop.xlane.xlu0 %4374
      %4376 = vadd.xlane.f32.xlu0 %v4249
      %v4377 = vpop.xlane.xlu0 %4376
      %4378 = vadd.xlane.f32.xlu0 %v4251
      %v4379 = vpop.xlane.xlu0 %4378
      %4380 = vadd.xlane.f32.xlu0 %v4253
      %v4381 = vpop.xlane.xlu0 %4380
      %4382 = vadd.xlane.f32.xlu0 %v4255
      %v4383 = vpop.xlane.xlu0 %4382
      %4384 = vadd.xlane.f32.xlu0 %v4257
      %v4385 = vpop.xlane.xlu0 %4384
      %4386 = vadd.xlane.f32.xlu0 %v4259
      %v4387 = vpop.xlane.xlu0 %4386
      %v4388 = vlog2.pop %v4261
      %v4389 = vmul.f32 %v4388, 0.6931472
      %v4390 = vlog2.pop %v4263
      %v4391 = vmul.f32 %v4390, 0.6931472
      %v4392 = vlog2.pop %v4265
      %v4393 = vmul.f32 %v4392, 0.6931472
      %v4394 = vlog2.pop %v4267
      %v4395 = vmul.f32 %v4394, 0.6931472
      %v4396 = vlog2.pop %v4269
      %v4397 = vmul.f32 %v4396, 0.6931472
      %v4398 = vlog2.pop %v4271
      %v4399 = vmul.f32 %v4398, 0.6931472
      %v4400 = vlog2.pop %v4273
      %v4401 = vmul.f32 %v4400, 0.6931472
      %v4402 = vlog2.pop %v4275
      %v4403 = vmul.f32 %v4402, 0.6931472
      %v4404 = vlog2.pop %v4277
      %v4405 = vmul.f32 %v4404, 0.6931472
      %v4406 = vlog2.pop %v4279
      %v4407 = vmul.f32 %v4406, 0.6931472
      %v4408 = vlog2.pop %v4281
      %v4409 = vmul.f32 %v4408, 0.6931472
      %v4410 = vlog2.pop %v4283
      %v4411 = vmul.f32 %v4410, 0.6931472
      %v4412 = vlog2.pop %v4285
      %v4413 = vmul.f32 %v4412, 0.6931472
      %v4414 = vlog2.pop %v4287
      %v4415 = vmul.f32 %v4414, 0.6931472
      %v4416 = vlog2.pop %v4289
      %v4417 = vmul.f32 %v4416, 0.6931472
      %v4418 = vlog2.pop %v4291
      %v4419 = vmul.f32 %v4418, 0.6931472
      %v4420 = vlog2.pop %v4293
      %v4421 = vmul.f32 %v4420, 0.6931472
      %v4422 = vlog2.pop %v4295
      %v4423 = vmul.f32 %v4422, 0.6931472
      %v4424 = vlog2.pop %v4297
      %v4425 = vmul.f32 %v4424, 0.6931472
      %v4426 = vlog2.pop %v4299
      %v4427 = vmul.f32 %v4426, 0.6931472
      %v4428 = vlog2.pop %v4301
      %v4429 = vmul.f32 %v4428, 0.6931472
      %v4430 = vlog2.pop %v4303
      %v4431 = vmul.f32 %v4430, 0.6931472
      %v4432 = vlog2.pop %v4305
      %v4433 = vmul.f32 %v4432, 0.6931472
      %v4434 = vlog2.pop %v4307
      %v4435 = vmul.f32 %v4434, 0.6931472
      %v4436 = vlog2.pop %v4309
      %v4437 = vmul.f32 %v4436, 0.6931472
      %v4438 = vlog2.pop %v4311
      %v4439 = vmul.f32 %v4438, 0.6931472
      %v4440 = vlog2.pop %v4313
      %v4441 = vmul.f32 %v4440, 0.6931472
      %v4442 = vlog2.pop %v4315
      %v4443 = vmul.f32 %v4442, 0.6931472
      %v4444 = vlog2.pop %v4317
      %v4445 = vmul.f32 %v4444, 0.6931472
      %v4446 = vlog2.pop %v4319
      %v4447 = vmul.f32 %v4446, 0.6931472
      %v4448 = vlog2.pop %v4321
      %v4449 = vmul.f32 %v4448, 0.6931472
      %v4450 = vlog2.pop %v4323
      %v4451 = vmul.f32 %v4450, 0.6931472
      %v4452 = vlog2.pop %v4325
      %v4453 = vmul.f32 %v4452, 0.6931472
      %v4454 = vlog2.pop %v4327
      %v4455 = vmul.f32 %v4454, 0.6931472
      %v4456 = vlog2.pop %v4329
      %v4457 = vmul.f32 %v4456, 0.6931472
      %v4458 = vlog2.pop %v4331
      %v4459 = vmul.f32 %v4458, 0.6931472
      %v4460 = vlog2.pop %v4333
      %v4461 = vmul.f32 %v4460, 0.6931472
      %v4462 = vlog2.pop %v4335
      %v4463 = vmul.f32 %v4462, 0.6931472
      %v4464 = vlog2.pop %v4337
      %v4465 = vmul.f32 %v4464, 0.6931472
      %v4466 = vlog2.pop %v4339
      %v4467 = vmul.f32 %v4466, 0.6931472
      %v4468 = vlog2.pop %v4341
      %v4469 = vmul.f32 %v4468, 0.6931472
      %v4470 = vlog2.pop %v4343
      %v4471 = vmul.f32 %v4470, 0.6931472
      %v4472 = vlog2.pop %v4345
      %v4473 = vmul.f32 %v4472, 0.6931472
      %v4474 = vlog2.pop %v4347
      %v4475 = vmul.f32 %v4474, 0.6931472
      %v4476 = vlog2.pop %v4349
      %v4477 = vmul.f32 %v4476, 0.6931472
      %v4478 = vlog2.pop %v4351
      %v4479 = vmul.f32 %v4478, 0.6931472
      %v4480 = vlog2.pop %v4353
      %v4481 = vmul.f32 %v4480, 0.6931472
      %v4482 = vlog2.pop %v4355
      %v4483 = vmul.f32 %v4482, 0.6931472
      %v4484 = vlog2.pop %v4357
      %v4485 = vmul.f32 %v4484, 0.6931472
      %v4486 = vlog2.pop %v4359
      %v4487 = vmul.f32 %v4486, 0.6931472
      %v4488 = vlog2.pop %v4361
      %v4489 = vmul.f32 %v4488, 0.6931472
      %v4490 = vlog2.pop %v4363
      %v4491 = vmul.f32 %v4490, 0.6931472
      %v4492 = vlog2.pop %v4365
      %v4493 = vmul.f32 %v4492, 0.6931472
      %v4494 = vlog2.pop %v4367
      %v4495 = vmul.f32 %v4494, 0.6931472
      %v4496 = vlog2.pop %v4369
      %v4497 = vmul.f32 %v4496, 0.6931472
      %v4498 = vlog2.pop %v4371
      %v4499 = vmul.f32 %v4498, 0.6931472
      %v4500 = vlog2.pop %v4373
      %v4501 = vmul.f32 %v4500, 0.6931472
      %v4502 = vlog2.pop %v4375
      %v4503 = vmul.f32 %v4502, 0.6931472
      %v4504 = vlog2.pop %v4377
      %v4505 = vmul.f32 %v4504, 0.6931472
      %v4506 = vlog2.pop %v4379
      %v4507 = vmul.f32 %v4506, 0.6931472
      %v4508 = vlog2.pop %v4381
      %v4509 = vmul.f32 %v4508, 0.6931472
      %v4510 = vlog2.pop %v4383
      %v4511 = vmul.f32 %v4510, 0.6931472
      %v4512 = vlog2.pop %v4385
      %v4513 = vmul.f32 %v4512, 0.6931472
      %v4514 = vlog2.pop %v4387
      %v4515 = vmul.f32 %v4514, 0.6931472
      %v4516 = vsub.f32 %v4068, %v4389
      %v4517 = vsub.f32 %v4069, %v4391
      %v4518 = vsub.f32 %v4070, %v4393
      %v4519 = vsub.f32 %v4071, %v4395
      %v4520 = vsub.f32 %v4072, %v4397
      %v4521 = vsub.f32 %v4073, %v4399
      %v4522 = vsub.f32 %v4074, %v4401
      %v4523 = vsub.f32 %v4075, %v4403
      %v4524 = vsub.f32 %v4076, %v4405
      %v4525 = vsub.f32 %v4077, %v4407
      %v4526 = vsub.f32 %v4078, %v4409
      %v4527 = vsub.f32 %v4079, %v4411
      %v4528 = vsub.f32 %v4080, %v4413
      %v4529 = vsub.f32 %v4081, %v4415
      %v4530 = vsub.f32 %v4082, %v4417
      %v4531 = vsub.f32 %v4083, %v4419
      %v4532 = vsub.f32 %v4084, %v4421
      %v4533 = vsub.f32 %v4085, %v4423
      %v4534 = vsub.f32 %v4086, %v4425
      %v4535 = vsub.f32 %v4087, %v4427
      %v4536 = vsub.f32 %v4088, %v4429
      %v4537 = vsub.f32 %v4089, %v4431
      %v4538 = vsub.f32 %v4090, %v4433
      %v4539 = vsub.f32 %v4091, %v4435
      %v4540 = vsub.f32 %v4092, %v4437
      %v4541 = vsub.f32 %v4093, %v4439
      %v4542 = vsub.f32 %v4094, %v4441
      %v4543 = vsub.f32 %v4095, %v4443
      %v4544 = vsub.f32 %v4096, %v4445
      %v4545 = vsub.f32 %v4097, %v4447
      %v4546 = vsub.f32 %v4098, %v4449
      %v4547 = vsub.f32 %v4099, %v4451
      %v4548 = vsub.f32 %v4100, %v4453
      %v4549 = vsub.f32 %v4101, %v4455
      %v4550 = vsub.f32 %v4102, %v4457
      %v4551 = vsub.f32 %v4103, %v4459
      %v4552 = vsub.f32 %v4104, %v4461
      %v4553 = vsub.f32 %v4105, %v4463
      %v4554 = vsub.f32 %v4106, %v4465
      %v4555 = vsub.f32 %v4107, %v4467
      %v4556 = vsub.f32 %v4108, %v4469
      %v4557 = vsub.f32 %v4109, %v4471
      %v4558 = vsub.f32 %v4110, %v4473
      %v4559 = vsub.f32 %v4111, %v4475
      %v4560 = vsub.f32 %v4112, %v4477
      %v4561 = vsub.f32 %v4113, %v4479
      %v4562 = vsub.f32 %v4114, %v4481
      %v4563 = vsub.f32 %v4115, %v4483
      %v4564 = vsub.f32 %v4116, %v4485
      %v4565 = vsub.f32 %v4117, %v4487
      %v4566 = vsub.f32 %v4118, %v4489
      %v4567 = vsub.f32 %v4119, %v4491
      %v4568 = vsub.f32 %v4120, %v4493
      %v4569 = vsub.f32 %v4121, %v4495
      %v4570 = vsub.f32 %v4122, %v4497
      %v4571 = vsub.f32 %v4123, %v4499
      %v4572 = vsub.f32 %v4124, %v4501
      %v4573 = vsub.f32 %v4125, %v4503
      %v4574 = vsub.f32 %v4126, %v4505
      %v4575 = vsub.f32 %v4127, %v4507
      %v4576 = vsub.f32 %v4128, %v4509
      %v4577 = vsub.f32 %v4129, %v4511
      %v4578 = vsub.f32 %v4130, %v4513
      %v4579 = vsub.f32 %v4131, %v4515
      %4580 = vst [vmem:[%s445] sm:$0xff] %v4516
      %4581 = vst [vmem:[%s445 + $0x8] sm:$0xff] %v4517
      %4582 = vst [vmem:[%s445 + $0x10] sm:$0xff] %v4518
      %4583 = vst [vmem:[%s445 + $0x18] sm:$0xff] %v4519
      %4584 = vst [vmem:[%s445 + $0x20] sm:$0xff] %v4520
      %4585 = vst [vmem:[%s445 + $0x28] sm:$0xff] %v4521
      %4586 = vst [vmem:[%s445 + $0x30] sm:$0xff] %v4522
      %4587 = vst [vmem:[%s445 + $0x38] sm:$0xff] %v4523
      %4588 = vst [vmem:[%s445 + $0x40] sm:$0xff] %v4524
      %4589 = vst [vmem:[%s445 + $0x48] sm:$0xff] %v4525
      %4590 = vst [vmem:[%s445 + $0x50] sm:$0xff] %v4526
      %4591 = vst [vmem:[%s445 + $0x58] sm:$0xff] %v4527
      %4592 = vst [vmem:[%s445 + $0x60] sm:$0xff] %v4528
      %4593 = vst [vmem:[%s445 + $0x68] sm:$0xff] %v4529
      %4594 = vst [vmem:[%s445 + $0x70] sm:$0xff] %v4530
      %4595 = vst [vmem:[%s445 + $0x78] sm:$0xff] %v4531
      %4596 = vst [vmem:[%s445 + $0x80] sm:$0xff] %v4532
      %4597 = vst [vmem:[%s445 + $0x88] sm:$0xff] %v4533
      %4598 = vst [vmem:[%s445 + $0x90] sm:$0xff] %v4534
      %4599 = vst [vmem:[%s445 + $0x98] sm:$0xff] %v4535
      %4600 = vst [vmem:[%s445 + $0xa0] sm:$0xff] %v4536
      %4601 = vst [vmem:[%s445 + $0xa8] sm:$0xff] %v4537
      %4602 = vst [vmem:[%s445 + $0xb0] sm:$0xff] %v4538
      %4603 = vst [vmem:[%s445 + $0xb8] sm:$0xff] %v4539
      %4604 = vst [vmem:[%s445 + $0xc0] sm:$0xff] %v4540
      %4605 = vst [vmem:[%s445 + $0xc8] sm:$0xff] %v4541
      %4606 = vst [vmem:[%s445 + $0xd0] sm:$0xff] %v4542
      %4607 = vst [vmem:[%s445 + $0xd8] sm:$0xff] %v4543
      %4608 = vst [vmem:[%s445 + $0xe0] sm:$0xff] %v4544
      %4609 = vst [vmem:[%s445 + $0xe8] sm:$0xff] %v4545
      %4610 = vst [vmem:[%s445 + $0xf0] sm:$0xff] %v4546
      %4611 = vst [vmem:[%s445 + $0xf8] sm:$0xff] %v4547
      %4612 = vst [vmem:[%s445 + $0x100] sm:$0xff] %v4548
      %4613 = vst [vmem:[%s445 + $0x108] sm:$0xff] %v4549
      %4614 = vst [vmem:[%s445 + $0x110] sm:$0xff] %v4550
      %4615 = vst [vmem:[%s445 + $0x118] sm:$0xff] %v4551
      %4616 = vst [vmem:[%s445 + $0x120] sm:$0xff] %v4552
      %4617 = vst [vmem:[%s445 + $0x128] sm:$0xff] %v4553
      %4618 = vst [vmem:[%s445 + $0x130] sm:$0xff] %v4554
      %4619 = vst [vmem:[%s445 + $0x138] sm:$0xff] %v4555
      %4620 = vst [vmem:[%s445 + $0x140] sm:$0xff] %v4556
      %4621 = vst [vmem:[%s445 + $0x148] sm:$0xff] %v4557
      %4622 = vst [vmem:[%s445 + $0x150] sm:$0xff] %v4558
      %4623 = vst [vmem:[%s445 + $0x158] sm:$0xff] %v4559
      %4624 = vst [vmem:[%s445 + $0x160] sm:$0xff] %v4560
      %4625 = vst [vmem:[%s445 + $0x168] sm:$0xff] %v4561
      %4626 = vst [vmem:[%s445 + $0x170] sm:$0xff] %v4562
      %4627 = vst [vmem:[%s445 + $0x178] sm:$0xff] %v4563
      %4628 = vst [vmem:[%s445 + $0x180] sm:$0xff] %v4564
      %4629 = vst [vmem:[%s445 + $0x188] sm:$0xff] %v4565
      %4630 = vst [vmem:[%s445 + $0x190] sm:$0xff] %v4566
      %4631 = vst [vmem:[%s445 + $0x198] sm:$0xff] %v4567
      %4632 = vst [vmem:[%s445 + $0x1a0] sm:$0xff] %v4568
      %4633 = vst [vmem:[%s445 + $0x1a8] sm:$0xff] %v4569
      %4634 = vst [vmem:[%s445 + $0x1b0] sm:$0xff] %v4570
      %4635 = vst [vmem:[%s445 + $0x1b8] sm:$0xff] %v4571
      %4636 = vst [vmem:[%s445 + $0x1c0] sm:$0xff] %v4572
      %4637 = vst [vmem:[%s445 + $0x1c8] sm:$0xff] %v4573
      %4638 = vst [vmem:[%s445 + $0x1d0] sm:$0xff] %v4574
      %4639 = vst [vmem:[%s445 + $0x1d8] sm:$0xff] %v4575
      %4640 = vst [vmem:[%s445 + $0x1e0] sm:$0xff] %v4576
      %4641 = vst [vmem:[%s445 + $0x1e8] sm:$0xff] %v4577
      %4642 = vst [vmem:[%s445 + $0x1f0] sm:$0xff] %v4578
      %4643 = vst [vmem:[%s445 + $0x1f8] sm:$0xff] %v4579
      %s4644 = smul.u32 64, %s24
      %p4645 = scmp.lt.s32.totalorder %s4644, 127
      %s4646 = scalar_select %p4645, %s4644, 127
      %s4647 = smul.addr %s4646, 8
      %s4648 = scalar_lea.vmem %s13, %s4647
      // Predicated region
      $region73: #{bilstm_forward.1} parent=71 // pred_check
        %p4649 = pneg %p320
      $region74: #{bilstm_forward.1} parent=71 // pred_check_branch
        %4651 = sbr.rel (%p4649) target = $region76
      $region75: #{bilstm_forward.1} parent=71 // pred_region
        %s4652 = smul.u32 64, %s24
      $region76: #{bilstm_forward.1} parent=71 // pred_fallthru
        _
    $region72: #{bilstm_forward.1} parent=5 // pred_fallthru
      _
    %p4653 = scmp.le.s32.totalorder 2, %s19
    // Predicated region
    $region77: #{bilstm_forward.1} parent=5 // pred_check
      %p4654 = pneg %p4653
    $region78: #{bilstm_forward.1} parent=5 // pred_check_branch
      %4656 = sbr.rel (%p4654) target = $region80
    $region79: #{bilstm_forward.1} parent=5 // pred_region
      %s4657 = ssub.s32 %s19, 2
      // Predicated region
      $region81: #{bilstm_forward.1} parent=79 // pred_check
        %p4658 = pneg %p326
      $region82: #{bilstm_forward.1} parent=79 // pred_check_branch
        %4660 = sbr.rel (%p4658) target = $region84
      $region83: #{bilstm_forward.1} parent=79 // pred_region
        %s4661 = smul.u32 64, %s25
        %p4662 = scmp.lt.s32.totalorder %s4661, 127
        %s4663 = scalar_select %p4662, %s4661, 127
        %s4664 = smul.addr %s4663, 8
        %s4665 = scalar_lea.vmem %s13, %s4664
      $region84: #{bilstm_forward.1} parent=79 // pred_fallthru
        _
    $region80: #{bilstm_forward.1} parent=5 // pred_fallthru
      _
  $region6: #{bilstm_forward.1} parent=0 // loop_footer
    %s23 = sadd.s32 1, %s19
  $region7: #{bilstm_forward.1} parent=0 // loop_footer_branch
    %18 = sbr.rel target = $region3
  $region8: #{bilstm_forward.1} parent=0 // loop_exit
    _

</llo_original>
